<compile_context>
chip_gen: v6e
topology: v6e:2x2x1
jax: 0.10.0
libtpu: 0.0.40
codegen_flags: <defaults>
</compile_context>

<pallas_src>
import jax
import jax.numpy as jnp
from jax.experimental import pallas as pl
from jax.experimental.pallas import tpu as pltpu


def lstm_fc_kernel(x2d_ref,                      # (T*Bp, I)   time-major rows
                   wih0_ref, whh0_ref, b0_ref,   # (I,4Hp) (Hp,4Hp) (1,4Hp)
                   wih1_ref, whh1_ref, b1_ref,   # (Hp,4Hp) (Hp,4Hp) (1,4Hp)
                   fcw_ref, fcb_ref,             # (Hp,128) (1,128)
                   out_ref,                      # (Bp, 128)
                   x0_ref, h0_ref, x1_ref):      # VMEM scratch
    Bp = out_ref.shape[0]
    Hp = whh0_ref.shape[0]
    T = x0_ref.shape[0] // Bp

    # ---- hoisted layer-0 input projection: one well-shaped MXU matmul,
    #      bias folded in (no per-step broadcast/add on the recurrent path).
    x0_ref[...] = (jnp.dot(x2d_ref[...], wih0_ref[...],
                           preferred_element_type=jnp.float32) + b0_ref[...])

    def cell(pre, h, c, whhT):
        gates = pre + jnp.dot(h, whhT, preferred_element_type=jnp.float32)
        # PyTorch gate order (i, f, g, o); each slice is a lane-aligned
        # multiple-of-128 block thanks to the H -> Hp padding.
        i = jax.nn.sigmoid(gates[:, 0 * Hp:1 * Hp])
        f = jax.nn.sigmoid(gates[:, 1 * Hp:2 * Hp])
        g = jnp.tanh(gates[:, 2 * Hp:3 * Hp])
        o = jax.nn.sigmoid(gates[:, 3 * Hp:4 * Hp])
        c_new = f * c + i * g
        h_new = o * jnp.tanh(c_new)
        return h_new, c_new

    zeros = jnp.zeros((Bp, Hp), jnp.float32)

    # ---- layer-0 recurrence: fully unrolled (T static, tiny); h/c stay in
    #      vregs as loop-carried values; one VMEM store per step to stash h0
    #      for the batched layer-1 projection.
    h, c = zeros, zeros
    whh0 = whh0_ref[...]
    for t in range(T):
        h, c = cell(x0_ref[t * Bp:(t + 1) * Bp, :], h, c, whh0)
        h0_ref[t * Bp:(t + 1) * Bp, :] = h

    # ---- hoisted layer-1 input projection (batched over all timesteps).
    x1_ref[...] = (jnp.dot(h0_ref[...], wih1_ref[...],
                           preferred_element_type=jnp.float32) + b1_ref[...])

    # ---- layer-1 recurrence (only the final h is needed).
    h, c = zeros, zeros
    whh1 = whh1_ref[...]
    for t in range(T):
        h, c = cell(x1_ref[t * Bp:(t + 1) * Bp, :], h, c, whh1)

    # ---- final Linear(H, 28), output lanes padded to 128 (lane-dense store).
    out_ref[...] = (jnp.dot(h, fcw_ref[...],
                            preferred_element_type=jnp.float32) + fcb_ref[...])


def _pack_gate_weights(w, in_pad, Hp):
    """PyTorch (4H, Din) gate-stacked weight -> (in_pad, 4*Hp) transposed,
    each gate block zero-padded from H to Hp lanes."""
    H = w.shape[0] // 4
    Din = w.shape[1]
    out = jnp.zeros((in_pad, 4 * Hp), jnp.float32)
    for g in range(4):
        out = out.at[:Din, g * Hp:g * Hp + H].set(w[g * H:(g + 1) * H, :].T)
    return out


def _pack_gate_bias(bih, bhh, Hp):
    H = bih.shape[0] // 4
    b = (bih + bhh).astype(jnp.float32)
    out = jnp.zeros((1, 4 * Hp), jnp.float32)
    for g in range(4):
        out = out.at[0, g * Hp:g * Hp + H].set(b[g * H:(g + 1) * H])
    return out


def lstm_model_forward(x, params):
    """x: (B, T, I) float32 (batch_first, like PyTorch). Returns (B, 28)."""
    B, T, I = x.shape
    H = params["whh_l0"].shape[1]            # weight_hh_l0: (4H, H)
    Hp = ((H + 127) // 128) * 128             # lane-align hidden dim
    Bp = ((B + 7) // 8) * 8                   # sublane-align batch (f32)
    OUTP = 128                                # fc output 28 -> 128 lanes

    xf = x.astype(jnp.float32)
    if Bp != B:
        xf = jnp.pad(xf, ((0, Bp - B), (0, 0), (0, 0)))
    # time-major rows so timestep t occupies rows [t*Bp, (t+1)*Bp)
    x2d = jnp.transpose(xf, (1, 0, 2)).reshape(T * Bp, I)

    wih0 = _pack_gate_weights(params["wih_l0"], I, Hp)        # (I, 4Hp)
    whh0 = _pack_gate_weights(params["whh_l0"], Hp, Hp)       # (Hp, 4Hp)
    b0 = _pack_gate_bias(params["bih_l0"], params["bhh_l0"], Hp)
    wih1 = _pack_gate_weights(params["wih_l1"], Hp, Hp)       # (Hp, 4Hp)
    whh1 = _pack_gate_weights(params["whh_l1"], Hp, Hp)       # (Hp, 4Hp)
    b1 = _pack_gate_bias(params["bih_l1"], params["bhh_l1"], Hp)
    fcw = jnp.zeros((Hp, OUTP), jnp.float32).at[:H, :28].set(params["fc_w"].T)
    fcb = jnp.zeros((1, OUTP), jnp.float32).at[0, :28].set(params["fc_b"])

    vmem = pl.BlockSpec(memory_space=pltpu.MemorySpace.VMEM)
    # All operands are tiny (few hundred KiB) and well under the scoped VMEM
    # limit on v5e/v6e/v7x; for scaled-up T*B set vmem_limit_bytes explicitly.
    out = pl.pallas_call(
        lstm_fc_kernel,
        out_shape=jax.ShapeDtypeStruct((Bp, OUTP), jnp.float32),
        in_specs=[vmem] * 9,
        out_specs=vmem,
        scratch_shapes=[
            pltpu.VMEM((T * Bp, 4 * Hp), jnp.float32),   # x0: layer-0 pre-acts
            pltpu.VMEM((T * Bp, Hp), jnp.float32),       # h0: layer-0 outputs
            pltpu.VMEM((T * Bp, 4 * Hp), jnp.float32),   # x1: layer-1 pre-acts
        ],
    )(x2d, wih0, whh0, b0, wih1, whh1, b1, fcw, fcb)
    return out[:B, :28]


def reference_forward(x, params):
    """Pure-JAX reference mirroring PyTorch nn.LSTM (eval) + nn.Linear."""
    B, T, I = x.shape
    H = params["whh_l0"].shape[1]

    def run_layer(seq, wih, whh, bih, bhh):
        h = jnp.zeros((B, H), jnp.float32)
        c = jnp.zeros((B, H), jnp.float32)
        outs = []
        for t in range(T):
            gates = seq[:, t, :] @ wih.T + h @ whh.T + bih + bhh
            i = jax.nn.sigmoid(gates[:, 0:H])
            f = jax.nn.sigmoid(gates[:, H:2 * H])
            g = jnp.tanh(gates[:, 2 * H:3 * H])
            o = jax.nn.sigmoid(gates[:, 3 * H:4 * H])
            c = f * c + i * g
            h = o * jnp.tanh(c)
            outs.append(h)
        return jnp.stack(outs, axis=1)

    l0 = run_layer(x, params["wih_l0"], params["whh_l0"],
                   params["bih_l0"], params["bhh_l0"])
    l1 = run_layer(l0, params["wih_l1"], params["whh_l1"],
                   params["bih_l1"], params["bhh_l1"])
    return l1[:, -1, :] @ params["fc_w"].T + params["fc_b"]


def init_params(key, input_size, hidden_size):
    H = hidden_size
    bound = 1.0 / jnp.sqrt(H)
    ks = jax.random.split(key, 10)
    u = lambda k, shape: jax.random.uniform(k, shape, jnp.float32, -bound, bound)
    return {
        "wih_l0": u(ks[0], (4 * H, input_size)),
        "whh_l0": u(ks[1], (4 * H, H)),
        "bih_l0": u(ks[2], (4 * H,)),
        "bhh_l0": u(ks[3], (4 * H,)),
        "wih_l1": u(ks[4], (4 * H, H)),
        "whh_l1": u(ks[5], (4 * H, H)),
        "bih_l1": u(ks[6], (4 * H,)),
        "bhh_l1": u(ks[7], (4 * H,)),
        "fc_w":   u(ks[8], (28, H)),
        "fc_b":   u(ks[9], (28,)),
    }


if __name__ == "__main__":
    B, T, I, H = 2, 8, 16, 64          # module default hidden_size=64
    key = jax.random.PRNGKey(0)
    k_x, k_p = jax.random.split(key)
    x = jax.random.normal(k_x, (B, T, I), jnp.float32)
    params = init_params(k_p, I, H)

    out = lstm_model_forward(x, params)
    out = jax.block_until_ready(out)

    ref = reference_forward(x, params)
    assert out.shape == (B, 28)
    assert jnp.allclose(out, ref, rtol=1e-3, atol=1e-3), "mismatch vs reference"
    print("KERNEL_OK")
</pallas_src>

<mosaic_0001>
module attributes {stable_mosaic.version = 11 : i64} {
  func.func @lstm_fc_kernel(%arg0: memref<64x16xf32, #tpu.memory_space<vmem>>, %arg1: memref<16x512xf32, #tpu.memory_space<vmem>>, %arg2: memref<128x512xf32, #tpu.memory_space<vmem>>, %arg3: memref<1x512xf32, #tpu.memory_space<vmem>>, %arg4: memref<128x512xf32, #tpu.memory_space<vmem>>, %arg5: memref<128x512xf32, #tpu.memory_space<vmem>>, %arg6: memref<1x512xf32, #tpu.memory_space<vmem>>, %arg7: memref<128x128xf32, #tpu.memory_space<vmem>>, %arg8: memref<1x128xf32, #tpu.memory_space<vmem>>, %arg9: memref<8x128xf32, #tpu.memory_space<vmem>>, %arg10: memref<64x512xf32, #tpu.memory_space<vmem>>, %arg11: memref<64x128xf32, #tpu.memory_space<vmem>>, %arg12: memref<64x512xf32, #tpu.memory_space<vmem>>) attributes {dimension_semantics = [], scalar_prefetch = 0 : i64, scratch_operands = 3 : i64, tpu.core_type = #tpu.core_type<tc>} {
    %c0 = arith.constant 0 : index
    %c0_0 = arith.constant 0 : index
    %0 = vector.load %arg0[%c0, %c0_0] : memref<64x16xf32, #tpu.memory_space<vmem>>, vector<64x16xf32>
    %c0_1 = arith.constant 0 : index
    %c0_2 = arith.constant 0 : index
    %1 = vector.load %arg1[%c0_1, %c0_2] : memref<16x512xf32, #tpu.memory_space<vmem>>, vector<16x512xf32>
    %cst = arith.constant dense<0.000000e+00> : vector<64x512xf32>
    %2 = tpu.matmul %0, %1, %cst {dimension_numbers = #tpu.dot_dimension_numbers<[1], [0], [0], [1], [0, 0, 1, 1], [], []>} : vector<64x16xf32>, vector<16x512xf32>, vector<64x512xf32> -> vector<64x512xf32>
    %c0_3 = arith.constant 0 : index
    %c0_4 = arith.constant 0 : index
    %3 = vector.load %arg3[%c0_3, %c0_4] : memref<1x512xf32, #tpu.memory_space<vmem>>, vector<1x512xf32>
    %4 = vector.broadcast %3 : vector<1x512xf32> to vector<64x512xf32>
    %5 = arith.addf %2, %4 : vector<64x512xf32>
    %c0_5 = arith.constant 0 : index
    %c0_6 = arith.constant 0 : index
    %6 = vector.load %arg10[%c0_5, %c0_6] : memref<64x512xf32, #tpu.memory_space<vmem>>, vector<64x512xf32>
    tpu.vector_store %arg10[%c0_5, %c0_6], %5 {strides = array<i32>} : memref<64x512xf32, #tpu.memory_space<vmem>>, vector<64x512xf32>,
    %cst_7 = arith.constant 0.000000e+00 : f32
    %7 = vector.broadcast %cst_7 : f32 to vector<8x128xf32>
    %c0_8 = arith.constant 0 : index
    %c0_9 = arith.constant 0 : index
    %8 = vector.load %arg2[%c0_8, %c0_9] : memref<128x512xf32, #tpu.memory_space<vmem>>, vector<128x512xf32>
    %c0_10 = arith.constant 0 : index
    %c0_11 = arith.constant 0 : index
    %9 = vector.load %arg10[%c0_10, %c0_11] : memref<64x512xf32, #tpu.memory_space<vmem>>, vector<8x512xf32>
    %cst_12 = arith.constant dense<0.000000e+00> : vector<8x512xf32>
    %10 = tpu.matmul %7, %8, %cst_12 {dimension_numbers = #tpu.dot_dimension_numbers<[1], [0], [0], [1], [0, 0, 1, 1], [], []>} : vector<8x128xf32>, vector<128x512xf32>, vector<8x512xf32> -> vector<8x512xf32>
    %11 = arith.addf %9, %10 : vector<8x512xf32>
    %12 = vector.extract_strided_slice %11 {offsets = [0, 0], sizes = [8, 128], strides = [1, 1]} : vector<8x512xf32> to vector<8x128xf32>
    %13 = arith.negf %12 : vector<8x128xf32>
    %14 = math.exp %13 : vector<8x128xf32>
    %cst_13 = arith.constant 1.000000e+00 : f32
    %15 = vector.broadcast %cst_13 : f32 to vector<8x128xf32>
    %16 = arith.addf %15, %14 : vector<8x128xf32>
    %17 = arith.divf %15, %16 : vector<8x128xf32>
    %18 = vector.extract_strided_slice %11 {offsets = [0, 128], sizes = [8, 128], strides = [1, 1]} : vector<8x512xf32> to vector<8x128xf32>
    %19 = arith.negf %18 : vector<8x128xf32>
    %20 = math.exp %19 : vector<8x128xf32>
    %cst_14 = arith.constant 1.000000e+00 : f32
    %21 = vector.broadcast %cst_14 : f32 to vector<8x128xf32>
    %22 = arith.addf %21, %20 : vector<8x128xf32>
    %23 = arith.divf %21, %22 : vector<8x128xf32>
    %24 = vector.extract_strided_slice %11 {offsets = [0, 256], sizes = [8, 128], strides = [1, 1]} : vector<8x512xf32> to vector<8x128xf32>
    %25 = math.tanh %24 : vector<8x128xf32>
    %26 = vector.extract_strided_slice %11 {offsets = [0, 384], sizes = [8, 128], strides = [1, 1]} : vector<8x512xf32> to vector<8x128xf32>
    %27 = arith.negf %26 : vector<8x128xf32>
    %28 = math.exp %27 : vector<8x128xf32>
    %cst_15 = arith.constant 1.000000e+00 : f32
    %29 = vector.broadcast %cst_15 : f32 to vector<8x128xf32>
    %30 = arith.addf %29, %28 : vector<8x128xf32>
    %31 = arith.divf %29, %30 : vector<8x128xf32>
    %32 = arith.mulf %23, %7 : vector<8x128xf32>
    %33 = arith.mulf %17, %25 : vector<8x128xf32>
    %34 = arith.addf %32, %33 : vector<8x128xf32>
    %35 = math.tanh %34 : vector<8x128xf32>
    %36 = arith.mulf %31, %35 : vector<8x128xf32>
    %c0_16 = arith.constant 0 : index
    %c0_17 = arith.constant 0 : index
    %37 = vector.load %arg11[%c0_16, %c0_17] : memref<64x128xf32, #tpu.memory_space<vmem>>, vector<8x128xf32>
    tpu.vector_store %arg11[%c0_16, %c0_17], %36 {strides = array<i32>} : memref<64x128xf32, #tpu.memory_space<vmem>>, vector<8x128xf32>,
    %c8 = arith.constant 8 : index
    %c0_18 = arith.constant 0 : index
    %38 = vector.load %arg10[%c8, %c0_18] : memref<64x512xf32, #tpu.memory_space<vmem>>, vector<8x512xf32>
    %cst_19 = arith.constant dense<0.000000e+00> : vector<8x512xf32>
    %39 = tpu.matmul %36, %8, %cst_19 {dimension_numbers = #tpu.dot_dimension_numbers<[1], [0], [0], [1], [0, 0, 1, 1], [], []>} : vector<8x128xf32>, vector<128x512xf32>, vector<8x512xf32> -> vector<8x512xf32>
    %40 = arith.addf %38, %39 : vector<8x512xf32>
    %41 = vector.extract_strided_slice %40 {offsets = [0, 0], sizes = [8, 128], strides = [1, 1]} : vector<8x512xf32> to vector<8x128xf32>
    %42 = arith.negf %41 : vector<8x128xf32>
    %43 = math.exp %42 : vector<8x128xf32>
    %cst_20 = arith.constant 1.000000e+00 : f32
    %44 = vector.broadcast %cst_20 : f32 to vector<8x128xf32>
    %45 = arith.addf %44, %43 : vector<8x128xf32>
    %46 = arith.divf %44, %45 : vector<8x128xf32>
    %47 = vector.extract_strided_slice %40 {offsets = [0, 128], sizes = [8, 128], strides = [1, 1]} : vector<8x512xf32> to vector<8x128xf32>
    %48 = arith.negf %47 : vector<8x128xf32>
    %49 = math.exp %48 : vector<8x128xf32>
    %cst_21 = arith.constant 1.000000e+00 : f32
    %50 = vector.broadcast %cst_21 : f32 to vector<8x128xf32>
    %51 = arith.addf %50, %49 : vector<8x128xf32>
    %52 = arith.divf %50, %51 : vector<8x128xf32>
    %53 = vector.extract_strided_slice %40 {offsets = [0, 256], sizes = [8, 128], strides = [1, 1]} : vector<8x512xf32> to vector<8x128xf32>
    %54 = math.tanh %53 : vector<8x128xf32>
    %55 = vector.extract_strided_slice %40 {offsets = [0, 384], sizes = [8, 128], strides = [1, 1]} : vector<8x512xf32> to vector<8x128xf32>
    %56 = arith.negf %55 : vector<8x128xf32>
    %57 = math.exp %56 : vector<8x128xf32>
    %cst_22 = arith.constant 1.000000e+00 : f32
    %58 = vector.broadcast %cst_22 : f32 to vector<8x128xf32>
    %59 = arith.addf %58, %57 : vector<8x128xf32>
    %60 = arith.divf %58, %59 : vector<8x128xf32>
    %61 = arith.mulf %52, %34 : vector<8x128xf32>
    %62 = arith.mulf %46, %54 : vector<8x128xf32>
    %63 = arith.addf %61, %62 : vector<8x128xf32>
    %64 = math.tanh %63 : vector<8x128xf32>
    %65 = arith.mulf %60, %64 : vector<8x128xf32>
    %c8_23 = arith.constant 8 : index
    %c0_24 = arith.constant 0 : index
    %66 = vector.load %arg11[%c8_23, %c0_24] : memref<64x128xf32, #tpu.memory_space<vmem>>, vector<8x128xf32>
    tpu.vector_store %arg11[%c8_23, %c0_24], %65 {strides = array<i32>} : memref<64x128xf32, #tpu.memory_space<vmem>>, vector<8x128xf32>,
    %c16 = arith.constant 16 : index
    %c0_25 = arith.constant 0 : index
    %67 = vector.load %arg10[%c16, %c0_25] : memref<64x512xf32, #tpu.memory_space<vmem>>, vector<8x512xf32>
    %cst_26 = arith.constant dense<0.000000e+00> : vector<8x512xf32>
    %68 = tpu.matmul %65, %8, %cst_26 {dimension_numbers = #tpu.dot_dimension_numbers<[1], [0], [0], [1], [0, 0, 1, 1], [], []>} : vector<8x128xf32>, vector<128x512xf32>, vector<8x512xf32> -> vector<8x512xf32>
    %69 = arith.addf %67, %68 : vector<8x512xf32>
    %70 = vector.extract_strided_slice %69 {offsets = [0, 0], sizes = [8, 128], strides = [1, 1]} : vector<8x512xf32> to vector<8x128xf32>
    %71 = arith.negf %70 : vector<8x128xf32>
    %72 = math.exp %71 : vector<8x128xf32>
    %cst_27 = arith.constant 1.000000e+00 : f32
    %73 = vector.broadcast %cst_27 : f32 to vector<8x128xf32>
    %74 = arith.addf %73, %72 : vector<8x128xf32>
    %75 = arith.divf %73, %74 : vector<8x128xf32>
    %76 = vector.extract_strided_slice %69 {offsets = [0, 128], sizes = [8, 128], strides = [1, 1]} : vector<8x512xf32> to vector<8x128xf32>
    %77 = arith.negf %76 : vector<8x128xf32>
    %78 = math.exp %77 : vector<8x128xf32>
    %cst_28 = arith.constant 1.000000e+00 : f32
    %79 = vector.broadcast %cst_28 : f32 to vector<8x128xf32>
    %80 = arith.addf %79, %78 : vector<8x128xf32>
    %81 = arith.divf %79, %80 : vector<8x128xf32>
    %82 = vector.extract_strided_slice %69 {offsets = [0, 256], sizes = [8, 128], strides = [1, 1]} : vector<8x512xf32> to vector<8x128xf32>
    %83 = math.tanh %82 : vector<8x128xf32>
    %84 = vector.extract_strided_slice %69 {offsets = [0, 384], sizes = [8, 128], strides = [1, 1]} : vector<8x512xf32> to vector<8x128xf32>
    %85 = arith.negf %84 : vector<8x128xf32>
    %86 = math.exp %85 : vector<8x128xf32>
    %cst_29 = arith.constant 1.000000e+00 : f32
    %87 = vector.broadcast %cst_29 : f32 to vector<8x128xf32>
    %88 = arith.addf %87, %86 : vector<8x128xf32>
    %89 = arith.divf %87, %88 : vector<8x128xf32>
    %90 = arith.mulf %81, %63 : vector<8x128xf32>
    %91 = arith.mulf %75, %83 : vector<8x128xf32>
    %92 = arith.addf %90, %91 : vector<8x128xf32>
    %93 = math.tanh %92 : vector<8x128xf32>
    %94 = arith.mulf %89, %93 : vector<8x128xf32>
    %c16_30 = arith.constant 16 : index
    %c0_31 = arith.constant 0 : index
    %95 = vector.load %arg11[%c16_30, %c0_31] : memref<64x128xf32, #tpu.memory_space<vmem>>, vector<8x128xf32>
    tpu.vector_store %arg11[%c16_30, %c0_31], %94 {strides = array<i32>} : memref<64x128xf32, #tpu.memory_space<vmem>>, vector<8x128xf32>,
    %c24 = arith.constant 24 : index
    %c0_32 = arith.constant 0 : index
    %96 = vector.load %arg10[%c24, %c0_32] : memref<64x512xf32, #tpu.memory_space<vmem>>, vector<8x512xf32>
    %cst_33 = arith.constant dense<0.000000e+00> : vector<8x512xf32>
    %97 = tpu.matmul %94, %8, %cst_33 {dimension_numbers = #tpu.dot_dimension_numbers<[1], [0], [0], [1], [0, 0, 1, 1], [], []>} : vector<8x128xf32>, vector<128x512xf32>, vector<8x512xf32> -> vector<8x512xf32>
    %98 = arith.addf %96, %97 : vector<8x512xf32>
    %99 = vector.extract_strided_slice %98 {offsets = [0, 0], sizes = [8, 128], strides = [1, 1]} : vector<8x512xf32> to vector<8x128xf32>
    %100 = arith.negf %99 : vector<8x128xf32>
    %101 = math.exp %100 : vector<8x128xf32>
    %cst_34 = arith.constant 1.000000e+00 : f32
    %102 = vector.broadcast %cst_34 : f32 to vector<8x128xf32>
    %103 = arith.addf %102, %101 : vector<8x128xf32>
    %104 = arith.divf %102, %103 : vector<8x128xf32>
    %105 = vector.extract_strided_slice %98 {offsets = [0, 128], sizes = [8, 128], strides = [1, 1]} : vector<8x512xf32> to vector<8x128xf32>
    %106 = arith.negf %105 : vector<8x128xf32>
    %107 = math.exp %106 : vector<8x128xf32>
    %cst_35 = arith.constant 1.000000e+00 : f32
    %108 = vector.broadcast %cst_35 : f32 to vector<8x128xf32>
    %109 = arith.addf %108, %107 : vector<8x128xf32>
    %110 = arith.divf %108, %109 : vector<8x128xf32>
    %111 = vector.extract_strided_slice %98 {offsets = [0, 256], sizes = [8, 128], strides = [1, 1]} : vector<8x512xf32> to vector<8x128xf32>
    %112 = math.tanh %111 : vector<8x128xf32>
    %113 = vector.extract_strided_slice %98 {offsets = [0, 384], sizes = [8, 128], strides = [1, 1]} : vector<8x512xf32> to vector<8x128xf32>
    %114 = arith.negf %113 : vector<8x128xf32>
    %115 = math.exp %114 : vector<8x128xf32>
    %cst_36 = arith.constant 1.000000e+00 : f32
    %116 = vector.broadcast %cst_36 : f32 to vector<8x128xf32>
    %117 = arith.addf %116, %115 : vector<8x128xf32>
    %118 = arith.divf %116, %117 : vector<8x128xf32>
    %119 = arith.mulf %110, %92 : vector<8x128xf32>
    %120 = arith.mulf %104, %112 : vector<8x128xf32>
    %121 = arith.addf %119, %120 : vector<8x128xf32>
    %122 = math.tanh %121 : vector<8x128xf32>
    %123 = arith.mulf %118, %122 : vector<8x128xf32>
    %c24_37 = arith.constant 24 : index
    %c0_38 = arith.constant 0 : index
    %124 = vector.load %arg11[%c24_37, %c0_38] : memref<64x128xf32, #tpu.memory_space<vmem>>, vector<8x128xf32>
    tpu.vector_store %arg11[%c24_37, %c0_38], %123 {strides = array<i32>} : memref<64x128xf32, #tpu.memory_space<vmem>>, vector<8x128xf32>,
    %c32 = arith.constant 32 : index
    %c0_39 = arith.constant 0 : index
    %125 = vector.load %arg10[%c32, %c0_39] : memref<64x512xf32, #tpu.memory_space<vmem>>, vector<8x512xf32>
    %cst_40 = arith.constant dense<0.000000e+00> : vector<8x512xf32>
    %126 = tpu.matmul %123, %8, %cst_40 {dimension_numbers = #tpu.dot_dimension_numbers<[1], [0], [0], [1], [0, 0, 1, 1], [], []>} : vector<8x128xf32>, vector<128x512xf32>, vector<8x512xf32> -> vector<8x512xf32>
    %127 = arith.addf %125, %126 : vector<8x512xf32>
    %128 = vector.extract_strided_slice %127 {offsets = [0, 0], sizes = [8, 128], strides = [1, 1]} : vector<8x512xf32> to vector<8x128xf32>
    %129 = arith.negf %128 : vector<8x128xf32>
    %130 = math.exp %129 : vector<8x128xf32>
    %cst_41 = arith.constant 1.000000e+00 : f32
    %131 = vector.broadcast %cst_41 : f32 to vector<8x128xf32>
    %132 = arith.addf %131, %130 : vector<8x128xf32>
    %133 = arith.divf %131, %132 : vector<8x128xf32>
    %134 = vector.extract_strided_slice %127 {offsets = [0, 128], sizes = [8, 128], strides = [1, 1]} : vector<8x512xf32> to vector<8x128xf32>
    %135 = arith.negf %134 : vector<8x128xf32>
    %136 = math.exp %135 : vector<8x128xf32>
    %cst_42 = arith.constant 1.000000e+00 : f32
    %137 = vector.broadcast %cst_42 : f32 to vector<8x128xf32>
    %138 = arith.addf %137, %136 : vector<8x128xf32>
    %139 = arith.divf %137, %138 : vector<8x128xf32>
    %140 = vector.extract_strided_slice %127 {offsets = [0, 256], sizes = [8, 128], strides = [1, 1]} : vector<8x512xf32> to vector<8x128xf32>
    %141 = math.tanh %140 : vector<8x128xf32>
    %142 = vector.extract_strided_slice %127 {offsets = [0, 384], sizes = [8, 128], strides = [1, 1]} : vector<8x512xf32> to vector<8x128xf32>
    %143 = arith.negf %142 : vector<8x128xf32>
    %144 = math.exp %143 : vector<8x128xf32>
    %cst_43 = arith.constant 1.000000e+00 : f32
    %145 = vector.broadcast %cst_43 : f32 to vector<8x128xf32>
    %146 = arith.addf %145, %144 : vector<8x128xf32>
    %147 = arith.divf %145, %146 : vector<8x128xf32>
    %148 = arith.mulf %139, %121 : vector<8x128xf32>
    %149 = arith.mulf %133, %141 : vector<8x128xf32>
    %150 = arith.addf %148, %149 : vector<8x128xf32>
    %151 = math.tanh %150 : vector<8x128xf32>
    %152 = arith.mulf %147, %151 : vector<8x128xf32>
    %c32_44 = arith.constant 32 : index
    %c0_45 = arith.constant 0 : index
    %153 = vector.load %arg11[%c32_44, %c0_45] : memref<64x128xf32, #tpu.memory_space<vmem>>, vector<8x128xf32>
    tpu.vector_store %arg11[%c32_44, %c0_45], %152 {strides = array<i32>} : memref<64x128xf32, #tpu.memory_space<vmem>>, vector<8x128xf32>,
    %c40 = arith.constant 40 : index
    %c0_46 = arith.constant 0 : index
    %154 = vector.load %arg10[%c40, %c0_46] : memref<64x512xf32, #tpu.memory_space<vmem>>, vector<8x512xf32>
    %cst_47 = arith.constant dense<0.000000e+00> : vector<8x512xf32>
    %155 = tpu.matmul %152, %8, %cst_47 {dimension_numbers = #tpu.dot_dimension_numbers<[1], [0], [0], [1], [0, 0, 1, 1], [], []>} : vector<8x128xf32>, vector<128x512xf32>, vector<8x512xf32> -> vector<8x512xf32>
    %156 = arith.addf %154, %155 : vector<8x512xf32>
    %157 = vector.extract_strided_slice %156 {offsets = [0, 0], sizes = [8, 128], strides = [1, 1]} : vector<8x512xf32> to vector<8x128xf32>
    %158 = arith.negf %157 : vector<8x128xf32>
    %159 = math.exp %158 : vector<8x128xf32>
    %cst_48 = arith.constant 1.000000e+00 : f32
    %160 = vector.broadcast %cst_48 : f32 to vector<8x128xf32>
    %161 = arith.addf %160, %159 : vector<8x128xf32>
    %162 = arith.divf %160, %161 : vector<8x128xf32>
    %163 = vector.extract_strided_slice %156 {offsets = [0, 128], sizes = [8, 128], strides = [1, 1]} : vector<8x512xf32> to vector<8x128xf32>
    %164 = arith.negf %163 : vector<8x128xf32>
    %165 = math.exp %164 : vector<8x128xf32>
    %cst_49 = arith.constant 1.000000e+00 : f32
    %166 = vector.broadcast %cst_49 : f32 to vector<8x128xf32>
    %167 = arith.addf %166, %165 : vector<8x128xf32>
    %168 = arith.divf %166, %167 : vector<8x128xf32>
    %169 = vector.extract_strided_slice %156 {offsets = [0, 256], sizes = [8, 128], strides = [1, 1]} : vector<8x512xf32> to vector<8x128xf32>
    %170 = math.tanh %169 : vector<8x128xf32>
    %171 = vector.extract_strided_slice %156 {offsets = [0, 384], sizes = [8, 128], strides = [1, 1]} : vector<8x512xf32> to vector<8x128xf32>
    %172 = arith.negf %171 : vector<8x128xf32>
    %173 = math.exp %172 : vector<8x128xf32>
    %cst_50 = arith.constant 1.000000e+00 : f32
    %174 = vector.broadcast %cst_50 : f32 to vector<8x128xf32>
    %175 = arith.addf %174, %173 : vector<8x128xf32>
    %176 = arith.divf %174, %175 : vector<8x128xf32>
    %177 = arith.mulf %168, %150 : vector<8x128xf32>
    %178 = arith.mulf %162, %170 : vector<8x128xf32>
    %179 = arith.addf %177, %178 : vector<8x128xf32>
    %180 = math.tanh %179 : vector<8x128xf32>
    %181 = arith.mulf %176, %180 : vector<8x128xf32>
    %c40_51 = arith.constant 40 : index
    %c0_52 = arith.constant 0 : index
    %182 = vector.load %arg11[%c40_51, %c0_52] : memref<64x128xf32, #tpu.memory_space<vmem>>, vector<8x128xf32>
    tpu.vector_store %arg11[%c40_51, %c0_52], %181 {strides = array<i32>} : memref<64x128xf32, #tpu.memory_space<vmem>>, vector<8x128xf32>,
    %c48 = arith.constant 48 : index
    %c0_53 = arith.constant 0 : index
    %183 = vector.load %arg10[%c48, %c0_53] : memref<64x512xf32, #tpu.memory_space<vmem>>, vector<8x512xf32>
    %cst_54 = arith.constant dense<0.000000e+00> : vector<8x512xf32>
    %184 = tpu.matmul %181, %8, %cst_54 {dimension_numbers = #tpu.dot_dimension_numbers<[1], [0], [0], [1], [0, 0, 1, 1], [], []>} : vector<8x128xf32>, vector<128x512xf32>, vector<8x512xf32> -> vector<8x512xf32>
    %185 = arith.addf %183, %184 : vector<8x512xf32>
    %186 = vector.extract_strided_slice %185 {offsets = [0, 0], sizes = [8, 128], strides = [1, 1]} : vector<8x512xf32> to vector<8x128xf32>
    %187 = arith.negf %186 : vector<8x128xf32>
    %188 = math.exp %187 : vector<8x128xf32>
    %cst_55 = arith.constant 1.000000e+00 : f32
    %189 = vector.broadcast %cst_55 : f32 to vector<8x128xf32>
    %190 = arith.addf %189, %188 : vector<8x128xf32>
    %191 = arith.divf %189, %190 : vector<8x128xf32>
    %192 = vector.extract_strided_slice %185 {offsets = [0, 128], sizes = [8, 128], strides = [1, 1]} : vector<8x512xf32> to vector<8x128xf32>
    %193 = arith.negf %192 : vector<8x128xf32>
    %194 = math.exp %193 : vector<8x128xf32>
    %cst_56 = arith.constant 1.000000e+00 : f32
    %195 = vector.broadcast %cst_56 : f32 to vector<8x128xf32>
    %196 = arith.addf %195, %194 : vector<8x128xf32>
    %197 = arith.divf %195, %196 : vector<8x128xf32>
    %198 = vector.extract_strided_slice %185 {offsets = [0, 256], sizes = [8, 128], strides = [1, 1]} : vector<8x512xf32> to vector<8x128xf32>
    %199 = math.tanh %198 : vector<8x128xf32>
    %200 = vector.extract_strided_slice %185 {offsets = [0, 384], sizes = [8, 128], strides = [1, 1]} : vector<8x512xf32> to vector<8x128xf32>
    %201 = arith.negf %200 : vector<8x128xf32>
    %202 = math.exp %201 : vector<8x128xf32>
    %cst_57 = arith.constant 1.000000e+00 : f32
    %203 = vector.broadcast %cst_57 : f32 to vector<8x128xf32>
    %204 = arith.addf %203, %202 : vector<8x128xf32>
    %205 = arith.divf %203, %204 : vector<8x128xf32>
    %206 = arith.mulf %197, %179 : vector<8x128xf32>
    %207 = arith.mulf %191, %199 : vector<8x128xf32>
    %208 = arith.addf %206, %207 : vector<8x128xf32>
    %209 = math.tanh %208 : vector<8x128xf32>
    %210 = arith.mulf %205, %209 : vector<8x128xf32>
    %c48_58 = arith.constant 48 : index
    %c0_59 = arith.constant 0 : index
    %211 = vector.load %arg11[%c48_58, %c0_59] : memref<64x128xf32, #tpu.memory_space<vmem>>, vector<8x128xf32>
    tpu.vector_store %arg11[%c48_58, %c0_59], %210 {strides = array<i32>} : memref<64x128xf32, #tpu.memory_space<vmem>>, vector<8x128xf32>,
    %c56 = arith.constant 56 : index
    %c0_60 = arith.constant 0 : index
    %212 = vector.load %arg10[%c56, %c0_60] : memref<64x512xf32, #tpu.memory_space<vmem>>, vector<8x512xf32>
    %cst_61 = arith.constant dense<0.000000e+00> : vector<8x512xf32>
    %213 = tpu.matmul %210, %8, %cst_61 {dimension_numbers = #tpu.dot_dimension_numbers<[1], [0], [0], [1], [0, 0, 1, 1], [], []>} : vector<8x128xf32>, vector<128x512xf32>, vector<8x512xf32> -> vector<8x512xf32>
    %214 = arith.addf %212, %213 : vector<8x512xf32>
    %215 = vector.extract_strided_slice %214 {offsets = [0, 0], sizes = [8, 128], strides = [1, 1]} : vector<8x512xf32> to vector<8x128xf32>
    %216 = arith.negf %215 : vector<8x128xf32>
    %217 = math.exp %216 : vector<8x128xf32>
    %cst_62 = arith.constant 1.000000e+00 : f32
    %218 = vector.broadcast %cst_62 : f32 to vector<8x128xf32>
    %219 = arith.addf %218, %217 : vector<8x128xf32>
    %220 = arith.divf %218, %219 : vector<8x128xf32>
    %221 = vector.extract_strided_slice %214 {offsets = [0, 128], sizes = [8, 128], strides = [1, 1]} : vector<8x512xf32> to vector<8x128xf32>
    %222 = arith.negf %221 : vector<8x128xf32>
    %223 = math.exp %222 : vector<8x128xf32>
    %cst_63 = arith.constant 1.000000e+00 : f32
    %224 = vector.broadcast %cst_63 : f32 to vector<8x128xf32>
    %225 = arith.addf %224, %223 : vector<8x128xf32>
    %226 = arith.divf %224, %225 : vector<8x128xf32>
    %227 = vector.extract_strided_slice %214 {offsets = [0, 256], sizes = [8, 128], strides = [1, 1]} : vector<8x512xf32> to vector<8x128xf32>
    %228 = math.tanh %227 : vector<8x128xf32>
    %229 = vector.extract_strided_slice %214 {offsets = [0, 384], sizes = [8, 128], strides = [1, 1]} : vector<8x512xf32> to vector<8x128xf32>
    %230 = arith.negf %229 : vector<8x128xf32>
    %231 = math.exp %230 : vector<8x128xf32>
    %cst_64 = arith.constant 1.000000e+00 : f32
    %232 = vector.broadcast %cst_64 : f32 to vector<8x128xf32>
    %233 = arith.addf %232, %231 : vector<8x128xf32>
    %234 = arith.divf %232, %233 : vector<8x128xf32>
    %235 = arith.mulf %226, %208 : vector<8x128xf32>
    %236 = arith.mulf %220, %228 : vector<8x128xf32>
    %237 = arith.addf %235, %236 : vector<8x128xf32>
    %238 = math.tanh %237 : vector<8x128xf32>
    %239 = arith.mulf %234, %238 : vector<8x128xf32>
    %c56_65 = arith.constant 56 : index
    %c0_66 = arith.constant 0 : index
    %240 = vector.load %arg11[%c56_65, %c0_66] : memref<64x128xf32, #tpu.memory_space<vmem>>, vector<8x128xf32>
    tpu.vector_store %arg11[%c56_65, %c0_66], %239 {strides = array<i32>} : memref<64x128xf32, #tpu.memory_space<vmem>>, vector<8x128xf32>,
    %c0_67 = arith.constant 0 : index
    %c0_68 = arith.constant 0 : index
    %241 = vector.load %arg11[%c0_67, %c0_68] : memref<64x128xf32, #tpu.memory_space<vmem>>, vector<64x128xf32>
    %c0_69 = arith.constant 0 : index
    %c0_70 = arith.constant 0 : index
    %242 = vector.load %arg4[%c0_69, %c0_70] : memref<128x512xf32, #tpu.memory_space<vmem>>, vector<128x512xf32>
    %cst_71 = arith.constant dense<0.000000e+00> : vector<64x512xf32>
    %243 = tpu.matmul %241, %242, %cst_71 {dimension_numbers = #tpu.dot_dimension_numbers<[1], [0], [0], [1], [0, 0, 1, 1], [], []>} : vector<64x128xf32>, vector<128x512xf32>, vector<64x512xf32> -> vector<64x512xf32>
    %c0_72 = arith.constant 0 : index
    %c0_73 = arith.constant 0 : index
    %244 = vector.load %arg6[%c0_72, %c0_73] : memref<1x512xf32, #tpu.memory_space<vmem>>, vector<1x512xf32>
    %245 = vector.broadcast %244 : vector<1x512xf32> to vector<64x512xf32>
    %246 = arith.addf %243, %245 : vector<64x512xf32>
    %c0_74 = arith.constant 0 : index
    %c0_75 = arith.constant 0 : index
    %247 = vector.load %arg12[%c0_74, %c0_75] : memref<64x512xf32, #tpu.memory_space<vmem>>, vector<64x512xf32>
    tpu.vector_store %arg12[%c0_74, %c0_75], %246 {strides = array<i32>} : memref<64x512xf32, #tpu.memory_space<vmem>>, vector<64x512xf32>,
    %c0_76 = arith.constant 0 : index
    %c0_77 = arith.constant 0 : index
    %248 = vector.load %arg5[%c0_76, %c0_77] : memref<128x512xf32, #tpu.memory_space<vmem>>, vector<128x512xf32>
    %c0_78 = arith.constant 0 : index
    %c0_79 = arith.constant 0 : index
    %249 = vector.load %arg12[%c0_78, %c0_79] : memref<64x512xf32, #tpu.memory_space<vmem>>, vector<8x512xf32>
    %cst_80 = arith.constant dense<0.000000e+00> : vector<8x512xf32>
    %250 = tpu.matmul %7, %248, %cst_80 {dimension_numbers = #tpu.dot_dimension_numbers<[1], [0], [0], [1], [0, 0, 1, 1], [], []>} : vector<8x128xf32>, vector<128x512xf32>, vector<8x512xf32> -> vector<8x512xf32>
    %251 = arith.addf %249, %250 : vector<8x512xf32>
    %252 = vector.extract_strided_slice %251 {offsets = [0, 0], sizes = [8, 128], strides = [1, 1]} : vector<8x512xf32> to vector<8x128xf32>
    %253 = arith.negf %252 : vector<8x128xf32>
    %254 = math.exp %253 : vector<8x128xf32>
    %cst_81 = arith.constant 1.000000e+00 : f32
    %255 = vector.broadcast %cst_81 : f32 to vector<8x128xf32>
    %256 = arith.addf %255, %254 : vector<8x128xf32>
    %257 = arith.divf %255, %256 : vector<8x128xf32>
    %258 = vector.extract_strided_slice %251 {offsets = [0, 128], sizes = [8, 128], strides = [1, 1]} : vector<8x512xf32> to vector<8x128xf32>
    %259 = arith.negf %258 : vector<8x128xf32>
    %260 = math.exp %259 : vector<8x128xf32>
    %cst_82 = arith.constant 1.000000e+00 : f32
    %261 = vector.broadcast %cst_82 : f32 to vector<8x128xf32>
    %262 = arith.addf %261, %260 : vector<8x128xf32>
    %263 = arith.divf %261, %262 : vector<8x128xf32>
    %264 = vector.extract_strided_slice %251 {offsets = [0, 256], sizes = [8, 128], strides = [1, 1]} : vector<8x512xf32> to vector<8x128xf32>
    %265 = math.tanh %264 : vector<8x128xf32>
    %266 = vector.extract_strided_slice %251 {offsets = [0, 384], sizes = [8, 128], strides = [1, 1]} : vector<8x512xf32> to vector<8x128xf32>
    %267 = arith.negf %266 : vector<8x128xf32>
    %268 = math.exp %267 : vector<8x128xf32>
    %cst_83 = arith.constant 1.000000e+00 : f32
    %269 = vector.broadcast %cst_83 : f32 to vector<8x128xf32>
    %270 = arith.addf %269, %268 : vector<8x128xf32>
    %271 = arith.divf %269, %270 : vector<8x128xf32>
    %272 = arith.mulf %263, %7 : vector<8x128xf32>
    %273 = arith.mulf %257, %265 : vector<8x128xf32>
    %274 = arith.addf %272, %273 : vector<8x128xf32>
    %275 = math.tanh %274 : vector<8x128xf32>
    %276 = arith.mulf %271, %275 : vector<8x128xf32>
    %c8_84 = arith.constant 8 : index
    %c0_85 = arith.constant 0 : index
    %277 = vector.load %arg12[%c8_84, %c0_85] : memref<64x512xf32, #tpu.memory_space<vmem>>, vector<8x512xf32>
    %cst_86 = arith.constant dense<0.000000e+00> : vector<8x512xf32>
    %278 = tpu.matmul %276, %248, %cst_86 {dimension_numbers = #tpu.dot_dimension_numbers<[1], [0], [0], [1], [0, 0, 1, 1], [], []>} : vector<8x128xf32>, vector<128x512xf32>, vector<8x512xf32> -> vector<8x512xf32>
    %279 = arith.addf %277, %278 : vector<8x512xf32>
    %280 = vector.extract_strided_slice %279 {offsets = [0, 0], sizes = [8, 128], strides = [1, 1]} : vector<8x512xf32> to vector<8x128xf32>
    %281 = arith.negf %280 : vector<8x128xf32>
    %282 = math.exp %281 : vector<8x128xf32>
    %cst_87 = arith.constant 1.000000e+00 : f32
    %283 = vector.broadcast %cst_87 : f32 to vector<8x128xf32>
    %284 = arith.addf %283, %282 : vector<8x128xf32>
    %285 = arith.divf %283, %284 : vector<8x128xf32>
    %286 = vector.extract_strided_slice %279 {offsets = [0, 128], sizes = [8, 128], strides = [1, 1]} : vector<8x512xf32> to vector<8x128xf32>
    %287 = arith.negf %286 : vector<8x128xf32>
    %288 = math.exp %287 : vector<8x128xf32>
    %cst_88 = arith.constant 1.000000e+00 : f32
    %289 = vector.broadcast %cst_88 : f32 to vector<8x128xf32>
    %290 = arith.addf %289, %288 : vector<8x128xf32>
    %291 = arith.divf %289, %290 : vector<8x128xf32>
    %292 = vector.extract_strided_slice %279 {offsets = [0, 256], sizes = [8, 128], strides = [1, 1]} : vector<8x512xf32> to vector<8x128xf32>
    %293 = math.tanh %292 : vector<8x128xf32>
    %294 = vector.extract_strided_slice %279 {offsets = [0, 384], sizes = [8, 128], strides = [1, 1]} : vector<8x512xf32> to vector<8x128xf32>
    %295 = arith.negf %294 : vector<8x128xf32>
    %296 = math.exp %295 : vector<8x128xf32>
    %cst_89 = arith.constant 1.000000e+00 : f32
    %297 = vector.broadcast %cst_89 : f32 to vector<8x128xf32>
    %298 = arith.addf %297, %296 : vector<8x128xf32>
    %299 = arith.divf %297, %298 : vector<8x128xf32>
    %300 = arith.mulf %291, %274 : vector<8x128xf32>
    %301 = arith.mulf %285, %293 : vector<8x128xf32>
    %302 = arith.addf %300, %301 : vector<8x128xf32>
    %303 = math.tanh %302 : vector<8x128xf32>
    %304 = arith.mulf %299, %303 : vector<8x128xf32>
    %c16_90 = arith.constant 16 : index
    %c0_91 = arith.constant 0 : index
    %305 = vector.load %arg12[%c16_90, %c0_91] : memref<64x512xf32, #tpu.memory_space<vmem>>, vector<8x512xf32>
    %cst_92 = arith.constant dense<0.000000e+00> : vector<8x512xf32>
    %306 = tpu.matmul %304, %248, %cst_92 {dimension_numbers = #tpu.dot_dimension_numbers<[1], [0], [0], [1], [0, 0, 1, 1], [], []>} : vector<8x128xf32>, vector<128x512xf32>, vector<8x512xf32> -> vector<8x512xf32>
    %307 = arith.addf %305, %306 : vector<8x512xf32>
    %308 = vector.extract_strided_slice %307 {offsets = [0, 0], sizes = [8, 128], strides = [1, 1]} : vector<8x512xf32> to vector<8x128xf32>
    %309 = arith.negf %308 : vector<8x128xf32>
    %310 = math.exp %309 : vector<8x128xf32>
    %cst_93 = arith.constant 1.000000e+00 : f32
    %311 = vector.broadcast %cst_93 : f32 to vector<8x128xf32>
    %312 = arith.addf %311, %310 : vector<8x128xf32>
    %313 = arith.divf %311, %312 : vector<8x128xf32>
    %314 = vector.extract_strided_slice %307 {offsets = [0, 128], sizes = [8, 128], strides = [1, 1]} : vector<8x512xf32> to vector<8x128xf32>
    %315 = arith.negf %314 : vector<8x128xf32>
    %316 = math.exp %315 : vector<8x128xf32>
    %cst_94 = arith.constant 1.000000e+00 : f32
    %317 = vector.broadcast %cst_94 : f32 to vector<8x128xf32>
    %318 = arith.addf %317, %316 : vector<8x128xf32>
    %319 = arith.divf %317, %318 : vector<8x128xf32>
    %320 = vector.extract_strided_slice %307 {offsets = [0, 256], sizes = [8, 128], strides = [1, 1]} : vector<8x512xf32> to vector<8x128xf32>
    %321 = math.tanh %320 : vector<8x128xf32>
    %322 = vector.extract_strided_slice %307 {offsets = [0, 384], sizes = [8, 128], strides = [1, 1]} : vector<8x512xf32> to vector<8x128xf32>
    %323 = arith.negf %322 : vector<8x128xf32>
    %324 = math.exp %323 : vector<8x128xf32>
    %cst_95 = arith.constant 1.000000e+00 : f32
    %325 = vector.broadcast %cst_95 : f32 to vector<8x128xf32>
    %326 = arith.addf %325, %324 : vector<8x128xf32>
    %327 = arith.divf %325, %326 : vector<8x128xf32>
    %328 = arith.mulf %319, %302 : vector<8x128xf32>
    %329 = arith.mulf %313, %321 : vector<8x128xf32>
    %330 = arith.addf %328, %329 : vector<8x128xf32>
    %331 = math.tanh %330 : vector<8x128xf32>
    %332 = arith.mulf %327, %331 : vector<8x128xf32>
    %c24_96 = arith.constant 24 : index
    %c0_97 = arith.constant 0 : index
    %333 = vector.load %arg12[%c24_96, %c0_97] : memref<64x512xf32, #tpu.memory_space<vmem>>, vector<8x512xf32>
    %cst_98 = arith.constant dense<0.000000e+00> : vector<8x512xf32>
    %334 = tpu.matmul %332, %248, %cst_98 {dimension_numbers = #tpu.dot_dimension_numbers<[1], [0], [0], [1], [0, 0, 1, 1], [], []>} : vector<8x128xf32>, vector<128x512xf32>, vector<8x512xf32> -> vector<8x512xf32>
    %335 = arith.addf %333, %334 : vector<8x512xf32>
    %336 = vector.extract_strided_slice %335 {offsets = [0, 0], sizes = [8, 128], strides = [1, 1]} : vector<8x512xf32> to vector<8x128xf32>
    %337 = arith.negf %336 : vector<8x128xf32>
    %338 = math.exp %337 : vector<8x128xf32>
    %cst_99 = arith.constant 1.000000e+00 : f32
    %339 = vector.broadcast %cst_99 : f32 to vector<8x128xf32>
    %340 = arith.addf %339, %338 : vector<8x128xf32>
    %341 = arith.divf %339, %340 : vector<8x128xf32>
    %342 = vector.extract_strided_slice %335 {offsets = [0, 128], sizes = [8, 128], strides = [1, 1]} : vector<8x512xf32> to vector<8x128xf32>
    %343 = arith.negf %342 : vector<8x128xf32>
    %344 = math.exp %343 : vector<8x128xf32>
    %cst_100 = arith.constant 1.000000e+00 : f32
    %345 = vector.broadcast %cst_100 : f32 to vector<8x128xf32>
    %346 = arith.addf %345, %344 : vector<8x128xf32>
    %347 = arith.divf %345, %346 : vector<8x128xf32>
    %348 = vector.extract_strided_slice %335 {offsets = [0, 256], sizes = [8, 128], strides = [1, 1]} : vector<8x512xf32> to vector<8x128xf32>
    %349 = math.tanh %348 : vector<8x128xf32>
    %350 = vector.extract_strided_slice %335 {offsets = [0, 384], sizes = [8, 128], strides = [1, 1]} : vector<8x512xf32> to vector<8x128xf32>
    %351 = arith.negf %350 : vector<8x128xf32>
    %352 = math.exp %351 : vector<8x128xf32>
    %cst_101 = arith.constant 1.000000e+00 : f32
    %353 = vector.broadcast %cst_101 : f32 to vector<8x128xf32>
    %354 = arith.addf %353, %352 : vector<8x128xf32>
    %355 = arith.divf %353, %354 : vector<8x128xf32>
    %356 = arith.mulf %347, %330 : vector<8x128xf32>
    %357 = arith.mulf %341, %349 : vector<8x128xf32>
    %358 = arith.addf %356, %357 : vector<8x128xf32>
    %359 = math.tanh %358 : vector<8x128xf32>
    %360 = arith.mulf %355, %359 : vector<8x128xf32>
    %c32_102 = arith.constant 32 : index
    %c0_103 = arith.constant 0 : index
    %361 = vector.load %arg12[%c32_102, %c0_103] : memref<64x512xf32, #tpu.memory_space<vmem>>, vector<8x512xf32>
    %cst_104 = arith.constant dense<0.000000e+00> : vector<8x512xf32>
    %362 = tpu.matmul %360, %248, %cst_104 {dimension_numbers = #tpu.dot_dimension_numbers<[1], [0], [0], [1], [0, 0, 1, 1], [], []>} : vector<8x128xf32>, vector<128x512xf32>, vector<8x512xf32> -> vector<8x512xf32>
    %363 = arith.addf %361, %362 : vector<8x512xf32>
    %364 = vector.extract_strided_slice %363 {offsets = [0, 0], sizes = [8, 128], strides = [1, 1]} : vector<8x512xf32> to vector<8x128xf32>
    %365 = arith.negf %364 : vector<8x128xf32>
    %366 = math.exp %365 : vector<8x128xf32>
    %cst_105 = arith.constant 1.000000e+00 : f32
    %367 = vector.broadcast %cst_105 : f32 to vector<8x128xf32>
    %368 = arith.addf %367, %366 : vector<8x128xf32>
    %369 = arith.divf %367, %368 : vector<8x128xf32>
    %370 = vector.extract_strided_slice %363 {offsets = [0, 128], sizes = [8, 128], strides = [1, 1]} : vector<8x512xf32> to vector<8x128xf32>
    %371 = arith.negf %370 : vector<8x128xf32>
    %372 = math.exp %371 : vector<8x128xf32>
    %cst_106 = arith.constant 1.000000e+00 : f32
    %373 = vector.broadcast %cst_106 : f32 to vector<8x128xf32>
    %374 = arith.addf %373, %372 : vector<8x128xf32>
    %375 = arith.divf %373, %374 : vector<8x128xf32>
    %376 = vector.extract_strided_slice %363 {offsets = [0, 256], sizes = [8, 128], strides = [1, 1]} : vector<8x512xf32> to vector<8x128xf32>
    %377 = math.tanh %376 : vector<8x128xf32>
    %378 = vector.extract_strided_slice %363 {offsets = [0, 384], sizes = [8, 128], strides = [1, 1]} : vector<8x512xf32> to vector<8x128xf32>
    %379 = arith.negf %378 : vector<8x128xf32>
    %380 = math.exp %379 : vector<8x128xf32>
    %cst_107 = arith.constant 1.000000e+00 : f32
    %381 = vector.broadcast %cst_107 : f32 to vector<8x128xf32>
    %382 = arith.addf %381, %380 : vector<8x128xf32>
    %383 = arith.divf %381, %382 : vector<8x128xf32>
    %384 = arith.mulf %375, %358 : vector<8x128xf32>
    %385 = arith.mulf %369, %377 : vector<8x128xf32>
    %386 = arith.addf %384, %385 : vector<8x128xf32>
    %387 = math.tanh %386 : vector<8x128xf32>
    %388 = arith.mulf %383, %387 : vector<8x128xf32>
    %c40_108 = arith.constant 40 : index
    %c0_109 = arith.constant 0 : index
    %389 = vector.load %arg12[%c40_108, %c0_109] : memref<64x512xf32, #tpu.memory_space<vmem>>, vector<8x512xf32>
    %cst_110 = arith.constant dense<0.000000e+00> : vector<8x512xf32>
    %390 = tpu.matmul %388, %248, %cst_110 {dimension_numbers = #tpu.dot_dimension_numbers<[1], [0], [0], [1], [0, 0, 1, 1], [], []>} : vector<8x128xf32>, vector<128x512xf32>, vector<8x512xf32> -> vector<8x512xf32>
    %391 = arith.addf %389, %390 : vector<8x512xf32>
    %392 = vector.extract_strided_slice %391 {offsets = [0, 0], sizes = [8, 128], strides = [1, 1]} : vector<8x512xf32> to vector<8x128xf32>
    %393 = arith.negf %392 : vector<8x128xf32>
    %394 = math.exp %393 : vector<8x128xf32>
    %cst_111 = arith.constant 1.000000e+00 : f32
    %395 = vector.broadcast %cst_111 : f32 to vector<8x128xf32>
    %396 = arith.addf %395, %394 : vector<8x128xf32>
    %397 = arith.divf %395, %396 : vector<8x128xf32>
    %398 = vector.extract_strided_slice %391 {offsets = [0, 128], sizes = [8, 128], strides = [1, 1]} : vector<8x512xf32> to vector<8x128xf32>
    %399 = arith.negf %398 : vector<8x128xf32>
    %400 = math.exp %399 : vector<8x128xf32>
    %cst_112 = arith.constant 1.000000e+00 : f32
    %401 = vector.broadcast %cst_112 : f32 to vector<8x128xf32>
    %402 = arith.addf %401, %400 : vector<8x128xf32>
    %403 = arith.divf %401, %402 : vector<8x128xf32>
    %404 = vector.extract_strided_slice %391 {offsets = [0, 256], sizes = [8, 128], strides = [1, 1]} : vector<8x512xf32> to vector<8x128xf32>
    %405 = math.tanh %404 : vector<8x128xf32>
    %406 = vector.extract_strided_slice %391 {offsets = [0, 384], sizes = [8, 128], strides = [1, 1]} : vector<8x512xf32> to vector<8x128xf32>
    %407 = arith.negf %406 : vector<8x128xf32>
    %408 = math.exp %407 : vector<8x128xf32>
    %cst_113 = arith.constant 1.000000e+00 : f32
    %409 = vector.broadcast %cst_113 : f32 to vector<8x128xf32>
    %410 = arith.addf %409, %408 : vector<8x128xf32>
    %411 = arith.divf %409, %410 : vector<8x128xf32>
    %412 = arith.mulf %403, %386 : vector<8x128xf32>
    %413 = arith.mulf %397, %405 : vector<8x128xf32>
    %414 = arith.addf %412, %413 : vector<8x128xf32>
    %415 = math.tanh %414 : vector<8x128xf32>
    %416 = arith.mulf %411, %415 : vector<8x128xf32>
    %c48_114 = arith.constant 48 : index
    %c0_115 = arith.constant 0 : index
    %417 = vector.load %arg12[%c48_114, %c0_115] : memref<64x512xf32, #tpu.memory_space<vmem>>, vector<8x512xf32>
    %cst_116 = arith.constant dense<0.000000e+00> : vector<8x512xf32>
    %418 = tpu.matmul %416, %248, %cst_116 {dimension_numbers = #tpu.dot_dimension_numbers<[1], [0], [0], [1], [0, 0, 1, 1], [], []>} : vector<8x128xf32>, vector<128x512xf32>, vector<8x512xf32> -> vector<8x512xf32>
    %419 = arith.addf %417, %418 : vector<8x512xf32>
    %420 = vector.extract_strided_slice %419 {offsets = [0, 0], sizes = [8, 128], strides = [1, 1]} : vector<8x512xf32> to vector<8x128xf32>
    %421 = arith.negf %420 : vector<8x128xf32>
    %422 = math.exp %421 : vector<8x128xf32>
    %cst_117 = arith.constant 1.000000e+00 : f32
    %423 = vector.broadcast %cst_117 : f32 to vector<8x128xf32>
    %424 = arith.addf %423, %422 : vector<8x128xf32>
    %425 = arith.divf %423, %424 : vector<8x128xf32>
    %426 = vector.extract_strided_slice %419 {offsets = [0, 128], sizes = [8, 128], strides = [1, 1]} : vector<8x512xf32> to vector<8x128xf32>
    %427 = arith.negf %426 : vector<8x128xf32>
    %428 = math.exp %427 : vector<8x128xf32>
    %cst_118 = arith.constant 1.000000e+00 : f32
    %429 = vector.broadcast %cst_118 : f32 to vector<8x128xf32>
    %430 = arith.addf %429, %428 : vector<8x128xf32>
    %431 = arith.divf %429, %430 : vector<8x128xf32>
    %432 = vector.extract_strided_slice %419 {offsets = [0, 256], sizes = [8, 128], strides = [1, 1]} : vector<8x512xf32> to vector<8x128xf32>
    %433 = math.tanh %432 : vector<8x128xf32>
    %434 = vector.extract_strided_slice %419 {offsets = [0, 384], sizes = [8, 128], strides = [1, 1]} : vector<8x512xf32> to vector<8x128xf32>
    %435 = arith.negf %434 : vector<8x128xf32>
    %436 = math.exp %435 : vector<8x128xf32>
    %cst_119 = arith.constant 1.000000e+00 : f32
    %437 = vector.broadcast %cst_119 : f32 to vector<8x128xf32>
    %438 = arith.addf %437, %436 : vector<8x128xf32>
    %439 = arith.divf %437, %438 : vector<8x128xf32>
    %440 = arith.mulf %431, %414 : vector<8x128xf32>
    %441 = arith.mulf %425, %433 : vector<8x128xf32>
    %442 = arith.addf %440, %441 : vector<8x128xf32>
    %443 = math.tanh %442 : vector<8x128xf32>
    %444 = arith.mulf %439, %443 : vector<8x128xf32>
    %c56_120 = arith.constant 56 : index
    %c0_121 = arith.constant 0 : index
    %445 = vector.load %arg12[%c56_120, %c0_121] : memref<64x512xf32, #tpu.memory_space<vmem>>, vector<8x512xf32>
    %cst_122 = arith.constant dense<0.000000e+00> : vector<8x512xf32>
    %446 = tpu.matmul %444, %248, %cst_122 {dimension_numbers = #tpu.dot_dimension_numbers<[1], [0], [0], [1], [0, 0, 1, 1], [], []>} : vector<8x128xf32>, vector<128x512xf32>, vector<8x512xf32> -> vector<8x512xf32>
    %447 = arith.addf %445, %446 : vector<8x512xf32>
    %448 = vector.extract_strided_slice %447 {offsets = [0, 0], sizes = [8, 128], strides = [1, 1]} : vector<8x512xf32> to vector<8x128xf32>
    %449 = arith.negf %448 : vector<8x128xf32>
    %450 = math.exp %449 : vector<8x128xf32>
    %cst_123 = arith.constant 1.000000e+00 : f32
    %451 = vector.broadcast %cst_123 : f32 to vector<8x128xf32>
    %452 = arith.addf %451, %450 : vector<8x128xf32>
    %453 = arith.divf %451, %452 : vector<8x128xf32>
    %454 = vector.extract_strided_slice %447 {offsets = [0, 128], sizes = [8, 128], strides = [1, 1]} : vector<8x512xf32> to vector<8x128xf32>
    %455 = arith.negf %454 : vector<8x128xf32>
    %456 = math.exp %455 : vector<8x128xf32>
    %cst_124 = arith.constant 1.000000e+00 : f32
    %457 = vector.broadcast %cst_124 : f32 to vector<8x128xf32>
    %458 = arith.addf %457, %456 : vector<8x128xf32>
    %459 = arith.divf %457, %458 : vector<8x128xf32>
    %460 = vector.extract_strided_slice %447 {offsets = [0, 256], sizes = [8, 128], strides = [1, 1]} : vector<8x512xf32> to vector<8x128xf32>
    %461 = math.tanh %460 : vector<8x128xf32>
    %462 = vector.extract_strided_slice %447 {offsets = [0, 384], sizes = [8, 128], strides = [1, 1]} : vector<8x512xf32> to vector<8x128xf32>
    %463 = arith.negf %462 : vector<8x128xf32>
    %464 = math.exp %463 : vector<8x128xf32>
    %cst_125 = arith.constant 1.000000e+00 : f32
    %465 = vector.broadcast %cst_125 : f32 to vector<8x128xf32>
    %466 = arith.addf %465, %464 : vector<8x128xf32>
    %467 = arith.divf %465, %466 : vector<8x128xf32>
    %468 = arith.mulf %459, %442 : vector<8x128xf32>
    %469 = arith.mulf %453, %461 : vector<8x128xf32>
    %470 = arith.addf %468, %469 : vector<8x128xf32>
    %471 = math.tanh %470 : vector<8x128xf32>
    %472 = arith.mulf %467, %471 : vector<8x128xf32>
    %c0_126 = arith.constant 0 : index
    %c0_127 = arith.constant 0 : index
    %473 = vector.load %arg7[%c0_126, %c0_127] : memref<128x128xf32, #tpu.memory_space<vmem>>, vector<128x128xf32>
    %cst_128 = arith.constant dense<0.000000e+00> : vector<8x128xf32>
    %474 = tpu.matmul %472, %473, %cst_128 {dimension_numbers = #tpu.dot_dimension_numbers<[1], [0], [0], [1], [0, 0, 1, 1], [], []>} : vector<8x128xf32>, vector<128x128xf32>, vector<8x128xf32> -> vector<8x128xf32>
    %c0_129 = arith.constant 0 : index
    %c0_130 = arith.constant 0 : index
    %475 = vector.load %arg8[%c0_129, %c0_130] : memref<1x128xf32, #tpu.memory_space<vmem>>, vector<1x128xf32>
    %476 = vector.broadcast %475 : vector<1x128xf32> to vector<8x128xf32>
    %477 = arith.addf %474, %476 : vector<8x128xf32>
    %c0_131 = arith.constant 0 : index
    %c0_132 = arith.constant 0 : index
    %478 = vector.load %arg9[%c0_131, %c0_132] : memref<8x128xf32, #tpu.memory_space<vmem>>, vector<8x128xf32>
    tpu.vector_store %arg9[%c0_131, %c0_132], %477 {strides = array<i32>} : memref<8x128xf32, #tpu.memory_space<vmem>>, vector<8x128xf32>,
    return
  }
}

</mosaic_0001>

<llo_original>
// kernel: tpu_custom_call.1
$region0: #{tpu_custom_call.1}
  #allocation0 [shape = 'u32[]', space=smem, size = 0x4, offset = 0x4, fixed_abs, tag = 'smem constant byte address 0x4 - core index']
  #allocation1 [shape = 'u32[144,128]{1,0:T(1,128)}', space=vmem, size = 0x12000, scoped, tag = 'internal scratch']
  #allocation2 [shape = 'f32[64,512]{1,0:T(8,128)}', space=vmem, size = 0x20000, scoped, tag = 'scratch operand']
  #allocation3 [shape = 'f32[64,128]{1,0:T(8,128)}', space=vmem, size = 0x8000, scoped, tag = 'scratch operand']
  #allocation4 [shape = 'f32[64,512]{1,0:T(8,128)}', space=vmem, size = 0x20000, scoped, tag = 'scratch operand']
  %s0 = inlined_call_operand.vmem [shape: f32[64,16], index: 0, kind: input, shape index: {}]
  %s1 = inlined_call_operand.vmem [shape: f32[16,512], index: 1, kind: input, shape index: {}]
  %s2 = inlined_call_operand.hbm [shape: f32[128,512], index: 2, kind: input, shape index: {}]
  %s3 = inlined_call_operand.vmem [shape: f32[1,512], index: 3, kind: input, shape index: {}]
  %s4 = inlined_call_operand.hbm [shape: f32[128,512], index: 4, kind: input, shape index: {}]
  %s5 = inlined_call_operand.hbm [shape: f32[128,512], index: 5, kind: input, shape index: {}]
  %s6 = inlined_call_operand.vmem [shape: f32[1,512], index: 6, kind: input, shape index: {}]
  %s7 = inlined_call_operand.hbm [shape: f32[128,128], index: 7, kind: input, shape index: {}]
  %s8 = inlined_call_operand.vmem [shape: f32[1,128], index: 8, kind: input, shape index: {}]
  %s9 = inlined_call_operand.hbm [shape: f32[8,128], index: 9, kind: output, shape index: {}]
  %s10 = sld [smem:[#allocation0]]
  $region62: #{tpu_custom_call.1} parent=0
    _
  %s12 = ssub.s32 1, %s10
  %s13 = scalar_select 0, %s12, %s10
  $region1: #{tpu_custom_call.1} parent=0
    #allocation5 [shape = 'u8[262144]{0}', space=vmem, size = 0x40000, scoped, tag = 'input window, operand 2, single buffered']
    #allocation6 [shape = 's32[1]{0}', space=sflag, size = 0x4, scoped, tag = 'scoped memory for tpu_custom_call.1']
    #allocation7 [shape = 's32[1]{0}', space=sflag, size = 0x4, scoped, tag = 'scoped memory for tpu_custom_call.1']
    #allocation8 [shape = 'u8[262144]{0}', space=vmem, size = 0x40000, scoped, tag = 'input window, operand 4, single buffered']
    #allocation9 [shape = 's32[1]{0}', space=sflag, size = 0x4, scoped, tag = 'scoped memory for tpu_custom_call.1']
    #allocation10 [shape = 'u8[262144]{0}', space=vmem, size = 0x40000, scoped, tag = 'input window, operand 5, single buffered']
    #allocation11 [shape = 'u8[65536]{0}', space=vmem, size = 0x10000, scoped, tag = 'input window, operand 7, single buffered']
    #allocation12 [shape = 's32[1]{0}', space=sflag, size = 0x4, scoped, tag = 'scoped memory for tpu_custom_call.1']
    #allocation13 [shape = 'u8[4096]{0}', space=vmem, size = 0x1000, scoped, tag = 'output window, operand 0, single buffered']
    %14 = vsyncpa [#allocation6], 0
    %15 = vsyncpa [#allocation9], 0
    %16 = vsyncpa [#allocation12], 0
    %17 = vsyncpa [#allocation7], 0
    // Predicated region
    $region2: #{tpu_custom_call.1} parent=1 // pred_check
      _
    $region3: #{tpu_custom_call.1} parent=1 // pred_check_branch
      %19 = sbr.rel (0) target = $region5
    $region4: #{tpu_custom_call.1} parent=1 // pred_region
      _
    $region5: #{tpu_custom_call.1} parent=1 // pred_fallthru
      _
    // Predicated region
    $region6: #{tpu_custom_call.1} parent=1 // pred_check
      _
    $region7: #{tpu_custom_call.1} parent=1 // pred_check_branch
      %21 = sbr.rel (0) target = $region9
    $region8: #{tpu_custom_call.1} parent=1 // pred_region
      _
    $region9: #{tpu_custom_call.1} parent=1 // pred_fallthru
      _
    // Predicated region
    $region10: #{tpu_custom_call.1} parent=1 // pred_check
      _
    $region11: #{tpu_custom_call.1} parent=1 // pred_check_branch
      %23 = sbr.rel (0) target = $region13
    $region12: #{tpu_custom_call.1} parent=1 // pred_region
      %s25 = ssub.s32 8192, 8192
      %26 = vsyncadd [#allocation6], %s25
      %s27 = sshll.u32 [#allocation5], 4
      %s28 = int_to_ptr.vmem [resolvable:$true] %s27
      %33 = dma.hbm_to_vmem [thread:$0]  %s2, 8192, %s28, [#allocation6], 512, 512, 32
    $region13: #{tpu_custom_call.1} parent=1 // pred_fallthru
      _
    // Predicated region
    $region14: #{tpu_custom_call.1} parent=1 // pred_check
      _
    $region15: #{tpu_custom_call.1} parent=1 // pred_check_branch
      %35 = sbr.rel (0) target = $region17
    $region16: #{tpu_custom_call.1} parent=1 // pred_region
      _
    $region17: #{tpu_custom_call.1} parent=1 // pred_fallthru
      _
    // Predicated region
    $region18: #{tpu_custom_call.1} parent=1 // pred_check
      _
    $region19: #{tpu_custom_call.1} parent=1 // pred_check_branch
      %37 = sbr.rel (0) target = $region21
    $region20: #{tpu_custom_call.1} parent=1 // pred_region
      %s39 = ssub.s32 8192, 8192
      %40 = vsyncadd [#allocation9], %s39
      %s41 = sshll.u32 [#allocation8], 4
      %s42 = int_to_ptr.vmem [resolvable:$true] %s41
      %47 = dma.hbm_to_vmem [thread:$0]  %s4, 8192, %s42, [#allocation9], 512, 512, 32
    $region21: #{tpu_custom_call.1} parent=1 // pred_fallthru
      _
    // Predicated region
    $region22: #{tpu_custom_call.1} parent=1 // pred_check
      _
    $region23: #{tpu_custom_call.1} parent=1 // pred_check_branch
      %49 = sbr.rel (0) target = $region25
    $region24: #{tpu_custom_call.1} parent=1 // pred_region
      %s51 = ssub.s32 8192, 8192
      %52 = vsyncadd [#allocation9], %s51
      %s53 = sshll.u32 [#allocation10], 4
      %s54 = int_to_ptr.vmem [resolvable:$true] %s53
      %59 = dma.hbm_to_vmem [thread:$0]  %s5, 8192, %s54, [#allocation9], 512, 512, 32
    $region25: #{tpu_custom_call.1} parent=1 // pred_fallthru
      _
    // Predicated region
    $region26: #{tpu_custom_call.1} parent=1 // pred_check
      _
    $region27: #{tpu_custom_call.1} parent=1 // pred_check_branch
      %61 = sbr.rel (0) target = $region29
    $region28: #{tpu_custom_call.1} parent=1 // pred_region
      _
    $region29: #{tpu_custom_call.1} parent=1 // pred_fallthru
      _
    // Predicated region
    $region30: #{tpu_custom_call.1} parent=1 // pred_check
      _
    $region31: #{tpu_custom_call.1} parent=1 // pred_check_branch
      %63 = sbr.rel (0) target = $region33
    $region32: #{tpu_custom_call.1} parent=1 // pred_region
      %s65 = ssub.s32 2048, 2048
      %66 = vsyncadd [#allocation12], %s65
      %s67 = sshll.u32 [#allocation11], 4
      %s68 = int_to_ptr.vmem [resolvable:$true] %s67
      %73 = dma.hbm_to_vmem [thread:$0]  %s7, 2048, %s68, [#allocation12], 128, 128, 8
    $region33: #{tpu_custom_call.1} parent=1 // pred_fallthru
      _
    // Predicated region
    $region34: #{tpu_custom_call.1} parent=1 // pred_check
      _
    $region35: #{tpu_custom_call.1} parent=1 // pred_check_branch
      %75 = sbr.rel (0) target = $region37
    $region36: #{tpu_custom_call.1} parent=1 // pred_region
      _
    $region37: #{tpu_custom_call.1} parent=1 // pred_fallthru
      _
    // Predicated region
    $region38: #{tpu_custom_call.1} parent=1 // pred_check
      _
    $region39: #{tpu_custom_call.1} parent=1 // pred_check_branch
      %77 = sbr.rel (0) target = $region41
    $region40: #{tpu_custom_call.1} parent=1 // pred_region
      %78 = dma.done [#allocation6], 8192
    $region41: #{tpu_custom_call.1} parent=1 // pred_fallthru
      _
    // Predicated region
    $region42: #{tpu_custom_call.1} parent=1 // pred_check
      _
    $region43: #{tpu_custom_call.1} parent=1 // pred_check_branch
      %80 = sbr.rel (0) target = $region45
    $region44: #{tpu_custom_call.1} parent=1 // pred_region
      %81 = dma.done [#allocation9], 8192
    $region45: #{tpu_custom_call.1} parent=1 // pred_fallthru
      _
    // Predicated region
    $region46: #{tpu_custom_call.1} parent=1 // pred_check
      _
    $region47: #{tpu_custom_call.1} parent=1 // pred_check_branch
      %83 = sbr.rel (0) target = $region49
    $region48: #{tpu_custom_call.1} parent=1 // pred_region
      %84 = dma.done [#allocation9], 8192
    $region49: #{tpu_custom_call.1} parent=1 // pred_fallthru
      _
    // Predicated region
    $region50: #{tpu_custom_call.1} parent=1 // pred_check
      _
    $region51: #{tpu_custom_call.1} parent=1 // pred_check_branch
      %86 = sbr.rel (0) target = $region53
    $region52: #{tpu_custom_call.1} parent=1 // pred_region
      %87 = dma.done [#allocation12], 2048
    $region53: #{tpu_custom_call.1} parent=1 // pred_fallthru
      _
    %v88 = vld [vmem:[%s0] sm:$0xff]
    %v89 = vld [vmem:[%s0 + $0x8] sm:$0xff]
    %v90 = vld [vmem:[%s0 + $0x10] sm:$0xff]
    %v91 = vld [vmem:[%s0 + $0x18] sm:$0xff]
    %v92 = vld [vmem:[%s0 + $0x20] sm:$0xff]
    %v93 = vld [vmem:[%s0 + $0x28] sm:$0xff]
    %v94 = vld [vmem:[%s0 + $0x30] sm:$0xff]
    %v95 = vld [vmem:[%s0 + $0x38] sm:$0xff]
    %v96 = vld [vmem:[%s1] sm:$0xff]
    %v97 = vld [vmem:[%s1 + $0x8] sm:$0xff]
    %v98 = vld [vmem:[%s1 + $0x10] sm:$0xff]
    %v99 = vld [vmem:[%s1 + $0x18] sm:$0xff]
    %v100 = vld [vmem:[%s1 + $0x20] sm:$0xff]
    %v101 = vld [vmem:[%s1 + $0x28] sm:$0xff]
    %v102 = vld [vmem:[%s1 + $0x30] sm:$0xff]
    %v103 = vld [vmem:[%s1 + $0x38] sm:$0xff]
    %v104 = vld [vmem:[%s3] sm:$0xf]
    %v106 = vlaneseq
    %v107 = vshrl.u32 %v106, 7
    %v108 = vsub.s32 0, %v107
    %v109 = vrot.slane %v104, %v108
    %v110 = vlaneseq
    %v111 = vshrl.u32 %v110, 7
    %v112 = vsub.s32 1, %v111
    %v113 = vrot.slane %v104, %v112
    %v114 = vlaneseq
    %v115 = vshrl.u32 %v114, 7
    %v116 = vsub.s32 2, %v115
    %v117 = vrot.slane %v104, %v116
    %v118 = vlaneseq
    %v119 = vshrl.u32 %v118, 7
    %v120 = vsub.s32 3, %v119
    %v121 = vrot.slane %v104, %v120
    %vm126 = vcmask 130048
    %v128 = vsel %vm126, %v88, 0
    %v131 = vsel %vm126, %v89, 0
    %v134 = vsel %vm126, %v90, 0
    %v137 = vsel %vm126, %v91, 0
    %v140 = vsel %vm126, %v92, 0
    %v143 = vsel %vm126, %v93, 0
    %v146 = vsel %vm126, %v94, 0
    %v149 = vsel %vm126, %v95, 0
    %151 = vmatprep.subr.mxu0 0.0
    %152 = vmatpush1.msra.mxu0 0.0
    %153 = vmatprep.subr.mxu0 0.0
    %154 = vmatpush1.msra.mxu0 0.0
    %155 = vmatprep.subr.mxu0 0.0
    %156 = vmatpush1.msra.mxu0 0.0
    %157 = vmatprep.subr.mxu0 0.0
    %158 = vmatpush1.msra.mxu0 0.0
    %159 = vmatprep.subr.mxu0 0.0
    %160 = vmatpush1.msra.mxu0 0.0
    %161 = vmatprep.subr.mxu0 0.0
    %162 = vmatpush1.msra.mxu0 0.0
    %163 = vmatprep.subr.mxu0 0.0
    %164 = vmatpush1.msra.mxu0 0.0
    %165 = vmatprep.subr.mxu0 0.0
    %166 = vmatpush1.msra.mxu0 0.0
    %167 = vmatprep.subr.mxu0 0.0
    %168 = vmatpush1.msra.mxu0 0.0
    %169 = vmatprep.subr.mxu0 0.0
    %170 = vmatpush1.msra.mxu0 0.0
    %171 = vmatprep.subr.mxu0 0.0
    %172 = vmatpush1.msra.mxu0 0.0
    %173 = vmatprep.subr.mxu0 0.0
    %174 = vmatpush1.msra.mxu0 0.0
    %175 = vmatprep.subr.mxu0 0.0
    %176 = vmatpush1.msra.mxu0 0.0
    %177 = vmatprep.subr.mxu0 0.0
    %178 = vmatpush1.msra.mxu0 0.0
    %179 = vmatprep.subr.mxu0 %v101
    %180 = vmatpush1.msra.mxu0 %v100
    %181 = vmatprep.subr.mxu0 %v97
    %182 = vmatpush1.msra.mxu0 %v96
    %183 = vmatprep.subr.mxu0 0.0
    %184 = vmatpush2.msra.mxu0 0.0
    %185 = vmatprep.subr.mxu0 0.0
    %186 = vmatpush2.msra.mxu0 0.0
    %187 = vmatprep.subr.mxu0 0.0
    %188 = vmatpush2.msra.mxu0 0.0
    %189 = vmatprep.subr.mxu0 0.0
    %190 = vmatpush2.msra.mxu0 0.0
    %191 = vmatprep.subr.mxu0 0.0
    %192 = vmatpush2.msra.mxu0 0.0
    %193 = vmatprep.subr.mxu0 0.0
    %194 = vmatpush2.msra.mxu0 0.0
    %195 = vmatprep.subr.mxu0 0.0
    %196 = vmatpush2.msra.mxu0 0.0
    %197 = vmatprep.subr.mxu0 0.0
    %198 = vmatpush2.msra.mxu0 0.0
    %199 = vmatprep.subr.mxu0 0.0
    %200 = vmatpush2.msra.mxu0 0.0
    %201 = vmatprep.subr.mxu0 0.0
    %202 = vmatpush2.msra.mxu0 0.0
    %203 = vmatprep.subr.mxu0 0.0
    %204 = vmatpush2.msra.mxu0 0.0
    %205 = vmatprep.subr.mxu0 0.0
    %206 = vmatpush2.msra.mxu0 0.0
    %207 = vmatprep.subr.mxu0 0.0
    %208 = vmatpush2.msra.mxu0 0.0
    %209 = vmatprep.subr.mxu0 0.0
    %210 = vmatpush2.msra.mxu0 0.0
    %211 = vmatprep.subr.mxu0 0.0
    %212 = vmatpush2.msra.mxu0 0.0
    %213 = vmatprep.subr.mxu0 0.0
    %214 = vmatpush2.msra.mxu0 0.0
    %215 = vmatprep.mubr.f32.mxu0 0.0
    %216 = vmatmul.mubr.f32.gmra.mxu0 %v128
    %v217 = vpop.f32.mrf.mxu0
    %v218 = vadd.f32 %v109, %v217
    %v219 = vpop.f32.mrf.mxu0
    %v220 = vadd.f32 %v113, %v219
    %221 = vmatprep.mubr.f32.mxu0 0.0
    %222 = vmatmul.mubr.f32.gmra.mxu0 %v131
    %v223 = vpop.f32.mrf.mxu0
    %v224 = vadd.f32 %v109, %v223
    %v225 = vpop.f32.mrf.mxu0
    %v226 = vadd.f32 %v113, %v225
    %227 = vmatprep.mubr.f32.mxu0 0.0
    %228 = vmatmul.mubr.f32.gmra.mxu0 %v134
    %v229 = vpop.f32.mrf.mxu0
    %v230 = vadd.f32 %v109, %v229
    %v231 = vpop.f32.mrf.mxu0
    %v232 = vadd.f32 %v113, %v231
    %233 = vmatprep.mubr.f32.mxu0 0.0
    %234 = vmatmul.mubr.f32.gmra.mxu0 %v137
    %v235 = vpop.f32.mrf.mxu0
    %v236 = vadd.f32 %v109, %v235
    %v237 = vpop.f32.mrf.mxu0
    %v238 = vadd.f32 %v113, %v237
    %239 = vmatprep.mubr.f32.mxu0 0.0
    %240 = vmatmul.mubr.f32.gmra.mxu0 %v140
    %v241 = vpop.f32.mrf.mxu0
    %v242 = vadd.f32 %v109, %v241
    %v243 = vpop.f32.mrf.mxu0
    %v244 = vadd.f32 %v113, %v243
    %245 = vmatprep.mubr.f32.mxu0 0.0
    %246 = vmatmul.mubr.f32.gmra.mxu0 %v143
    %v247 = vpop.f32.mrf.mxu0
    %v248 = vadd.f32 %v109, %v247
    %v249 = vpop.f32.mrf.mxu0
    %v250 = vadd.f32 %v113, %v249
    %251 = vmatprep.mubr.f32.mxu0 0.0
    %252 = vmatmul.mubr.f32.gmra.mxu0 %v146
    %v253 = vpop.f32.mrf.mxu0
    %v254 = vadd.f32 %v109, %v253
    %v255 = vpop.f32.mrf.mxu0
    %v256 = vadd.f32 %v113, %v255
    %257 = vmatprep.mubr.f32.mxu0 0.0
    %258 = vmatmul.mubr.f32.gmra.mxu0 %v149
    %v259 = vpop.f32.mrf.mxu0
    %v260 = vadd.f32 %v109, %v259
    %v261 = vpop.f32.mrf.mxu0
    %v262 = vadd.f32 %v113, %v261
    %263 = vdwg.mxu0
    %264 = vmatprep.subr.mxu0 0.0
    %265 = vmatpush1.msra.mxu0 0.0
    %266 = vmatprep.subr.mxu0 0.0
    %267 = vmatpush1.msra.mxu0 0.0
    %268 = vmatprep.subr.mxu0 0.0
    %269 = vmatpush1.msra.mxu0 0.0
    %270 = vmatprep.subr.mxu0 0.0
    %271 = vmatpush1.msra.mxu0 0.0
    %272 = vmatprep.subr.mxu0 0.0
    %273 = vmatpush1.msra.mxu0 0.0
    %274 = vmatprep.subr.mxu0 0.0
    %275 = vmatpush1.msra.mxu0 0.0
    %276 = vmatprep.subr.mxu0 0.0
    %277 = vmatpush1.msra.mxu0 0.0
    %278 = vmatprep.subr.mxu0 0.0
    %279 = vmatpush1.msra.mxu0 0.0
    %280 = vmatprep.subr.mxu0 0.0
    %281 = vmatpush1.msra.mxu0 0.0
    %282 = vmatprep.subr.mxu0 0.0
    %283 = vmatpush1.msra.mxu0 0.0
    %284 = vmatprep.subr.mxu0 0.0
    %285 = vmatpush1.msra.mxu0 0.0
    %286 = vmatprep.subr.mxu0 0.0
    %287 = vmatpush1.msra.mxu0 0.0
    %288 = vmatprep.subr.mxu0 0.0
    %289 = vmatpush1.msra.mxu0 0.0
    %290 = vmatprep.subr.mxu0 0.0
    %291 = vmatpush1.msra.mxu0 0.0
    %292 = vmatprep.subr.mxu0 %v103
    %293 = vmatpush1.msra.mxu0 %v102
    %294 = vmatprep.subr.mxu0 %v99
    %295 = vmatpush1.msra.mxu0 %v98
    %296 = vmatprep.subr.mxu0 0.0
    %297 = vmatpush2.msra.mxu0 0.0
    %298 = vmatprep.subr.mxu0 0.0
    %299 = vmatpush2.msra.mxu0 0.0
    %300 = vmatprep.subr.mxu0 0.0
    %301 = vmatpush2.msra.mxu0 0.0
    %302 = vmatprep.subr.mxu0 0.0
    %303 = vmatpush2.msra.mxu0 0.0
    %304 = vmatprep.subr.mxu0 0.0
    %305 = vmatpush2.msra.mxu0 0.0
    %306 = vmatprep.subr.mxu0 0.0
    %307 = vmatpush2.msra.mxu0 0.0
    %308 = vmatprep.subr.mxu0 0.0
    %309 = vmatpush2.msra.mxu0 0.0
    %310 = vmatprep.subr.mxu0 0.0
    %311 = vmatpush2.msra.mxu0 0.0
    %312 = vmatprep.subr.mxu0 0.0
    %313 = vmatpush2.msra.mxu0 0.0
    %314 = vmatprep.subr.mxu0 0.0
    %315 = vmatpush2.msra.mxu0 0.0
    %316 = vmatprep.subr.mxu0 0.0
    %317 = vmatpush2.msra.mxu0 0.0
    %318 = vmatprep.subr.mxu0 0.0
    %319 = vmatpush2.msra.mxu0 0.0
    %320 = vmatprep.subr.mxu0 0.0
    %321 = vmatpush2.msra.mxu0 0.0
    %322 = vmatprep.subr.mxu0 0.0
    %323 = vmatpush2.msra.mxu0 0.0
    %324 = vmatprep.subr.mxu0 0.0
    %325 = vmatpush2.msra.mxu0 0.0
    %326 = vmatprep.subr.mxu0 0.0
    %327 = vmatpush2.msra.mxu0 0.0
    %328 = vmatprep.mubr.f32.mxu0 0.0
    %329 = vmatmul.mubr.f32.gmra.mxu0 %v128
    %v330 = vpop.f32.mrf.mxu0
    %v331 = vadd.f32 %v117, %v330
    %v332 = vpop.f32.mrf.mxu0
    %v333 = vadd.f32 %v121, %v332
    %334 = vmatprep.mubr.f32.mxu0 0.0
    %335 = vmatmul.mubr.f32.gmra.mxu0 %v131
    %v336 = vpop.f32.mrf.mxu0
    %v337 = vadd.f32 %v117, %v336
    %v338 = vpop.f32.mrf.mxu0
    %v339 = vadd.f32 %v121, %v338
    %340 = vmatprep.mubr.f32.mxu0 0.0
    %341 = vmatmul.mubr.f32.gmra.mxu0 %v134
    %v342 = vpop.f32.mrf.mxu0
    %v343 = vadd.f32 %v117, %v342
    %v344 = vpop.f32.mrf.mxu0
    %v345 = vadd.f32 %v121, %v344
    %346 = vmatprep.mubr.f32.mxu0 0.0
    %347 = vmatmul.mubr.f32.gmra.mxu0 %v137
    %v348 = vpop.f32.mrf.mxu0
    %v349 = vadd.f32 %v117, %v348
    %v350 = vpop.f32.mrf.mxu0
    %v351 = vadd.f32 %v121, %v350
    %352 = vmatprep.mubr.f32.mxu0 0.0
    %353 = vmatmul.mubr.f32.gmra.mxu0 %v140
    %v354 = vpop.f32.mrf.mxu0
    %v355 = vadd.f32 %v117, %v354
    %v356 = vpop.f32.mrf.mxu0
    %v357 = vadd.f32 %v121, %v356
    %358 = vmatprep.mubr.f32.mxu0 0.0
    %359 = vmatmul.mubr.f32.gmra.mxu0 %v143
    %v360 = vpop.f32.mrf.mxu0
    %v361 = vadd.f32 %v117, %v360
    %v362 = vpop.f32.mrf.mxu0
    %v363 = vadd.f32 %v121, %v362
    %364 = vmatprep.mubr.f32.mxu0 0.0
    %365 = vmatmul.mubr.f32.gmra.mxu0 %v146
    %v366 = vpop.f32.mrf.mxu0
    %v367 = vadd.f32 %v117, %v366
    %v368 = vpop.f32.mrf.mxu0
    %v369 = vadd.f32 %v121, %v368
    %370 = vmatprep.mubr.f32.mxu0 0.0
    %371 = vmatmul.mubr.f32.gmra.mxu0 %v149
    %v372 = vpop.f32.mrf.mxu0
    %v373 = vadd.f32 %v117, %v372
    %v374 = vpop.f32.mrf.mxu0
    %v375 = vadd.f32 %v121, %v374
    %376 = vdwg.mxu0
    %377 = vst [vmem:[#allocation2] sm:$0xff] %v218
    %378 = vst [vmem:[#allocation2 + $0x8] sm:$0xff] %v220
    %379 = vst [vmem:[#allocation2 + $0x10] sm:$0xff] %v331
    %380 = vst [vmem:[#allocation2 + $0x18] sm:$0xff] %v333
    %381 = vst [vmem:[#allocation2 + $0x20] sm:$0xff] %v224
    %382 = vst [vmem:[#allocation2 + $0x28] sm:$0xff] %v226
    %383 = vst [vmem:[#allocation2 + $0x30] sm:$0xff] %v337
    %384 = vst [vmem:[#allocation2 + $0x38] sm:$0xff] %v339
    %385 = vst [vmem:[#allocation2 + $0x40] sm:$0xff] %v230
    %386 = vst [vmem:[#allocation2 + $0x48] sm:$0xff] %v232
    %387 = vst [vmem:[#allocation2 + $0x50] sm:$0xff] %v343
    %388 = vst [vmem:[#allocation2 + $0x58] sm:$0xff] %v345
    %389 = vst [vmem:[#allocation2 + $0x60] sm:$0xff] %v236
    %390 = vst [vmem:[#allocation2 + $0x68] sm:$0xff] %v238
    %391 = vst [vmem:[#allocation2 + $0x70] sm:$0xff] %v349
    %392 = vst [vmem:[#allocation2 + $0x78] sm:$0xff] %v351
    %393 = vst [vmem:[#allocation2 + $0x80] sm:$0xff] %v242
    %394 = vst [vmem:[#allocation2 + $0x88] sm:$0xff] %v244
    %395 = vst [vmem:[#allocation2 + $0x90] sm:$0xff] %v355
    %396 = vst [vmem:[#allocation2 + $0x98] sm:$0xff] %v357
    %397 = vst [vmem:[#allocation2 + $0xa0] sm:$0xff] %v248
    %398 = vst [vmem:[#allocation2 + $0xa8] sm:$0xff] %v250
    %399 = vst [vmem:[#allocation2 + $0xb0] sm:$0xff] %v361
    %400 = vst [vmem:[#allocation2 + $0xb8] sm:$0xff] %v363
    %401 = vst [vmem:[#allocation2 + $0xc0] sm:$0xff] %v254
    %402 = vst [vmem:[#allocation2 + $0xc8] sm:$0xff] %v256
    %403 = vst [vmem:[#allocation2 + $0xd0] sm:$0xff] %v367
    %404 = vst [vmem:[#allocation2 + $0xd8] sm:$0xff] %v369
    %405 = vst [vmem:[#allocation2 + $0xe0] sm:$0xff] %v260
    %406 = vst [vmem:[#allocation2 + $0xe8] sm:$0xff] %v262
    %407 = vst [vmem:[#allocation2 + $0xf0] sm:$0xff] %v373
    %408 = vst [vmem:[#allocation2 + $0xf8] sm:$0xff] %v375
    %v409 = vld [vmem:[#allocation5] sm:$0xff]
    %v410 = vld [vmem:[#allocation5 + $0x8] sm:$0xff]
    %v411 = vld [vmem:[#allocation5 + $0x10] sm:$0xff]
    %v412 = vld [vmem:[#allocation5 + $0x18] sm:$0xff]
    %v413 = vld [vmem:[#allocation5 + $0x20] sm:$0xff]
    %v414 = vld [vmem:[#allocation5 + $0x28] sm:$0xff]
    %v415 = vld [vmem:[#allocation5 + $0x30] sm:$0xff]
    %v416 = vld [vmem:[#allocation5 + $0x38] sm:$0xff]
    %v417 = vld [vmem:[#allocation5 + $0x40] sm:$0xff]
    %v418 = vld [vmem:[#allocation5 + $0x48] sm:$0xff]
    %v419 = vld [vmem:[#allocation5 + $0x50] sm:$0xff]
    %v420 = vld [vmem:[#allocation5 + $0x58] sm:$0xff]
    %v421 = vld [vmem:[#allocation5 + $0x60] sm:$0xff]
    %v422 = vld [vmem:[#allocation5 + $0x68] sm:$0xff]
    %v423 = vld [vmem:[#allocation5 + $0x70] sm:$0xff]
    %v424 = vld [vmem:[#allocation5 + $0x78] sm:$0xff]
    %v425 = vld [vmem:[#allocation5 + $0x80] sm:$0xff]
    %v426 = vld [vmem:[#allocation5 + $0x88] sm:$0xff]
    %v427 = vld [vmem:[#allocation5 + $0x90] sm:$0xff]
    %v428 = vld [vmem:[#allocation5 + $0x98] sm:$0xff]
    %v429 = vld [vmem:[#allocation5 + $0xa0] sm:$0xff]
    %v430 = vld [vmem:[#allocation5 + $0xa8] sm:$0xff]
    %v431 = vld [vmem:[#allocation5 + $0xb0] sm:$0xff]
    %v432 = vld [vmem:[#allocation5 + $0xb8] sm:$0xff]
    %v433 = vld [vmem:[#allocation5 + $0xc0] sm:$0xff]
    %v434 = vld [vmem:[#allocation5 + $0xc8] sm:$0xff]
    %v435 = vld [vmem:[#allocation5 + $0xd0] sm:$0xff]
    %v436 = vld [vmem:[#allocation5 + $0xd8] sm:$0xff]
    %v437 = vld [vmem:[#allocation5 + $0xe0] sm:$0xff]
    %v438 = vld [vmem:[#allocation5 + $0xe8] sm:$0xff]
    %v439 = vld [vmem:[#allocation5 + $0xf0] sm:$0xff]
    %v440 = vld [vmem:[#allocation5 + $0xf8] sm:$0xff]
    %v441 = vld [vmem:[#allocation5 + $0x100] sm:$0xff]
    %v442 = vld [vmem:[#allocation5 + $0x108] sm:$0xff]
    %v443 = vld [vmem:[#allocation5 + $0x110] sm:$0xff]
    %v444 = vld [vmem:[#allocation5 + $0x118] sm:$0xff]
    %v445 = vld [vmem:[#allocation5 + $0x120] sm:$0xff]
    %v446 = vld [vmem:[#allocation5 + $0x128] sm:$0xff]
    %v447 = vld [vmem:[#allocation5 + $0x130] sm:$0xff]
    %v448 = vld [vmem:[#allocation5 + $0x138] sm:$0xff]
    %v449 = vld [vmem:[#allocation5 + $0x140] sm:$0xff]
    %v450 = vld [vmem:[#allocation5 + $0x148] sm:$0xff]
    %v451 = vld [vmem:[#allocation5 + $0x150] sm:$0xff]
    %v452 = vld [vmem:[#allocation5 + $0x158] sm:$0xff]
    %v453 = vld [vmem:[#allocation5 + $0x160] sm:$0xff]
    %v454 = vld [vmem:[#allocation5 + $0x168] sm:$0xff]
    %v455 = vld [vmem:[#allocation5 + $0x170] sm:$0xff]
    %v456 = vld [vmem:[#allocation5 + $0x178] sm:$0xff]
    %v457 = vld [vmem:[#allocation5 + $0x180] sm:$0xff]
    %v458 = vld [vmem:[#allocation5 + $0x188] sm:$0xff]
    %v459 = vld [vmem:[#allocation5 + $0x190] sm:$0xff]
    %v460 = vld [vmem:[#allocation5 + $0x198] sm:$0xff]
    %v461 = vld [vmem:[#allocation5 + $0x1a0] sm:$0xff]
    %v462 = vld [vmem:[#allocation5 + $0x1a8] sm:$0xff]
    %v463 = vld [vmem:[#allocation5 + $0x1b0] sm:$0xff]
    %v464 = vld [vmem:[#allocation5 + $0x1b8] sm:$0xff]
    %v465 = vld [vmem:[#allocation5 + $0x1c0] sm:$0xff]
    %v466 = vld [vmem:[#allocation5 + $0x1c8] sm:$0xff]
    %v467 = vld [vmem:[#allocation5 + $0x1d0] sm:$0xff]
    %v468 = vld [vmem:[#allocation5 + $0x1d8] sm:$0xff]
    %v469 = vld [vmem:[#allocation5 + $0x1e0] sm:$0xff]
    %v470 = vld [vmem:[#allocation5 + $0x1e8] sm:$0xff]
    %v471 = vld [vmem:[#allocation5 + $0x1f0] sm:$0xff]
    %v472 = vld [vmem:[#allocation5 + $0x1f8] sm:$0xff]
    %v473 = vld [vmem:[#allocation2] sm:$0xff]
    %v474 = vld [vmem:[#allocation2 + $0x8] sm:$0xff]
    %v475 = vld [vmem:[#allocation2 + $0x10] sm:$0xff]
    %v476 = vld [vmem:[#allocation2 + $0x18] sm:$0xff]
    %477 = vmatprep.subr.mxu0 %v470
    %478 = vmatpush1.msra.mxu0 %v469
    %479 = vmatprep.subr.mxu0 %v466
    %480 = vmatpush1.msra.mxu0 %v465
    %481 = vmatprep.subr.mxu0 %v462
    %482 = vmatpush1.msra.mxu0 %v461
    %483 = vmatprep.subr.mxu0 %v458
    %484 = vmatpush1.msra.mxu0 %v457
    %485 = vmatprep.subr.mxu0 %v454
    %486 = vmatpush1.msra.mxu0 %v453
    %487 = vmatprep.subr.mxu0 %v450
    %488 = vmatpush1.msra.mxu0 %v449
    %489 = vmatprep.subr.mxu0 %v446
    %490 = vmatpush1.msra.mxu0 %v445
    %491 = vmatprep.subr.mxu0 %v442
    %492 = vmatpush1.msra.mxu0 %v441
    %493 = vmatprep.subr.mxu0 %v438
    %494 = vmatpush1.msra.mxu0 %v437
    %495 = vmatprep.subr.mxu0 %v434
    %496 = vmatpush1.msra.mxu0 %v433
    %497 = vmatprep.subr.mxu0 %v430
    %498 = vmatpush1.msra.mxu0 %v429
    %499 = vmatprep.subr.mxu0 %v426
    %500 = vmatpush1.msra.mxu0 %v425
    %501 = vmatprep.subr.mxu0 %v422
    %502 = vmatpush1.msra.mxu0 %v421
    %503 = vmatprep.subr.mxu0 %v418
    %504 = vmatpush1.msra.mxu0 %v417
    %505 = vmatprep.subr.mxu0 %v414
    %506 = vmatpush1.msra.mxu0 %v413
    %507 = vmatprep.subr.mxu0 %v410
    %508 = vmatpush1.msra.mxu0 %v409
    %509 = vmatprep.subr.mxu0 0.0
    %510 = vmatpush2.msra.mxu0 0.0
    %511 = vmatprep.subr.mxu0 0.0
    %512 = vmatpush2.msra.mxu0 0.0
    %513 = vmatprep.subr.mxu0 0.0
    %514 = vmatpush2.msra.mxu0 0.0
    %515 = vmatprep.subr.mxu0 0.0
    %516 = vmatpush2.msra.mxu0 0.0
    %517 = vmatprep.subr.mxu0 0.0
    %518 = vmatpush2.msra.mxu0 0.0
    %519 = vmatprep.subr.mxu0 0.0
    %520 = vmatpush2.msra.mxu0 0.0
    %521 = vmatprep.subr.mxu0 0.0
    %522 = vmatpush2.msra.mxu0 0.0
    %523 = vmatprep.subr.mxu0 0.0
    %524 = vmatpush2.msra.mxu0 0.0
    %525 = vmatprep.subr.mxu0 0.0
    %526 = vmatpush2.msra.mxu0 0.0
    %527 = vmatprep.subr.mxu0 0.0
    %528 = vmatpush2.msra.mxu0 0.0
    %529 = vmatprep.subr.mxu0 0.0
    %530 = vmatpush2.msra.mxu0 0.0
    %531 = vmatprep.subr.mxu0 0.0
    %532 = vmatpush2.msra.mxu0 0.0
    %533 = vmatprep.subr.mxu0 0.0
    %534 = vmatpush2.msra.mxu0 0.0
    %535 = vmatprep.subr.mxu0 0.0
    %536 = vmatpush2.msra.mxu0 0.0
    %537 = vmatprep.subr.mxu0 0.0
    %538 = vmatpush2.msra.mxu0 0.0
    %539 = vmatprep.subr.mxu0 0.0
    %540 = vmatpush2.msra.mxu0 0.0
    %541 = vmatprep.mubr.f32.mxu0 0.0
    %542 = vmatmul.mubr.f32.gmra.mxu0 0.0
    %v543 = vpop.f32.mrf.mxu0
    %v544 = vadd.f32 0.0, %v543
    %v545 = vpop.f32.mrf.mxu0
    %v546 = vadd.f32 0.0, %v545
    %547 = vdwg.mxu0
    %548 = vmatprep.subr.mxu0 %v472
    %549 = vmatpush1.msra.mxu0 %v471
    %550 = vmatprep.subr.mxu0 %v468
    %551 = vmatpush1.msra.mxu0 %v467
    %552 = vmatprep.subr.mxu0 %v464
    %553 = vmatpush1.msra.mxu0 %v463
    %554 = vmatprep.subr.mxu0 %v460
    %555 = vmatpush1.msra.mxu0 %v459
    %556 = vmatprep.subr.mxu0 %v456
    %557 = vmatpush1.msra.mxu0 %v455
    %558 = vmatprep.subr.mxu0 %v452
    %559 = vmatpush1.msra.mxu0 %v451
    %560 = vmatprep.subr.mxu0 %v448
    %561 = vmatpush1.msra.mxu0 %v447
    %562 = vmatprep.subr.mxu0 %v444
    %563 = vmatpush1.msra.mxu0 %v443
    %564 = vmatprep.subr.mxu0 %v440
    %565 = vmatpush1.msra.mxu0 %v439
    %566 = vmatprep.subr.mxu0 %v436
    %567 = vmatpush1.msra.mxu0 %v435
    %568 = vmatprep.subr.mxu0 %v432
    %569 = vmatpush1.msra.mxu0 %v431
    %570 = vmatprep.subr.mxu0 %v428
    %571 = vmatpush1.msra.mxu0 %v427
    %572 = vmatprep.subr.mxu0 %v424
    %573 = vmatpush1.msra.mxu0 %v423
    %574 = vmatprep.subr.mxu0 %v420
    %575 = vmatpush1.msra.mxu0 %v419
    %576 = vmatprep.subr.mxu0 %v416
    %577 = vmatpush1.msra.mxu0 %v415
    %578 = vmatprep.subr.mxu0 %v412
    %579 = vmatpush1.msra.mxu0 %v411
    %580 = vmatprep.subr.mxu0 0.0
    %581 = vmatpush2.msra.mxu0 0.0
    %582 = vmatprep.subr.mxu0 0.0
    %583 = vmatpush2.msra.mxu0 0.0
    %584 = vmatprep.subr.mxu0 0.0
    %585 = vmatpush2.msra.mxu0 0.0
    %586 = vmatprep.subr.mxu0 0.0
    %587 = vmatpush2.msra.mxu0 0.0
    %588 = vmatprep.subr.mxu0 0.0
    %589 = vmatpush2.msra.mxu0 0.0
    %590 = vmatprep.subr.mxu0 0.0
    %591 = vmatpush2.msra.mxu0 0.0
    %592 = vmatprep.subr.mxu0 0.0
    %593 = vmatpush2.msra.mxu0 0.0
    %594 = vmatprep.subr.mxu0 0.0
    %595 = vmatpush2.msra.mxu0 0.0
    %596 = vmatprep.subr.mxu0 0.0
    %597 = vmatpush2.msra.mxu0 0.0
    %598 = vmatprep.subr.mxu0 0.0
    %599 = vmatpush2.msra.mxu0 0.0
    %600 = vmatprep.subr.mxu0 0.0
    %601 = vmatpush2.msra.mxu0 0.0
    %602 = vmatprep.subr.mxu0 0.0
    %603 = vmatpush2.msra.mxu0 0.0
    %604 = vmatprep.subr.mxu0 0.0
    %605 = vmatpush2.msra.mxu0 0.0
    %606 = vmatprep.subr.mxu0 0.0
    %607 = vmatpush2.msra.mxu0 0.0
    %608 = vmatprep.subr.mxu0 0.0
    %609 = vmatpush2.msra.mxu0 0.0
    %610 = vmatprep.subr.mxu0 0.0
    %611 = vmatpush2.msra.mxu0 0.0
    %612 = vmatprep.mubr.f32.mxu0 0.0
    %613 = vmatmul.mubr.f32.gmra.mxu0 0.0
    %v614 = vpop.f32.mrf.mxu0
    %v615 = vadd.f32 0.0, %v614
    %v616 = vpop.f32.mrf.mxu0
    %v617 = vadd.f32 0.0, %v616
    %618 = vdwg.mxu0
    %v619 = vadd.f32 %v473, %v544
    %v620 = vadd.f32 %v474, %v546
    %v621 = vadd.f32 %v475, %v615
    %v622 = vadd.f32 %v476, %v617
    %v623 = vxor.u32 %v619, 2147483648
    %v624 = vmul.f32 %v623, 1.442695
    %v625 = vpow.pop %v624
    %v626 = vadd.f32 %v625, 1.0
    %v627 = vrcp.pop %v626
    %v628 = vmul.f32 1.0, %v627
    %v629 = vxor.u32 %v620, 2147483648
    %v630 = vmul.f32 %v629, 1.442695
    %v631 = vpow.pop %v630
    %v632 = vadd.f32 %v631, 1.0
    %v633 = vrcp.pop %v632
    %v634 = vmul.f32 1.0, %v633
    %v635 = vtanh.pop %v621
    %v636 = vxor.u32 %v622, 2147483648
    %v637 = vmul.f32 %v636, 1.442695
    %v638 = vpow.pop %v637
    %v639 = vadd.f32 %v638, 1.0
    %v640 = vrcp.pop %v639
    %v641 = vmul.f32 1.0, %v640
    %v642 = vmul.f32 %v634, 0.0
    %v643 = vmul.f32 %v628, %v635
    %v644 = vadd.f32 %v642, %v643
    %v645 = vtanh.pop %v644
    %v646 = vmul.f32 %v641, %v645
    %647 = vst [vmem:[#allocation3] sm:$0xff] %v646
    %v648 = vld [vmem:[#allocation2 + $0x20] sm:$0xff]
    %v649 = vld [vmem:[#allocation2 + $0x28] sm:$0xff]
    %v650 = vld [vmem:[#allocation2 + $0x30] sm:$0xff]
    %v651 = vld [vmem:[#allocation2 + $0x38] sm:$0xff]
    %652 = vmatprep.subr.mxu0 %v470
    %653 = vmatpush1.msra.mxu0 %v469
    %654 = vmatprep.subr.mxu0 %v466
    %655 = vmatpush1.msra.mxu0 %v465
    %656 = vmatprep.subr.mxu0 %v462
    %657 = vmatpush1.msra.mxu0 %v461
    %658 = vmatprep.subr.mxu0 %v458
    %659 = vmatpush1.msra.mxu0 %v457
    %660 = vmatprep.subr.mxu0 %v454
    %661 = vmatpush1.msra.mxu0 %v453
    %662 = vmatprep.subr.mxu0 %v450
    %663 = vmatpush1.msra.mxu0 %v449
    %664 = vmatprep.subr.mxu0 %v446
    %665 = vmatpush1.msra.mxu0 %v445
    %666 = vmatprep.subr.mxu0 %v442
    %667 = vmatpush1.msra.mxu0 %v441
    %668 = vmatprep.subr.mxu0 %v438
    %669 = vmatpush1.msra.mxu0 %v437
    %670 = vmatprep.subr.mxu0 %v434
    %671 = vmatpush1.msra.mxu0 %v433
    %672 = vmatprep.subr.mxu0 %v430
    %673 = vmatpush1.msra.mxu0 %v429
    %674 = vmatprep.subr.mxu0 %v426
    %675 = vmatpush1.msra.mxu0 %v425
    %676 = vmatprep.subr.mxu0 %v422
    %677 = vmatpush1.msra.mxu0 %v421
    %678 = vmatprep.subr.mxu0 %v418
    %679 = vmatpush1.msra.mxu0 %v417
    %680 = vmatprep.subr.mxu0 %v414
    %681 = vmatpush1.msra.mxu0 %v413
    %682 = vmatprep.subr.mxu0 %v410
    %683 = vmatpush1.msra.mxu0 %v409
    %684 = vmatprep.subr.mxu0 0.0
    %685 = vmatpush2.msra.mxu0 0.0
    %686 = vmatprep.subr.mxu0 0.0
    %687 = vmatpush2.msra.mxu0 0.0
    %688 = vmatprep.subr.mxu0 0.0
    %689 = vmatpush2.msra.mxu0 0.0
    %690 = vmatprep.subr.mxu0 0.0
    %691 = vmatpush2.msra.mxu0 0.0
    %692 = vmatprep.subr.mxu0 0.0
    %693 = vmatpush2.msra.mxu0 0.0
    %694 = vmatprep.subr.mxu0 0.0
    %695 = vmatpush2.msra.mxu0 0.0
    %696 = vmatprep.subr.mxu0 0.0
    %697 = vmatpush2.msra.mxu0 0.0
    %698 = vmatprep.subr.mxu0 0.0
    %699 = vmatpush2.msra.mxu0 0.0
    %700 = vmatprep.subr.mxu0 0.0
    %701 = vmatpush2.msra.mxu0 0.0
    %702 = vmatprep.subr.mxu0 0.0
    %703 = vmatpush2.msra.mxu0 0.0
    %704 = vmatprep.subr.mxu0 0.0
    %705 = vmatpush2.msra.mxu0 0.0
    %706 = vmatprep.subr.mxu0 0.0
    %707 = vmatpush2.msra.mxu0 0.0
    %708 = vmatprep.subr.mxu0 0.0
    %709 = vmatpush2.msra.mxu0 0.0
    %710 = vmatprep.subr.mxu0 0.0
    %711 = vmatpush2.msra.mxu0 0.0
    %712 = vmatprep.subr.mxu0 0.0
    %713 = vmatpush2.msra.mxu0 0.0
    %714 = vmatprep.subr.mxu0 0.0
    %715 = vmatpush2.msra.mxu0 0.0
    %716 = vmatprep.mubr.f32.mxu0 0.0
    %717 = vmatmul.mubr.f32.gmra.mxu0 %v646
    %v718 = vpop.f32.mrf.mxu0
    %v719 = vadd.f32 0.0, %v718
    %v720 = vpop.f32.mrf.mxu0
    %v721 = vadd.f32 0.0, %v720
    %722 = vdwg.mxu0
    %723 = vmatprep.subr.mxu0 %v472
    %724 = vmatpush1.msra.mxu0 %v471
    %725 = vmatprep.subr.mxu0 %v468
    %726 = vmatpush1.msra.mxu0 %v467
    %727 = vmatprep.subr.mxu0 %v464
    %728 = vmatpush1.msra.mxu0 %v463
    %729 = vmatprep.subr.mxu0 %v460
    %730 = vmatpush1.msra.mxu0 %v459
    %731 = vmatprep.subr.mxu0 %v456
    %732 = vmatpush1.msra.mxu0 %v455
    %733 = vmatprep.subr.mxu0 %v452
    %734 = vmatpush1.msra.mxu0 %v451
    %735 = vmatprep.subr.mxu0 %v448
    %736 = vmatpush1.msra.mxu0 %v447
    %737 = vmatprep.subr.mxu0 %v444
    %738 = vmatpush1.msra.mxu0 %v443
    %739 = vmatprep.subr.mxu0 %v440
    %740 = vmatpush1.msra.mxu0 %v439
    %741 = vmatprep.subr.mxu0 %v436
    %742 = vmatpush1.msra.mxu0 %v435
    %743 = vmatprep.subr.mxu0 %v432
    %744 = vmatpush1.msra.mxu0 %v431
    %745 = vmatprep.subr.mxu0 %v428
    %746 = vmatpush1.msra.mxu0 %v427
    %747 = vmatprep.subr.mxu0 %v424
    %748 = vmatpush1.msra.mxu0 %v423
    %749 = vmatprep.subr.mxu0 %v420
    %750 = vmatpush1.msra.mxu0 %v419
    %751 = vmatprep.subr.mxu0 %v416
    %752 = vmatpush1.msra.mxu0 %v415
    %753 = vmatprep.subr.mxu0 %v412
    %754 = vmatpush1.msra.mxu0 %v411
    %755 = vmatprep.subr.mxu0 0.0
    %756 = vmatpush2.msra.mxu0 0.0
    %757 = vmatprep.subr.mxu0 0.0
    %758 = vmatpush2.msra.mxu0 0.0
    %759 = vmatprep.subr.mxu0 0.0
    %760 = vmatpush2.msra.mxu0 0.0
    %761 = vmatprep.subr.mxu0 0.0
    %762 = vmatpush2.msra.mxu0 0.0
    %763 = vmatprep.subr.mxu0 0.0
    %764 = vmatpush2.msra.mxu0 0.0
    %765 = vmatprep.subr.mxu0 0.0
    %766 = vmatpush2.msra.mxu0 0.0
    %767 = vmatprep.subr.mxu0 0.0
    %768 = vmatpush2.msra.mxu0 0.0
    %769 = vmatprep.subr.mxu0 0.0
    %770 = vmatpush2.msra.mxu0 0.0
    %771 = vmatprep.subr.mxu0 0.0
    %772 = vmatpush2.msra.mxu0 0.0
    %773 = vmatprep.subr.mxu0 0.0
    %774 = vmatpush2.msra.mxu0 0.0
    %775 = vmatprep.subr.mxu0 0.0
    %776 = vmatpush2.msra.mxu0 0.0
    %777 = vmatprep.subr.mxu0 0.0
    %778 = vmatpush2.msra.mxu0 0.0
    %779 = vmatprep.subr.mxu0 0.0
    %780 = vmatpush2.msra.mxu0 0.0
    %781 = vmatprep.subr.mxu0 0.0
    %782 = vmatpush2.msra.mxu0 0.0
    %783 = vmatprep.subr.mxu0 0.0
    %784 = vmatpush2.msra.mxu0 0.0
    %785 = vmatprep.subr.mxu0 0.0
    %786 = vmatpush2.msra.mxu0 0.0
    %787 = vmatprep.mubr.f32.mxu0 0.0
    %788 = vmatmul.mubr.f32.gmra.mxu0 %v646
    %v789 = vpop.f32.mrf.mxu0
    %v790 = vadd.f32 0.0, %v789
    %v791 = vpop.f32.mrf.mxu0
    %v792 = vadd.f32 0.0, %v791
    %793 = vdwg.mxu0
    %v794 = vadd.f32 %v648, %v719
    %v795 = vadd.f32 %v649, %v721
    %v796 = vadd.f32 %v650, %v790
    %v797 = vadd.f32 %v651, %v792
    %v798 = vxor.u32 %v794, 2147483648
    %v799 = vmul.f32 %v798, 1.442695
    %v800 = vpow.pop %v799
    %v801 = vadd.f32 %v800, 1.0
    %v802 = vrcp.pop %v801
    %v803 = vmul.f32 1.0, %v802
    %v804 = vxor.u32 %v795, 2147483648
    %v805 = vmul.f32 %v804, 1.442695
    %v806 = vpow.pop %v805
    %v807 = vadd.f32 %v806, 1.0
    %v808 = vrcp.pop %v807
    %v809 = vmul.f32 1.0, %v808
    %v810 = vtanh.pop %v796
    %v811 = vxor.u32 %v797, 2147483648
    %v812 = vmul.f32 %v811, 1.442695
    %v813 = vpow.pop %v812
    %v814 = vadd.f32 %v813, 1.0
    %v815 = vrcp.pop %v814
    %v816 = vmul.f32 1.0, %v815
    %v817 = vmul.f32 %v809, %v644
    %v818 = vmul.f32 %v803, %v810
    %v819 = vadd.f32 %v817, %v818
    %v820 = vtanh.pop %v819
    %v821 = vmul.f32 %v816, %v820
    %822 = vst [vmem:[#allocation3 + $0x8] sm:$0xff] %v821
    %v823 = vld [vmem:[#allocation2 + $0x40] sm:$0xff]
    %v824 = vld [vmem:[#allocation2 + $0x48] sm:$0xff]
    %v825 = vld [vmem:[#allocation2 + $0x50] sm:$0xff]
    %v826 = vld [vmem:[#allocation2 + $0x58] sm:$0xff]
    %827 = vmatprep.subr.mxu0 %v470
    %828 = vmatpush1.msra.mxu0 %v469
    %829 = vmatprep.subr.mxu0 %v466
    %830 = vmatpush1.msra.mxu0 %v465
    %831 = vmatprep.subr.mxu0 %v462
    %832 = vmatpush1.msra.mxu0 %v461
    %833 = vmatprep.subr.mxu0 %v458
    %834 = vmatpush1.msra.mxu0 %v457
    %835 = vmatprep.subr.mxu0 %v454
    %836 = vmatpush1.msra.mxu0 %v453
    %837 = vmatprep.subr.mxu0 %v450
    %838 = vmatpush1.msra.mxu0 %v449
    %839 = vmatprep.subr.mxu0 %v446
    %840 = vmatpush1.msra.mxu0 %v445
    %841 = vmatprep.subr.mxu0 %v442
    %842 = vmatpush1.msra.mxu0 %v441
    %843 = vmatprep.subr.mxu0 %v438
    %844 = vmatpush1.msra.mxu0 %v437
    %845 = vmatprep.subr.mxu0 %v434
    %846 = vmatpush1.msra.mxu0 %v433
    %847 = vmatprep.subr.mxu0 %v430
    %848 = vmatpush1.msra.mxu0 %v429
    %849 = vmatprep.subr.mxu0 %v426
    %850 = vmatpush1.msra.mxu0 %v425
    %851 = vmatprep.subr.mxu0 %v422
    %852 = vmatpush1.msra.mxu0 %v421
    %853 = vmatprep.subr.mxu0 %v418
    %854 = vmatpush1.msra.mxu0 %v417
    %855 = vmatprep.subr.mxu0 %v414
    %856 = vmatpush1.msra.mxu0 %v413
    %857 = vmatprep.subr.mxu0 %v410
    %858 = vmatpush1.msra.mxu0 %v409
    %859 = vmatprep.subr.mxu0 0.0
    %860 = vmatpush2.msra.mxu0 0.0
    %861 = vmatprep.subr.mxu0 0.0
    %862 = vmatpush2.msra.mxu0 0.0
    %863 = vmatprep.subr.mxu0 0.0
    %864 = vmatpush2.msra.mxu0 0.0
    %865 = vmatprep.subr.mxu0 0.0
    %866 = vmatpush2.msra.mxu0 0.0
    %867 = vmatprep.subr.mxu0 0.0
    %868 = vmatpush2.msra.mxu0 0.0
    %869 = vmatprep.subr.mxu0 0.0
    %870 = vmatpush2.msra.mxu0 0.0
    %871 = vmatprep.subr.mxu0 0.0
    %872 = vmatpush2.msra.mxu0 0.0
    %873 = vmatprep.subr.mxu0 0.0
    %874 = vmatpush2.msra.mxu0 0.0
    %875 = vmatprep.subr.mxu0 0.0
    %876 = vmatpush2.msra.mxu0 0.0
    %877 = vmatprep.subr.mxu0 0.0
    %878 = vmatpush2.msra.mxu0 0.0
    %879 = vmatprep.subr.mxu0 0.0
    %880 = vmatpush2.msra.mxu0 0.0
    %881 = vmatprep.subr.mxu0 0.0
    %882 = vmatpush2.msra.mxu0 0.0
    %883 = vmatprep.subr.mxu0 0.0
    %884 = vmatpush2.msra.mxu0 0.0
    %885 = vmatprep.subr.mxu0 0.0
    %886 = vmatpush2.msra.mxu0 0.0
    %887 = vmatprep.subr.mxu0 0.0
    %888 = vmatpush2.msra.mxu0 0.0
    %889 = vmatprep.subr.mxu0 0.0
    %890 = vmatpush2.msra.mxu0 0.0
    %891 = vmatprep.mubr.f32.mxu0 0.0
    %892 = vmatmul.mubr.f32.gmra.mxu0 %v821
    %v893 = vpop.f32.mrf.mxu0
    %v894 = vadd.f32 0.0, %v893
    %v895 = vpop.f32.mrf.mxu0
    %v896 = vadd.f32 0.0, %v895
    %897 = vdwg.mxu0
    %898 = vmatprep.subr.mxu0 %v472
    %899 = vmatpush1.msra.mxu0 %v471
    %900 = vmatprep.subr.mxu0 %v468
    %901 = vmatpush1.msra.mxu0 %v467
    %902 = vmatprep.subr.mxu0 %v464
    %903 = vmatpush1.msra.mxu0 %v463
    %904 = vmatprep.subr.mxu0 %v460
    %905 = vmatpush1.msra.mxu0 %v459
    %906 = vmatprep.subr.mxu0 %v456
    %907 = vmatpush1.msra.mxu0 %v455
    %908 = vmatprep.subr.mxu0 %v452
    %909 = vmatpush1.msra.mxu0 %v451
    %910 = vmatprep.subr.mxu0 %v448
    %911 = vmatpush1.msra.mxu0 %v447
    %912 = vmatprep.subr.mxu0 %v444
    %913 = vmatpush1.msra.mxu0 %v443
    %914 = vmatprep.subr.mxu0 %v440
    %915 = vmatpush1.msra.mxu0 %v439
    %916 = vmatprep.subr.mxu0 %v436
    %917 = vmatpush1.msra.mxu0 %v435
    %918 = vmatprep.subr.mxu0 %v432
    %919 = vmatpush1.msra.mxu0 %v431
    %920 = vmatprep.subr.mxu0 %v428
    %921 = vmatpush1.msra.mxu0 %v427
    %922 = vmatprep.subr.mxu0 %v424
    %923 = vmatpush1.msra.mxu0 %v423
    %924 = vmatprep.subr.mxu0 %v420
    %925 = vmatpush1.msra.mxu0 %v419
    %926 = vmatprep.subr.mxu0 %v416
    %927 = vmatpush1.msra.mxu0 %v415
    %928 = vmatprep.subr.mxu0 %v412
    %929 = vmatpush1.msra.mxu0 %v411
    %930 = vmatprep.subr.mxu0 0.0
    %931 = vmatpush2.msra.mxu0 0.0
    %932 = vmatprep.subr.mxu0 0.0
    %933 = vmatpush2.msra.mxu0 0.0
    %934 = vmatprep.subr.mxu0 0.0
    %935 = vmatpush2.msra.mxu0 0.0
    %936 = vmatprep.subr.mxu0 0.0
    %937 = vmatpush2.msra.mxu0 0.0
    %938 = vmatprep.subr.mxu0 0.0
    %939 = vmatpush2.msra.mxu0 0.0
    %940 = vmatprep.subr.mxu0 0.0
    %941 = vmatpush2.msra.mxu0 0.0
    %942 = vmatprep.subr.mxu0 0.0
    %943 = vmatpush2.msra.mxu0 0.0
    %944 = vmatprep.subr.mxu0 0.0
    %945 = vmatpush2.msra.mxu0 0.0
    %946 = vmatprep.subr.mxu0 0.0
    %947 = vmatpush2.msra.mxu0 0.0
    %948 = vmatprep.subr.mxu0 0.0
    %949 = vmatpush2.msra.mxu0 0.0
    %950 = vmatprep.subr.mxu0 0.0
    %951 = vmatpush2.msra.mxu0 0.0
    %952 = vmatprep.subr.mxu0 0.0
    %953 = vmatpush2.msra.mxu0 0.0
    %954 = vmatprep.subr.mxu0 0.0
    %955 = vmatpush2.msra.mxu0 0.0
    %956 = vmatprep.subr.mxu0 0.0
    %957 = vmatpush2.msra.mxu0 0.0
    %958 = vmatprep.subr.mxu0 0.0
    %959 = vmatpush2.msra.mxu0 0.0
    %960 = vmatprep.subr.mxu0 0.0
    %961 = vmatpush2.msra.mxu0 0.0
    %962 = vmatprep.mubr.f32.mxu0 0.0
    %963 = vmatmul.mubr.f32.gmra.mxu0 %v821
    %v964 = vpop.f32.mrf.mxu0
    %v965 = vadd.f32 0.0, %v964
    %v966 = vpop.f32.mrf.mxu0
    %v967 = vadd.f32 0.0, %v966
    %968 = vdwg.mxu0
    %v969 = vadd.f32 %v823, %v894
    %v970 = vadd.f32 %v824, %v896
    %v971 = vadd.f32 %v825, %v965
    %v972 = vadd.f32 %v826, %v967
    %v973 = vxor.u32 %v969, 2147483648
    %v974 = vmul.f32 %v973, 1.442695
    %v975 = vpow.pop %v974
    %v976 = vadd.f32 %v975, 1.0
    %v977 = vrcp.pop %v976
    %v978 = vmul.f32 1.0, %v977
    %v979 = vxor.u32 %v970, 2147483648
    %v980 = vmul.f32 %v979, 1.442695
    %v981 = vpow.pop %v980
    %v982 = vadd.f32 %v981, 1.0
    %v983 = vrcp.pop %v982
    %v984 = vmul.f32 1.0, %v983
    %v985 = vtanh.pop %v971
    %v986 = vxor.u32 %v972, 2147483648
    %v987 = vmul.f32 %v986, 1.442695
    %v988 = vpow.pop %v987
    %v989 = vadd.f32 %v988, 1.0
    %v990 = vrcp.pop %v989
    %v991 = vmul.f32 1.0, %v990
    %v992 = vmul.f32 %v984, %v819
    %v993 = vmul.f32 %v978, %v985
    %v994 = vadd.f32 %v992, %v993
    %v995 = vtanh.pop %v994
    %v996 = vmul.f32 %v991, %v995
    %997 = vst [vmem:[#allocation3 + $0x10] sm:$0xff] %v996
    %v998 = vld [vmem:[#allocation2 + $0x60] sm:$0xff]
    %v999 = vld [vmem:[#allocation2 + $0x68] sm:$0xff]
    %v1000 = vld [vmem:[#allocation2 + $0x70] sm:$0xff]
    %v1001 = vld [vmem:[#allocation2 + $0x78] sm:$0xff]
    %1002 = vmatprep.subr.mxu0 %v470
    %1003 = vmatpush1.msra.mxu0 %v469
    %1004 = vmatprep.subr.mxu0 %v466
    %1005 = vmatpush1.msra.mxu0 %v465
    %1006 = vmatprep.subr.mxu0 %v462
    %1007 = vmatpush1.msra.mxu0 %v461
    %1008 = vmatprep.subr.mxu0 %v458
    %1009 = vmatpush1.msra.mxu0 %v457
    %1010 = vmatprep.subr.mxu0 %v454
    %1011 = vmatpush1.msra.mxu0 %v453
    %1012 = vmatprep.subr.mxu0 %v450
    %1013 = vmatpush1.msra.mxu0 %v449
    %1014 = vmatprep.subr.mxu0 %v446
    %1015 = vmatpush1.msra.mxu0 %v445
    %1016 = vmatprep.subr.mxu0 %v442
    %1017 = vmatpush1.msra.mxu0 %v441
    %1018 = vmatprep.subr.mxu0 %v438
    %1019 = vmatpush1.msra.mxu0 %v437
    %1020 = vmatprep.subr.mxu0 %v434
    %1021 = vmatpush1.msra.mxu0 %v433
    %1022 = vmatprep.subr.mxu0 %v430
    %1023 = vmatpush1.msra.mxu0 %v429
    %1024 = vmatprep.subr.mxu0 %v426
    %1025 = vmatpush1.msra.mxu0 %v425
    %1026 = vmatprep.subr.mxu0 %v422
    %1027 = vmatpush1.msra.mxu0 %v421
    %1028 = vmatprep.subr.mxu0 %v418
    %1029 = vmatpush1.msra.mxu0 %v417
    %1030 = vmatprep.subr.mxu0 %v414
    %1031 = vmatpush1.msra.mxu0 %v413
    %1032 = vmatprep.subr.mxu0 %v410
    %1033 = vmatpush1.msra.mxu0 %v409
    %1034 = vmatprep.subr.mxu0 0.0
    %1035 = vmatpush2.msra.mxu0 0.0
    %1036 = vmatprep.subr.mxu0 0.0
    %1037 = vmatpush2.msra.mxu0 0.0
    %1038 = vmatprep.subr.mxu0 0.0
    %1039 = vmatpush2.msra.mxu0 0.0
    %1040 = vmatprep.subr.mxu0 0.0
    %1041 = vmatpush2.msra.mxu0 0.0
    %1042 = vmatprep.subr.mxu0 0.0
    %1043 = vmatpush2.msra.mxu0 0.0
    %1044 = vmatprep.subr.mxu0 0.0
    %1045 = vmatpush2.msra.mxu0 0.0
    %1046 = vmatprep.subr.mxu0 0.0
    %1047 = vmatpush2.msra.mxu0 0.0
    %1048 = vmatprep.subr.mxu0 0.0
    %1049 = vmatpush2.msra.mxu0 0.0
    %1050 = vmatprep.subr.mxu0 0.0
    %1051 = vmatpush2.msra.mxu0 0.0
    %1052 = vmatprep.subr.mxu0 0.0
    %1053 = vmatpush2.msra.mxu0 0.0
    %1054 = vmatprep.subr.mxu0 0.0
    %1055 = vmatpush2.msra.mxu0 0.0
    %1056 = vmatprep.subr.mxu0 0.0
    %1057 = vmatpush2.msra.mxu0 0.0
    %1058 = vmatprep.subr.mxu0 0.0
    %1059 = vmatpush2.msra.mxu0 0.0
    %1060 = vmatprep.subr.mxu0 0.0
    %1061 = vmatpush2.msra.mxu0 0.0
    %1062 = vmatprep.subr.mxu0 0.0
    %1063 = vmatpush2.msra.mxu0 0.0
    %1064 = vmatprep.subr.mxu0 0.0
    %1065 = vmatpush2.msra.mxu0 0.0
    %1066 = vmatprep.mubr.f32.mxu0 0.0
    %1067 = vmatmul.mubr.f32.gmra.mxu0 %v996
    %v1068 = vpop.f32.mrf.mxu0
    %v1069 = vadd.f32 0.0, %v1068
    %v1070 = vpop.f32.mrf.mxu0
    %v1071 = vadd.f32 0.0, %v1070
    %1072 = vdwg.mxu0
    %1073 = vmatprep.subr.mxu0 %v472
    %1074 = vmatpush1.msra.mxu0 %v471
    %1075 = vmatprep.subr.mxu0 %v468
    %1076 = vmatpush1.msra.mxu0 %v467
    %1077 = vmatprep.subr.mxu0 %v464
    %1078 = vmatpush1.msra.mxu0 %v463
    %1079 = vmatprep.subr.mxu0 %v460
    %1080 = vmatpush1.msra.mxu0 %v459
    %1081 = vmatprep.subr.mxu0 %v456
    %1082 = vmatpush1.msra.mxu0 %v455
    %1083 = vmatprep.subr.mxu0 %v452
    %1084 = vmatpush1.msra.mxu0 %v451
    %1085 = vmatprep.subr.mxu0 %v448
    %1086 = vmatpush1.msra.mxu0 %v447
    %1087 = vmatprep.subr.mxu0 %v444
    %1088 = vmatpush1.msra.mxu0 %v443
    %1089 = vmatprep.subr.mxu0 %v440
    %1090 = vmatpush1.msra.mxu0 %v439
    %1091 = vmatprep.subr.mxu0 %v436
    %1092 = vmatpush1.msra.mxu0 %v435
    %1093 = vmatprep.subr.mxu0 %v432
    %1094 = vmatpush1.msra.mxu0 %v431
    %1095 = vmatprep.subr.mxu0 %v428
    %1096 = vmatpush1.msra.mxu0 %v427
    %1097 = vmatprep.subr.mxu0 %v424
    %1098 = vmatpush1.msra.mxu0 %v423
    %1099 = vmatprep.subr.mxu0 %v420
    %1100 = vmatpush1.msra.mxu0 %v419
    %1101 = vmatprep.subr.mxu0 %v416
    %1102 = vmatpush1.msra.mxu0 %v415
    %1103 = vmatprep.subr.mxu0 %v412
    %1104 = vmatpush1.msra.mxu0 %v411
    %1105 = vmatprep.subr.mxu0 0.0
    %1106 = vmatpush2.msra.mxu0 0.0
    %1107 = vmatprep.subr.mxu0 0.0
    %1108 = vmatpush2.msra.mxu0 0.0
    %1109 = vmatprep.subr.mxu0 0.0
    %1110 = vmatpush2.msra.mxu0 0.0
    %1111 = vmatprep.subr.mxu0 0.0
    %1112 = vmatpush2.msra.mxu0 0.0
    %1113 = vmatprep.subr.mxu0 0.0
    %1114 = vmatpush2.msra.mxu0 0.0
    %1115 = vmatprep.subr.mxu0 0.0
    %1116 = vmatpush2.msra.mxu0 0.0
    %1117 = vmatprep.subr.mxu0 0.0
    %1118 = vmatpush2.msra.mxu0 0.0
    %1119 = vmatprep.subr.mxu0 0.0
    %1120 = vmatpush2.msra.mxu0 0.0
    %1121 = vmatprep.subr.mxu0 0.0
    %1122 = vmatpush2.msra.mxu0 0.0
    %1123 = vmatprep.subr.mxu0 0.0
    %1124 = vmatpush2.msra.mxu0 0.0
    %1125 = vmatprep.subr.mxu0 0.0
    %1126 = vmatpush2.msra.mxu0 0.0
    %1127 = vmatprep.subr.mxu0 0.0
    %1128 = vmatpush2.msra.mxu0 0.0
    %1129 = vmatprep.subr.mxu0 0.0
    %1130 = vmatpush2.msra.mxu0 0.0
    %1131 = vmatprep.subr.mxu0 0.0
    %1132 = vmatpush2.msra.mxu0 0.0
    %1133 = vmatprep.subr.mxu0 0.0
    %1134 = vmatpush2.msra.mxu0 0.0
    %1135 = vmatprep.subr.mxu0 0.0
    %1136 = vmatpush2.msra.mxu0 0.0
    %1137 = vmatprep.mubr.f32.mxu0 0.0
    %1138 = vmatmul.mubr.f32.gmra.mxu0 %v996
    %v1139 = vpop.f32.mrf.mxu0
    %v1140 = vadd.f32 0.0, %v1139
    %v1141 = vpop.f32.mrf.mxu0
    %v1142 = vadd.f32 0.0, %v1141
    %1143 = vdwg.mxu0
    %v1144 = vadd.f32 %v998, %v1069
    %v1145 = vadd.f32 %v999, %v1071
    %v1146 = vadd.f32 %v1000, %v1140
    %v1147 = vadd.f32 %v1001, %v1142
    %v1148 = vxor.u32 %v1144, 2147483648
    %v1149 = vmul.f32 %v1148, 1.442695
    %v1150 = vpow.pop %v1149
    %v1151 = vadd.f32 %v1150, 1.0
    %v1152 = vrcp.pop %v1151
    %v1153 = vmul.f32 1.0, %v1152
    %v1154 = vxor.u32 %v1145, 2147483648
    %v1155 = vmul.f32 %v1154, 1.442695
    %v1156 = vpow.pop %v1155
    %v1157 = vadd.f32 %v1156, 1.0
    %v1158 = vrcp.pop %v1157
    %v1159 = vmul.f32 1.0, %v1158
    %v1160 = vtanh.pop %v1146
    %v1161 = vxor.u32 %v1147, 2147483648
    %v1162 = vmul.f32 %v1161, 1.442695
    %v1163 = vpow.pop %v1162
    %v1164 = vadd.f32 %v1163, 1.0
    %v1165 = vrcp.pop %v1164
    %v1166 = vmul.f32 1.0, %v1165
    %v1167 = vmul.f32 %v1159, %v994
    %v1168 = vmul.f32 %v1153, %v1160
    %v1169 = vadd.f32 %v1167, %v1168
    %v1170 = vtanh.pop %v1169
    %v1171 = vmul.f32 %v1166, %v1170
    %1172 = vst [vmem:[#allocation3 + $0x18] sm:$0xff] %v1171
    %v1173 = vld [vmem:[#allocation2 + $0x80] sm:$0xff]
    %v1174 = vld [vmem:[#allocation2 + $0x88] sm:$0xff]
    %v1175 = vld [vmem:[#allocation2 + $0x90] sm:$0xff]
    %v1176 = vld [vmem:[#allocation2 + $0x98] sm:$0xff]
    %1177 = vmatprep.subr.mxu0 %v470
    %1178 = vmatpush1.msra.mxu0 %v469
    %1179 = vmatprep.subr.mxu0 %v466
    %1180 = vmatpush1.msra.mxu0 %v465
    %1181 = vmatprep.subr.mxu0 %v462
    %1182 = vmatpush1.msra.mxu0 %v461
    %1183 = vmatprep.subr.mxu0 %v458
    %1184 = vmatpush1.msra.mxu0 %v457
    %1185 = vmatprep.subr.mxu0 %v454
    %1186 = vmatpush1.msra.mxu0 %v453
    %1187 = vmatprep.subr.mxu0 %v450
    %1188 = vmatpush1.msra.mxu0 %v449
    %1189 = vmatprep.subr.mxu0 %v446
    %1190 = vmatpush1.msra.mxu0 %v445
    %1191 = vmatprep.subr.mxu0 %v442
    %1192 = vmatpush1.msra.mxu0 %v441
    %1193 = vmatprep.subr.mxu0 %v438
    %1194 = vmatpush1.msra.mxu0 %v437
    %1195 = vmatprep.subr.mxu0 %v434
    %1196 = vmatpush1.msra.mxu0 %v433
    %1197 = vmatprep.subr.mxu0 %v430
    %1198 = vmatpush1.msra.mxu0 %v429
    %1199 = vmatprep.subr.mxu0 %v426
    %1200 = vmatpush1.msra.mxu0 %v425
    %1201 = vmatprep.subr.mxu0 %v422
    %1202 = vmatpush1.msra.mxu0 %v421
    %1203 = vmatprep.subr.mxu0 %v418
    %1204 = vmatpush1.msra.mxu0 %v417
    %1205 = vmatprep.subr.mxu0 %v414
    %1206 = vmatpush1.msra.mxu0 %v413
    %1207 = vmatprep.subr.mxu0 %v410
    %1208 = vmatpush1.msra.mxu0 %v409
    %1209 = vmatprep.subr.mxu0 0.0
    %1210 = vmatpush2.msra.mxu0 0.0
    %1211 = vmatprep.subr.mxu0 0.0
    %1212 = vmatpush2.msra.mxu0 0.0
    %1213 = vmatprep.subr.mxu0 0.0
    %1214 = vmatpush2.msra.mxu0 0.0
    %1215 = vmatprep.subr.mxu0 0.0
    %1216 = vmatpush2.msra.mxu0 0.0
    %1217 = vmatprep.subr.mxu0 0.0
    %1218 = vmatpush2.msra.mxu0 0.0
    %1219 = vmatprep.subr.mxu0 0.0
    %1220 = vmatpush2.msra.mxu0 0.0
    %1221 = vmatprep.subr.mxu0 0.0
    %1222 = vmatpush2.msra.mxu0 0.0
    %1223 = vmatprep.subr.mxu0 0.0
    %1224 = vmatpush2.msra.mxu0 0.0
    %1225 = vmatprep.subr.mxu0 0.0
    %1226 = vmatpush2.msra.mxu0 0.0
    %1227 = vmatprep.subr.mxu0 0.0
    %1228 = vmatpush2.msra.mxu0 0.0
    %1229 = vmatprep.subr.mxu0 0.0
    %1230 = vmatpush2.msra.mxu0 0.0
    %1231 = vmatprep.subr.mxu0 0.0
    %1232 = vmatpush2.msra.mxu0 0.0
    %1233 = vmatprep.subr.mxu0 0.0
    %1234 = vmatpush2.msra.mxu0 0.0
    %1235 = vmatprep.subr.mxu0 0.0
    %1236 = vmatpush2.msra.mxu0 0.0
    %1237 = vmatprep.subr.mxu0 0.0
    %1238 = vmatpush2.msra.mxu0 0.0
    %1239 = vmatprep.subr.mxu0 0.0
    %1240 = vmatpush2.msra.mxu0 0.0
    %1241 = vmatprep.mubr.f32.mxu0 0.0
    %1242 = vmatmul.mubr.f32.gmra.mxu0 %v1171
    %v1243 = vpop.f32.mrf.mxu0
    %v1244 = vadd.f32 0.0, %v1243
    %v1245 = vpop.f32.mrf.mxu0
    %v1246 = vadd.f32 0.0, %v1245
    %1247 = vdwg.mxu0
    %1248 = vmatprep.subr.mxu0 %v472
    %1249 = vmatpush1.msra.mxu0 %v471
    %1250 = vmatprep.subr.mxu0 %v468
    %1251 = vmatpush1.msra.mxu0 %v467
    %1252 = vmatprep.subr.mxu0 %v464
    %1253 = vmatpush1.msra.mxu0 %v463
    %1254 = vmatprep.subr.mxu0 %v460
    %1255 = vmatpush1.msra.mxu0 %v459
    %1256 = vmatprep.subr.mxu0 %v456
    %1257 = vmatpush1.msra.mxu0 %v455
    %1258 = vmatprep.subr.mxu0 %v452
    %1259 = vmatpush1.msra.mxu0 %v451
    %1260 = vmatprep.subr.mxu0 %v448
    %1261 = vmatpush1.msra.mxu0 %v447
    %1262 = vmatprep.subr.mxu0 %v444
    %1263 = vmatpush1.msra.mxu0 %v443
    %1264 = vmatprep.subr.mxu0 %v440
    %1265 = vmatpush1.msra.mxu0 %v439
    %1266 = vmatprep.subr.mxu0 %v436
    %1267 = vmatpush1.msra.mxu0 %v435
    %1268 = vmatprep.subr.mxu0 %v432
    %1269 = vmatpush1.msra.mxu0 %v431
    %1270 = vmatprep.subr.mxu0 %v428
    %1271 = vmatpush1.msra.mxu0 %v427
    %1272 = vmatprep.subr.mxu0 %v424
    %1273 = vmatpush1.msra.mxu0 %v423
    %1274 = vmatprep.subr.mxu0 %v420
    %1275 = vmatpush1.msra.mxu0 %v419
    %1276 = vmatprep.subr.mxu0 %v416
    %1277 = vmatpush1.msra.mxu0 %v415
    %1278 = vmatprep.subr.mxu0 %v412
    %1279 = vmatpush1.msra.mxu0 %v411
    %1280 = vmatprep.subr.mxu0 0.0
    %1281 = vmatpush2.msra.mxu0 0.0
    %1282 = vmatprep.subr.mxu0 0.0
    %1283 = vmatpush2.msra.mxu0 0.0
    %1284 = vmatprep.subr.mxu0 0.0
    %1285 = vmatpush2.msra.mxu0 0.0
    %1286 = vmatprep.subr.mxu0 0.0
    %1287 = vmatpush2.msra.mxu0 0.0
    %1288 = vmatprep.subr.mxu0 0.0
    %1289 = vmatpush2.msra.mxu0 0.0
    %1290 = vmatprep.subr.mxu0 0.0
    %1291 = vmatpush2.msra.mxu0 0.0
    %1292 = vmatprep.subr.mxu0 0.0
    %1293 = vmatpush2.msra.mxu0 0.0
    %1294 = vmatprep.subr.mxu0 0.0
    %1295 = vmatpush2.msra.mxu0 0.0
    %1296 = vmatprep.subr.mxu0 0.0
    %1297 = vmatpush2.msra.mxu0 0.0
    %1298 = vmatprep.subr.mxu0 0.0
    %1299 = vmatpush2.msra.mxu0 0.0
    %1300 = vmatprep.subr.mxu0 0.0
    %1301 = vmatpush2.msra.mxu0 0.0
    %1302 = vmatprep.subr.mxu0 0.0
    %1303 = vmatpush2.msra.mxu0 0.0
    %1304 = vmatprep.subr.mxu0 0.0
    %1305 = vmatpush2.msra.mxu0 0.0
    %1306 = vmatprep.subr.mxu0 0.0
    %1307 = vmatpush2.msra.mxu0 0.0
    %1308 = vmatprep.subr.mxu0 0.0
    %1309 = vmatpush2.msra.mxu0 0.0
    %1310 = vmatprep.subr.mxu0 0.0
    %1311 = vmatpush2.msra.mxu0 0.0
    %1312 = vmatprep.mubr.f32.mxu0 0.0
    %1313 = vmatmul.mubr.f32.gmra.mxu0 %v1171
    %v1314 = vpop.f32.mrf.mxu0
    %v1315 = vadd.f32 0.0, %v1314
    %v1316 = vpop.f32.mrf.mxu0
    %v1317 = vadd.f32 0.0, %v1316
    %1318 = vdwg.mxu0
    %v1319 = vadd.f32 %v1173, %v1244
    %v1320 = vadd.f32 %v1174, %v1246
    %v1321 = vadd.f32 %v1175, %v1315
    %v1322 = vadd.f32 %v1176, %v1317
    %v1323 = vxor.u32 %v1319, 2147483648
    %v1324 = vmul.f32 %v1323, 1.442695
    %v1325 = vpow.pop %v1324
    %v1326 = vadd.f32 %v1325, 1.0
    %v1327 = vrcp.pop %v1326
    %v1328 = vmul.f32 1.0, %v1327
    %v1329 = vxor.u32 %v1320, 2147483648
    %v1330 = vmul.f32 %v1329, 1.442695
    %v1331 = vpow.pop %v1330
    %v1332 = vadd.f32 %v1331, 1.0
    %v1333 = vrcp.pop %v1332
    %v1334 = vmul.f32 1.0, %v1333
    %v1335 = vtanh.pop %v1321
    %v1336 = vxor.u32 %v1322, 2147483648
    %v1337 = vmul.f32 %v1336, 1.442695
    %v1338 = vpow.pop %v1337
    %v1339 = vadd.f32 %v1338, 1.0
    %v1340 = vrcp.pop %v1339
    %v1341 = vmul.f32 1.0, %v1340
    %v1342 = vmul.f32 %v1334, %v1169
    %v1343 = vmul.f32 %v1328, %v1335
    %v1344 = vadd.f32 %v1342, %v1343
    %v1345 = vtanh.pop %v1344
    %v1346 = vmul.f32 %v1341, %v1345
    %1347 = vst [vmem:[#allocation3 + $0x20] sm:$0xff] %v1346
    %v1348 = vld [vmem:[#allocation2 + $0xa0] sm:$0xff]
    %v1349 = vld [vmem:[#allocation2 + $0xa8] sm:$0xff]
    %v1350 = vld [vmem:[#allocation2 + $0xb0] sm:$0xff]
    %v1351 = vld [vmem:[#allocation2 + $0xb8] sm:$0xff]
    %1352 = vmatprep.subr.mxu0 %v470
    %1353 = vmatpush1.msra.mxu0 %v469
    %1354 = vmatprep.subr.mxu0 %v466
    %1355 = vmatpush1.msra.mxu0 %v465
    %1356 = vmatprep.subr.mxu0 %v462
    %1357 = vmatpush1.msra.mxu0 %v461
    %1358 = vmatprep.subr.mxu0 %v458
    %1359 = vmatpush1.msra.mxu0 %v457
    %1360 = vmatprep.subr.mxu0 %v454
    %1361 = vmatpush1.msra.mxu0 %v453
    %1362 = vmatprep.subr.mxu0 %v450
    %1363 = vmatpush1.msra.mxu0 %v449
    %1364 = vmatprep.subr.mxu0 %v446
    %1365 = vmatpush1.msra.mxu0 %v445
    %1366 = vmatprep.subr.mxu0 %v442
    %1367 = vmatpush1.msra.mxu0 %v441
    %1368 = vmatprep.subr.mxu0 %v438
    %1369 = vmatpush1.msra.mxu0 %v437
    %1370 = vmatprep.subr.mxu0 %v434
    %1371 = vmatpush1.msra.mxu0 %v433
    %1372 = vmatprep.subr.mxu0 %v430
    %1373 = vmatpush1.msra.mxu0 %v429
    %1374 = vmatprep.subr.mxu0 %v426
    %1375 = vmatpush1.msra.mxu0 %v425
    %1376 = vmatprep.subr.mxu0 %v422
    %1377 = vmatpush1.msra.mxu0 %v421
    %1378 = vmatprep.subr.mxu0 %v418
    %1379 = vmatpush1.msra.mxu0 %v417
    %1380 = vmatprep.subr.mxu0 %v414
    %1381 = vmatpush1.msra.mxu0 %v413
    %1382 = vmatprep.subr.mxu0 %v410
    %1383 = vmatpush1.msra.mxu0 %v409
    %1384 = vmatprep.subr.mxu0 0.0
    %1385 = vmatpush2.msra.mxu0 0.0
    %1386 = vmatprep.subr.mxu0 0.0
    %1387 = vmatpush2.msra.mxu0 0.0
    %1388 = vmatprep.subr.mxu0 0.0
    %1389 = vmatpush2.msra.mxu0 0.0
    %1390 = vmatprep.subr.mxu0 0.0
    %1391 = vmatpush2.msra.mxu0 0.0
    %1392 = vmatprep.subr.mxu0 0.0
    %1393 = vmatpush2.msra.mxu0 0.0
    %1394 = vmatprep.subr.mxu0 0.0
    %1395 = vmatpush2.msra.mxu0 0.0
    %1396 = vmatprep.subr.mxu0 0.0
    %1397 = vmatpush2.msra.mxu0 0.0
    %1398 = vmatprep.subr.mxu0 0.0
    %1399 = vmatpush2.msra.mxu0 0.0
    %1400 = vmatprep.subr.mxu0 0.0
    %1401 = vmatpush2.msra.mxu0 0.0
    %1402 = vmatprep.subr.mxu0 0.0
    %1403 = vmatpush2.msra.mxu0 0.0
    %1404 = vmatprep.subr.mxu0 0.0
    %1405 = vmatpush2.msra.mxu0 0.0
    %1406 = vmatprep.subr.mxu0 0.0
    %1407 = vmatpush2.msra.mxu0 0.0
    %1408 = vmatprep.subr.mxu0 0.0
    %1409 = vmatpush2.msra.mxu0 0.0
    %1410 = vmatprep.subr.mxu0 0.0
    %1411 = vmatpush2.msra.mxu0 0.0
    %1412 = vmatprep.subr.mxu0 0.0
    %1413 = vmatpush2.msra.mxu0 0.0
    %1414 = vmatprep.subr.mxu0 0.0
    %1415 = vmatpush2.msra.mxu0 0.0
    %1416 = vmatprep.mubr.f32.mxu0 0.0
    %1417 = vmatmul.mubr.f32.gmra.mxu0 %v1346
    %v1418 = vpop.f32.mrf.mxu0
    %v1419 = vadd.f32 0.0, %v1418
    %v1420 = vpop.f32.mrf.mxu0
    %v1421 = vadd.f32 0.0, %v1420
    %1422 = vdwg.mxu0
    %1423 = vmatprep.subr.mxu0 %v472
    %1424 = vmatpush1.msra.mxu0 %v471
    %1425 = vmatprep.subr.mxu0 %v468
    %1426 = vmatpush1.msra.mxu0 %v467
    %1427 = vmatprep.subr.mxu0 %v464
    %1428 = vmatpush1.msra.mxu0 %v463
    %1429 = vmatprep.subr.mxu0 %v460
    %1430 = vmatpush1.msra.mxu0 %v459
    %1431 = vmatprep.subr.mxu0 %v456
    %1432 = vmatpush1.msra.mxu0 %v455
    %1433 = vmatprep.subr.mxu0 %v452
    %1434 = vmatpush1.msra.mxu0 %v451
    %1435 = vmatprep.subr.mxu0 %v448
    %1436 = vmatpush1.msra.mxu0 %v447
    %1437 = vmatprep.subr.mxu0 %v444
    %1438 = vmatpush1.msra.mxu0 %v443
    %1439 = vmatprep.subr.mxu0 %v440
    %1440 = vmatpush1.msra.mxu0 %v439
    %1441 = vmatprep.subr.mxu0 %v436
    %1442 = vmatpush1.msra.mxu0 %v435
    %1443 = vmatprep.subr.mxu0 %v432
    %1444 = vmatpush1.msra.mxu0 %v431
    %1445 = vmatprep.subr.mxu0 %v428
    %1446 = vmatpush1.msra.mxu0 %v427
    %1447 = vmatprep.subr.mxu0 %v424
    %1448 = vmatpush1.msra.mxu0 %v423
    %1449 = vmatprep.subr.mxu0 %v420
    %1450 = vmatpush1.msra.mxu0 %v419
    %1451 = vmatprep.subr.mxu0 %v416
    %1452 = vmatpush1.msra.mxu0 %v415
    %1453 = vmatprep.subr.mxu0 %v412
    %1454 = vmatpush1.msra.mxu0 %v411
    %1455 = vmatprep.subr.mxu0 0.0
    %1456 = vmatpush2.msra.mxu0 0.0
    %1457 = vmatprep.subr.mxu0 0.0
    %1458 = vmatpush2.msra.mxu0 0.0
    %1459 = vmatprep.subr.mxu0 0.0
    %1460 = vmatpush2.msra.mxu0 0.0
    %1461 = vmatprep.subr.mxu0 0.0
    %1462 = vmatpush2.msra.mxu0 0.0
    %1463 = vmatprep.subr.mxu0 0.0
    %1464 = vmatpush2.msra.mxu0 0.0
    %1465 = vmatprep.subr.mxu0 0.0
    %1466 = vmatpush2.msra.mxu0 0.0
    %1467 = vmatprep.subr.mxu0 0.0
    %1468 = vmatpush2.msra.mxu0 0.0
    %1469 = vmatprep.subr.mxu0 0.0
    %1470 = vmatpush2.msra.mxu0 0.0
    %1471 = vmatprep.subr.mxu0 0.0
    %1472 = vmatpush2.msra.mxu0 0.0
    %1473 = vmatprep.subr.mxu0 0.0
    %1474 = vmatpush2.msra.mxu0 0.0
    %1475 = vmatprep.subr.mxu0 0.0
    %1476 = vmatpush2.msra.mxu0 0.0
    %1477 = vmatprep.subr.mxu0 0.0
    %1478 = vmatpush2.msra.mxu0 0.0
    %1479 = vmatprep.subr.mxu0 0.0
    %1480 = vmatpush2.msra.mxu0 0.0
    %1481 = vmatprep.subr.mxu0 0.0
    %1482 = vmatpush2.msra.mxu0 0.0
    %1483 = vmatprep.subr.mxu0 0.0
    %1484 = vmatpush2.msra.mxu0 0.0
    %1485 = vmatprep.subr.mxu0 0.0
    %1486 = vmatpush2.msra.mxu0 0.0
    %1487 = vmatprep.mubr.f32.mxu0 0.0
    %1488 = vmatmul.mubr.f32.gmra.mxu0 %v1346
    %v1489 = vpop.f32.mrf.mxu0
    %v1490 = vadd.f32 0.0, %v1489
    %v1491 = vpop.f32.mrf.mxu0
    %v1492 = vadd.f32 0.0, %v1491
    %1493 = vdwg.mxu0
    %v1494 = vadd.f32 %v1348, %v1419
    %v1495 = vadd.f32 %v1349, %v1421
    %v1496 = vadd.f32 %v1350, %v1490
    %v1497 = vadd.f32 %v1351, %v1492
    %v1498 = vxor.u32 %v1494, 2147483648
    %v1499 = vmul.f32 %v1498, 1.442695
    %v1500 = vpow.pop %v1499
    %v1501 = vadd.f32 %v1500, 1.0
    %v1502 = vrcp.pop %v1501
    %v1503 = vmul.f32 1.0, %v1502
    %v1504 = vxor.u32 %v1495, 2147483648
    %v1505 = vmul.f32 %v1504, 1.442695
    %v1506 = vpow.pop %v1505
    %v1507 = vadd.f32 %v1506, 1.0
    %v1508 = vrcp.pop %v1507
    %v1509 = vmul.f32 1.0, %v1508
    %v1510 = vtanh.pop %v1496
    %v1511 = vxor.u32 %v1497, 2147483648
    %v1512 = vmul.f32 %v1511, 1.442695
    %v1513 = vpow.pop %v1512
    %v1514 = vadd.f32 %v1513, 1.0
    %v1515 = vrcp.pop %v1514
    %v1516 = vmul.f32 1.0, %v1515
    %v1517 = vmul.f32 %v1509, %v1344
    %v1518 = vmul.f32 %v1503, %v1510
    %v1519 = vadd.f32 %v1517, %v1518
    %v1520 = vtanh.pop %v1519
    %v1521 = vmul.f32 %v1516, %v1520
    %1522 = vst [vmem:[#allocation3 + $0x28] sm:$0xff] %v1521
    %v1523 = vld [vmem:[#allocation2 + $0xc0] sm:$0xff]
    %v1524 = vld [vmem:[#allocation2 + $0xc8] sm:$0xff]
    %v1525 = vld [vmem:[#allocation2 + $0xd0] sm:$0xff]
    %v1526 = vld [vmem:[#allocation2 + $0xd8] sm:$0xff]
    %1527 = vmatprep.subr.mxu0 %v470
    %1528 = vmatpush1.msra.mxu0 %v469
    %1529 = vmatprep.subr.mxu0 %v466
    %1530 = vmatpush1.msra.mxu0 %v465
    %1531 = vmatprep.subr.mxu0 %v462
    %1532 = vmatpush1.msra.mxu0 %v461
    %1533 = vmatprep.subr.mxu0 %v458
    %1534 = vmatpush1.msra.mxu0 %v457
    %1535 = vmatprep.subr.mxu0 %v454
    %1536 = vmatpush1.msra.mxu0 %v453
    %1537 = vmatprep.subr.mxu0 %v450
    %1538 = vmatpush1.msra.mxu0 %v449
    %1539 = vmatprep.subr.mxu0 %v446
    %1540 = vmatpush1.msra.mxu0 %v445
    %1541 = vmatprep.subr.mxu0 %v442
    %1542 = vmatpush1.msra.mxu0 %v441
    %1543 = vmatprep.subr.mxu0 %v438
    %1544 = vmatpush1.msra.mxu0 %v437
    %1545 = vmatprep.subr.mxu0 %v434
    %1546 = vmatpush1.msra.mxu0 %v433
    %1547 = vmatprep.subr.mxu0 %v430
    %1548 = vmatpush1.msra.mxu0 %v429
    %1549 = vmatprep.subr.mxu0 %v426
    %1550 = vmatpush1.msra.mxu0 %v425
    %1551 = vmatprep.subr.mxu0 %v422
    %1552 = vmatpush1.msra.mxu0 %v421
    %1553 = vmatprep.subr.mxu0 %v418
    %1554 = vmatpush1.msra.mxu0 %v417
    %1555 = vmatprep.subr.mxu0 %v414
    %1556 = vmatpush1.msra.mxu0 %v413
    %1557 = vmatprep.subr.mxu0 %v410
    %1558 = vmatpush1.msra.mxu0 %v409
    %1559 = vmatprep.subr.mxu0 0.0
    %1560 = vmatpush2.msra.mxu0 0.0
    %1561 = vmatprep.subr.mxu0 0.0
    %1562 = vmatpush2.msra.mxu0 0.0
    %1563 = vmatprep.subr.mxu0 0.0
    %1564 = vmatpush2.msra.mxu0 0.0
    %1565 = vmatprep.subr.mxu0 0.0
    %1566 = vmatpush2.msra.mxu0 0.0
    %1567 = vmatprep.subr.mxu0 0.0
    %1568 = vmatpush2.msra.mxu0 0.0
    %1569 = vmatprep.subr.mxu0 0.0
    %1570 = vmatpush2.msra.mxu0 0.0
    %1571 = vmatprep.subr.mxu0 0.0
    %1572 = vmatpush2.msra.mxu0 0.0
    %1573 = vmatprep.subr.mxu0 0.0
    %1574 = vmatpush2.msra.mxu0 0.0
    %1575 = vmatprep.subr.mxu0 0.0
    %1576 = vmatpush2.msra.mxu0 0.0
    %1577 = vmatprep.subr.mxu0 0.0
    %1578 = vmatpush2.msra.mxu0 0.0
    %1579 = vmatprep.subr.mxu0 0.0
    %1580 = vmatpush2.msra.mxu0 0.0
    %1581 = vmatprep.subr.mxu0 0.0
    %1582 = vmatpush2.msra.mxu0 0.0
    %1583 = vmatprep.subr.mxu0 0.0
    %1584 = vmatpush2.msra.mxu0 0.0
    %1585 = vmatprep.subr.mxu0 0.0
    %1586 = vmatpush2.msra.mxu0 0.0
    %1587 = vmatprep.subr.mxu0 0.0
    %1588 = vmatpush2.msra.mxu0 0.0
    %1589 = vmatprep.subr.mxu0 0.0
    %1590 = vmatpush2.msra.mxu0 0.0
    %1591 = vmatprep.mubr.f32.mxu0 0.0
    %1592 = vmatmul.mubr.f32.gmra.mxu0 %v1521
    %v1593 = vpop.f32.mrf.mxu0
    %v1594 = vadd.f32 0.0, %v1593
    %v1595 = vpop.f32.mrf.mxu0
    %v1596 = vadd.f32 0.0, %v1595
    %1597 = vdwg.mxu0
    %1598 = vmatprep.subr.mxu0 %v472
    %1599 = vmatpush1.msra.mxu0 %v471
    %1600 = vmatprep.subr.mxu0 %v468
    %1601 = vmatpush1.msra.mxu0 %v467
    %1602 = vmatprep.subr.mxu0 %v464
    %1603 = vmatpush1.msra.mxu0 %v463
    %1604 = vmatprep.subr.mxu0 %v460
    %1605 = vmatpush1.msra.mxu0 %v459
    %1606 = vmatprep.subr.mxu0 %v456
    %1607 = vmatpush1.msra.mxu0 %v455
    %1608 = vmatprep.subr.mxu0 %v452
    %1609 = vmatpush1.msra.mxu0 %v451
    %1610 = vmatprep.subr.mxu0 %v448
    %1611 = vmatpush1.msra.mxu0 %v447
    %1612 = vmatprep.subr.mxu0 %v444
    %1613 = vmatpush1.msra.mxu0 %v443
    %1614 = vmatprep.subr.mxu0 %v440
    %1615 = vmatpush1.msra.mxu0 %v439
    %1616 = vmatprep.subr.mxu0 %v436
    %1617 = vmatpush1.msra.mxu0 %v435
    %1618 = vmatprep.subr.mxu0 %v432
    %1619 = vmatpush1.msra.mxu0 %v431
    %1620 = vmatprep.subr.mxu0 %v428
    %1621 = vmatpush1.msra.mxu0 %v427
    %1622 = vmatprep.subr.mxu0 %v424
    %1623 = vmatpush1.msra.mxu0 %v423
    %1624 = vmatprep.subr.mxu0 %v420
    %1625 = vmatpush1.msra.mxu0 %v419
    %1626 = vmatprep.subr.mxu0 %v416
    %1627 = vmatpush1.msra.mxu0 %v415
    %1628 = vmatprep.subr.mxu0 %v412
    %1629 = vmatpush1.msra.mxu0 %v411
    %1630 = vmatprep.subr.mxu0 0.0
    %1631 = vmatpush2.msra.mxu0 0.0
    %1632 = vmatprep.subr.mxu0 0.0
    %1633 = vmatpush2.msra.mxu0 0.0
    %1634 = vmatprep.subr.mxu0 0.0
    %1635 = vmatpush2.msra.mxu0 0.0
    %1636 = vmatprep.subr.mxu0 0.0
    %1637 = vmatpush2.msra.mxu0 0.0
    %1638 = vmatprep.subr.mxu0 0.0
    %1639 = vmatpush2.msra.mxu0 0.0
    %1640 = vmatprep.subr.mxu0 0.0
    %1641 = vmatpush2.msra.mxu0 0.0
    %1642 = vmatprep.subr.mxu0 0.0
    %1643 = vmatpush2.msra.mxu0 0.0
    %1644 = vmatprep.subr.mxu0 0.0
    %1645 = vmatpush2.msra.mxu0 0.0
    %1646 = vmatprep.subr.mxu0 0.0
    %1647 = vmatpush2.msra.mxu0 0.0
    %1648 = vmatprep.subr.mxu0 0.0
    %1649 = vmatpush2.msra.mxu0 0.0
    %1650 = vmatprep.subr.mxu0 0.0
    %1651 = vmatpush2.msra.mxu0 0.0
    %1652 = vmatprep.subr.mxu0 0.0
    %1653 = vmatpush2.msra.mxu0 0.0
    %1654 = vmatprep.subr.mxu0 0.0
    %1655 = vmatpush2.msra.mxu0 0.0
    %1656 = vmatprep.subr.mxu0 0.0
    %1657 = vmatpush2.msra.mxu0 0.0
    %1658 = vmatprep.subr.mxu0 0.0
    %1659 = vmatpush2.msra.mxu0 0.0
    %1660 = vmatprep.subr.mxu0 0.0
    %1661 = vmatpush2.msra.mxu0 0.0
    %1662 = vmatprep.mubr.f32.mxu0 0.0
    %1663 = vmatmul.mubr.f32.gmra.mxu0 %v1521
    %v1664 = vpop.f32.mrf.mxu0
    %v1665 = vadd.f32 0.0, %v1664
    %v1666 = vpop.f32.mrf.mxu0
    %v1667 = vadd.f32 0.0, %v1666
    %1668 = vdwg.mxu0
    %v1669 = vadd.f32 %v1523, %v1594
    %v1670 = vadd.f32 %v1524, %v1596
    %v1671 = vadd.f32 %v1525, %v1665
    %v1672 = vadd.f32 %v1526, %v1667
    %v1673 = vxor.u32 %v1669, 2147483648
    %v1674 = vmul.f32 %v1673, 1.442695
    %v1675 = vpow.pop %v1674
    %v1676 = vadd.f32 %v1675, 1.0
    %v1677 = vrcp.pop %v1676
    %v1678 = vmul.f32 1.0, %v1677
    %v1679 = vxor.u32 %v1670, 2147483648
    %v1680 = vmul.f32 %v1679, 1.442695
    %v1681 = vpow.pop %v1680
    %v1682 = vadd.f32 %v1681, 1.0
    %v1683 = vrcp.pop %v1682
    %v1684 = vmul.f32 1.0, %v1683
    %v1685 = vtanh.pop %v1671
    %v1686 = vxor.u32 %v1672, 2147483648
    %v1687 = vmul.f32 %v1686, 1.442695
    %v1688 = vpow.pop %v1687
    %v1689 = vadd.f32 %v1688, 1.0
    %v1690 = vrcp.pop %v1689
    %v1691 = vmul.f32 1.0, %v1690
    %v1692 = vmul.f32 %v1684, %v1519
    %v1693 = vmul.f32 %v1678, %v1685
    %v1694 = vadd.f32 %v1692, %v1693
    %v1695 = vtanh.pop %v1694
    %v1696 = vmul.f32 %v1691, %v1695
    %1697 = vst [vmem:[#allocation3 + $0x30] sm:$0xff] %v1696
    %v1698 = vld [vmem:[#allocation2 + $0xe0] sm:$0xff]
    %v1699 = vld [vmem:[#allocation2 + $0xe8] sm:$0xff]
    %v1700 = vld [vmem:[#allocation2 + $0xf0] sm:$0xff]
    %v1701 = vld [vmem:[#allocation2 + $0xf8] sm:$0xff]
    %1702 = vmatprep.subr.mxu0 %v470
    %1703 = vmatpush1.msra.mxu0 %v469
    %1704 = vmatprep.subr.mxu0 %v466
    %1705 = vmatpush1.msra.mxu0 %v465
    %1706 = vmatprep.subr.mxu0 %v462
    %1707 = vmatpush1.msra.mxu0 %v461
    %1708 = vmatprep.subr.mxu0 %v458
    %1709 = vmatpush1.msra.mxu0 %v457
    %1710 = vmatprep.subr.mxu0 %v454
    %1711 = vmatpush1.msra.mxu0 %v453
    %1712 = vmatprep.subr.mxu0 %v450
    %1713 = vmatpush1.msra.mxu0 %v449
    %1714 = vmatprep.subr.mxu0 %v446
    %1715 = vmatpush1.msra.mxu0 %v445
    %1716 = vmatprep.subr.mxu0 %v442
    %1717 = vmatpush1.msra.mxu0 %v441
    %1718 = vmatprep.subr.mxu0 %v438
    %1719 = vmatpush1.msra.mxu0 %v437
    %1720 = vmatprep.subr.mxu0 %v434
    %1721 = vmatpush1.msra.mxu0 %v433
    %1722 = vmatprep.subr.mxu0 %v430
    %1723 = vmatpush1.msra.mxu0 %v429
    %1724 = vmatprep.subr.mxu0 %v426
    %1725 = vmatpush1.msra.mxu0 %v425
    %1726 = vmatprep.subr.mxu0 %v422
    %1727 = vmatpush1.msra.mxu0 %v421
    %1728 = vmatprep.subr.mxu0 %v418
    %1729 = vmatpush1.msra.mxu0 %v417
    %1730 = vmatprep.subr.mxu0 %v414
    %1731 = vmatpush1.msra.mxu0 %v413
    %1732 = vmatprep.subr.mxu0 %v410
    %1733 = vmatpush1.msra.mxu0 %v409
    %1734 = vmatprep.subr.mxu0 0.0
    %1735 = vmatpush2.msra.mxu0 0.0
    %1736 = vmatprep.subr.mxu0 0.0
    %1737 = vmatpush2.msra.mxu0 0.0
    %1738 = vmatprep.subr.mxu0 0.0
    %1739 = vmatpush2.msra.mxu0 0.0
    %1740 = vmatprep.subr.mxu0 0.0
    %1741 = vmatpush2.msra.mxu0 0.0
    %1742 = vmatprep.subr.mxu0 0.0
    %1743 = vmatpush2.msra.mxu0 0.0
    %1744 = vmatprep.subr.mxu0 0.0
    %1745 = vmatpush2.msra.mxu0 0.0
    %1746 = vmatprep.subr.mxu0 0.0
    %1747 = vmatpush2.msra.mxu0 0.0
    %1748 = vmatprep.subr.mxu0 0.0
    %1749 = vmatpush2.msra.mxu0 0.0
    %1750 = vmatprep.subr.mxu0 0.0
    %1751 = vmatpush2.msra.mxu0 0.0
    %1752 = vmatprep.subr.mxu0 0.0
    %1753 = vmatpush2.msra.mxu0 0.0
    %1754 = vmatprep.subr.mxu0 0.0
    %1755 = vmatpush2.msra.mxu0 0.0
    %1756 = vmatprep.subr.mxu0 0.0
    %1757 = vmatpush2.msra.mxu0 0.0
    %1758 = vmatprep.subr.mxu0 0.0
    %1759 = vmatpush2.msra.mxu0 0.0
    %1760 = vmatprep.subr.mxu0 0.0
    %1761 = vmatpush2.msra.mxu0 0.0
    %1762 = vmatprep.subr.mxu0 0.0
    %1763 = vmatpush2.msra.mxu0 0.0
    %1764 = vmatprep.subr.mxu0 0.0
    %1765 = vmatpush2.msra.mxu0 0.0
    %1766 = vmatprep.mubr.f32.mxu0 0.0
    %1767 = vmatmul.mubr.f32.gmra.mxu0 %v1696
    %v1768 = vpop.f32.mrf.mxu0
    %v1769 = vadd.f32 0.0, %v1768
    %v1770 = vpop.f32.mrf.mxu0
    %v1771 = vadd.f32 0.0, %v1770
    %1772 = vdwg.mxu0
    %1773 = vmatprep.subr.mxu0 %v472
    %1774 = vmatpush1.msra.mxu0 %v471
    %1775 = vmatprep.subr.mxu0 %v468
    %1776 = vmatpush1.msra.mxu0 %v467
    %1777 = vmatprep.subr.mxu0 %v464
    %1778 = vmatpush1.msra.mxu0 %v463
    %1779 = vmatprep.subr.mxu0 %v460
    %1780 = vmatpush1.msra.mxu0 %v459
    %1781 = vmatprep.subr.mxu0 %v456
    %1782 = vmatpush1.msra.mxu0 %v455
    %1783 = vmatprep.subr.mxu0 %v452
    %1784 = vmatpush1.msra.mxu0 %v451
    %1785 = vmatprep.subr.mxu0 %v448
    %1786 = vmatpush1.msra.mxu0 %v447
    %1787 = vmatprep.subr.mxu0 %v444
    %1788 = vmatpush1.msra.mxu0 %v443
    %1789 = vmatprep.subr.mxu0 %v440
    %1790 = vmatpush1.msra.mxu0 %v439
    %1791 = vmatprep.subr.mxu0 %v436
    %1792 = vmatpush1.msra.mxu0 %v435
    %1793 = vmatprep.subr.mxu0 %v432
    %1794 = vmatpush1.msra.mxu0 %v431
    %1795 = vmatprep.subr.mxu0 %v428
    %1796 = vmatpush1.msra.mxu0 %v427
    %1797 = vmatprep.subr.mxu0 %v424
    %1798 = vmatpush1.msra.mxu0 %v423
    %1799 = vmatprep.subr.mxu0 %v420
    %1800 = vmatpush1.msra.mxu0 %v419
    %1801 = vmatprep.subr.mxu0 %v416
    %1802 = vmatpush1.msra.mxu0 %v415
    %1803 = vmatprep.subr.mxu0 %v412
    %1804 = vmatpush1.msra.mxu0 %v411
    %1805 = vmatprep.subr.mxu0 0.0
    %1806 = vmatpush2.msra.mxu0 0.0
    %1807 = vmatprep.subr.mxu0 0.0
    %1808 = vmatpush2.msra.mxu0 0.0
    %1809 = vmatprep.subr.mxu0 0.0
    %1810 = vmatpush2.msra.mxu0 0.0
    %1811 = vmatprep.subr.mxu0 0.0
    %1812 = vmatpush2.msra.mxu0 0.0
    %1813 = vmatprep.subr.mxu0 0.0
    %1814 = vmatpush2.msra.mxu0 0.0
    %1815 = vmatprep.subr.mxu0 0.0
    %1816 = vmatpush2.msra.mxu0 0.0
    %1817 = vmatprep.subr.mxu0 0.0
    %1818 = vmatpush2.msra.mxu0 0.0
    %1819 = vmatprep.subr.mxu0 0.0
    %1820 = vmatpush2.msra.mxu0 0.0
    %1821 = vmatprep.subr.mxu0 0.0
    %1822 = vmatpush2.msra.mxu0 0.0
    %1823 = vmatprep.subr.mxu0 0.0
    %1824 = vmatpush2.msra.mxu0 0.0
    %1825 = vmatprep.subr.mxu0 0.0
    %1826 = vmatpush2.msra.mxu0 0.0
    %1827 = vmatprep.subr.mxu0 0.0
    %1828 = vmatpush2.msra.mxu0 0.0
    %1829 = vmatprep.subr.mxu0 0.0
    %1830 = vmatpush2.msra.mxu0 0.0
    %1831 = vmatprep.subr.mxu0 0.0
    %1832 = vmatpush2.msra.mxu0 0.0
    %1833 = vmatprep.subr.mxu0 0.0
    %1834 = vmatpush2.msra.mxu0 0.0
    %1835 = vmatprep.subr.mxu0 0.0
    %1836 = vmatpush2.msra.mxu0 0.0
    %1837 = vmatprep.mubr.f32.mxu0 0.0
    %1838 = vmatmul.mubr.f32.gmra.mxu0 %v1696
    %v1839 = vpop.f32.mrf.mxu0
    %v1840 = vadd.f32 0.0, %v1839
    %v1841 = vpop.f32.mrf.mxu0
    %v1842 = vadd.f32 0.0, %v1841
    %1843 = vdwg.mxu0
    %v1844 = vadd.f32 %v1698, %v1769
    %v1845 = vadd.f32 %v1699, %v1771
    %v1846 = vadd.f32 %v1700, %v1840
    %v1847 = vadd.f32 %v1701, %v1842
    %v1848 = vxor.u32 %v1844, 2147483648
    %v1849 = vmul.f32 %v1848, 1.442695
    %v1850 = vpow.pop %v1849
    %v1851 = vadd.f32 %v1850, 1.0
    %v1852 = vrcp.pop %v1851
    %v1853 = vmul.f32 1.0, %v1852
    %v1854 = vxor.u32 %v1845, 2147483648
    %v1855 = vmul.f32 %v1854, 1.442695
    %v1856 = vpow.pop %v1855
    %v1857 = vadd.f32 %v1856, 1.0
    %v1858 = vrcp.pop %v1857
    %v1859 = vmul.f32 1.0, %v1858
    %v1860 = vtanh.pop %v1846
    %v1861 = vxor.u32 %v1847, 2147483648
    %v1862 = vmul.f32 %v1861, 1.442695
    %v1863 = vpow.pop %v1862
    %v1864 = vadd.f32 %v1863, 1.0
    %v1865 = vrcp.pop %v1864
    %v1866 = vmul.f32 1.0, %v1865
    %v1867 = vmul.f32 %v1859, %v1694
    %v1868 = vmul.f32 %v1853, %v1860
    %v1869 = vadd.f32 %v1867, %v1868
    %v1870 = vtanh.pop %v1869
    %v1871 = vmul.f32 %v1866, %v1870
    %1872 = vst [vmem:[#allocation3 + $0x38] sm:$0xff] %v1871
    %v1873 = vld [vmem:[#allocation3] sm:$0xff]
    %v1874 = vld [vmem:[#allocation3 + $0x8] sm:$0xff]
    %v1875 = vld [vmem:[#allocation3 + $0x10] sm:$0xff]
    %v1876 = vld [vmem:[#allocation3 + $0x18] sm:$0xff]
    %v1877 = vld [vmem:[#allocation3 + $0x20] sm:$0xff]
    %v1878 = vld [vmem:[#allocation3 + $0x28] sm:$0xff]
    %v1879 = vld [vmem:[#allocation3 + $0x30] sm:$0xff]
    %v1880 = vld [vmem:[#allocation3 + $0x38] sm:$0xff]
    %v1881 = vld [vmem:[#allocation8] sm:$0xff]
    %v1882 = vld [vmem:[#allocation8 + $0x8] sm:$0xff]
    %v1883 = vld [vmem:[#allocation8 + $0x10] sm:$0xff]
    %v1884 = vld [vmem:[#allocation8 + $0x18] sm:$0xff]
    %v1885 = vld [vmem:[#allocation8 + $0x20] sm:$0xff]
    %v1886 = vld [vmem:[#allocation8 + $0x28] sm:$0xff]
    %v1887 = vld [vmem:[#allocation8 + $0x30] sm:$0xff]
    %v1888 = vld [vmem:[#allocation8 + $0x38] sm:$0xff]
    %v1889 = vld [vmem:[#allocation8 + $0x40] sm:$0xff]
    %v1890 = vld [vmem:[#allocation8 + $0x48] sm:$0xff]
    %v1891 = vld [vmem:[#allocation8 + $0x50] sm:$0xff]
    %v1892 = vld [vmem:[#allocation8 + $0x58] sm:$0xff]
    %v1893 = vld [vmem:[#allocation8 + $0x60] sm:$0xff]
    %v1894 = vld [vmem:[#allocation8 + $0x68] sm:$0xff]
    %v1895 = vld [vmem:[#allocation8 + $0x70] sm:$0xff]
    %v1896 = vld [vmem:[#allocation8 + $0x78] sm:$0xff]
    %v1897 = vld [vmem:[#allocation8 + $0x80] sm:$0xff]
    %v1898 = vld [vmem:[#allocation8 + $0x88] sm:$0xff]
    %v1899 = vld [vmem:[#allocation8 + $0x90] sm:$0xff]
    %v1900 = vld [vmem:[#allocation8 + $0x98] sm:$0xff]
    %v1901 = vld [vmem:[#allocation8 + $0xa0] sm:$0xff]
    %v1902 = vld [vmem:[#allocation8 + $0xa8] sm:$0xff]
    %v1903 = vld [vmem:[#allocation8 + $0xb0] sm:$0xff]
    %v1904 = vld [vmem:[#allocation8 + $0xb8] sm:$0xff]
    %v1905 = vld [vmem:[#allocation8 + $0xc0] sm:$0xff]
    %v1906 = vld [vmem:[#allocation8 + $0xc8] sm:$0xff]
    %v1907 = vld [vmem:[#allocation8 + $0xd0] sm:$0xff]
    %v1908 = vld [vmem:[#allocation8 + $0xd8] sm:$0xff]
    %v1909 = vld [vmem:[#allocation8 + $0xe0] sm:$0xff]
    %v1910 = vld [vmem:[#allocation8 + $0xe8] sm:$0xff]
    %v1911 = vld [vmem:[#allocation8 + $0xf0] sm:$0xff]
    %v1912 = vld [vmem:[#allocation8 + $0xf8] sm:$0xff]
    %v1913 = vld [vmem:[#allocation8 + $0x100] sm:$0xff]
    %v1914 = vld [vmem:[#allocation8 + $0x108] sm:$0xff]
    %v1915 = vld [vmem:[#allocation8 + $0x110] sm:$0xff]
    %v1916 = vld [vmem:[#allocation8 + $0x118] sm:$0xff]
    %v1917 = vld [vmem:[#allocation8 + $0x120] sm:$0xff]
    %v1918 = vld [vmem:[#allocation8 + $0x128] sm:$0xff]
    %v1919 = vld [vmem:[#allocation8 + $0x130] sm:$0xff]
    %v1920 = vld [vmem:[#allocation8 + $0x138] sm:$0xff]
    %v1921 = vld [vmem:[#allocation8 + $0x140] sm:$0xff]
    %v1922 = vld [vmem:[#allocation8 + $0x148] sm:$0xff]
    %v1923 = vld [vmem:[#allocation8 + $0x150] sm:$0xff]
    %v1924 = vld [vmem:[#allocation8 + $0x158] sm:$0xff]
    %v1925 = vld [vmem:[#allocation8 + $0x160] sm:$0xff]
    %v1926 = vld [vmem:[#allocation8 + $0x168] sm:$0xff]
    %v1927 = vld [vmem:[#allocation8 + $0x170] sm:$0xff]
    %v1928 = vld [vmem:[#allocation8 + $0x178] sm:$0xff]
    %v1929 = vld [vmem:[#allocation8 + $0x180] sm:$0xff]
    %v1930 = vld [vmem:[#allocation8 + $0x188] sm:$0xff]
    %v1931 = vld [vmem:[#allocation8 + $0x190] sm:$0xff]
    %v1932 = vld [vmem:[#allocation8 + $0x198] sm:$0xff]
    %v1933 = vld [vmem:[#allocation8 + $0x1a0] sm:$0xff]
    %v1934 = vld [vmem:[#allocation8 + $0x1a8] sm:$0xff]
    %v1935 = vld [vmem:[#allocation8 + $0x1b0] sm:$0xff]
    %v1936 = vld [vmem:[#allocation8 + $0x1b8] sm:$0xff]
    %v1937 = vld [vmem:[#allocation8 + $0x1c0] sm:$0xff]
    %v1938 = vld [vmem:[#allocation8 + $0x1c8] sm:$0xff]
    %v1939 = vld [vmem:[#allocation8 + $0x1d0] sm:$0xff]
    %v1940 = vld [vmem:[#allocation8 + $0x1d8] sm:$0xff]
    %v1941 = vld [vmem:[#allocation8 + $0x1e0] sm:$0xff]
    %v1942 = vld [vmem:[#allocation8 + $0x1e8] sm:$0xff]
    %v1943 = vld [vmem:[#allocation8 + $0x1f0] sm:$0xff]
    %v1944 = vld [vmem:[#allocation8 + $0x1f8] sm:$0xff]
    %v1945 = vld [vmem:[%s6] sm:$0xf]
    %v1947 = vlaneseq
    %v1948 = vshrl.u32 %v1947, 7
    %v1949 = vsub.s32 0, %v1948
    %v1950 = vrot.slane %v1945, %v1949
    %v1951 = vlaneseq
    %v1952 = vshrl.u32 %v1951, 7
    %v1953 = vsub.s32 1, %v1952
    %v1954 = vrot.slane %v1945, %v1953
    %v1955 = vlaneseq
    %v1956 = vshrl.u32 %v1955, 7
    %v1957 = vsub.s32 2, %v1956
    %v1958 = vrot.slane %v1945, %v1957
    %v1959 = vlaneseq
    %v1960 = vshrl.u32 %v1959, 7
    %v1961 = vsub.s32 3, %v1960
    %v1962 = vrot.slane %v1945, %v1961
    %1967 = vmatprep.subr.mxu0 %v1942
    %1968 = vmatpush1.msra.mxu0 %v1941
    %1969 = vmatprep.subr.mxu0 %v1938
    %1970 = vmatpush1.msra.mxu0 %v1937
    %1971 = vmatprep.subr.mxu0 %v1934
    %1972 = vmatpush1.msra.mxu0 %v1933
    %1973 = vmatprep.subr.mxu0 %v1930
    %1974 = vmatpush1.msra.mxu0 %v1929
    %1975 = vmatprep.subr.mxu0 %v1926
    %1976 = vmatpush1.msra.mxu0 %v1925
    %1977 = vmatprep.subr.mxu0 %v1922
    %1978 = vmatpush1.msra.mxu0 %v1921
    %1979 = vmatprep.subr.mxu0 %v1918
    %1980 = vmatpush1.msra.mxu0 %v1917
    %1981 = vmatprep.subr.mxu0 %v1914
    %1982 = vmatpush1.msra.mxu0 %v1913
    %1983 = vmatprep.subr.mxu0 %v1910
    %1984 = vmatpush1.msra.mxu0 %v1909
    %1985 = vmatprep.subr.mxu0 %v1906
    %1986 = vmatpush1.msra.mxu0 %v1905
    %1987 = vmatprep.subr.mxu0 %v1902
    %1988 = vmatpush1.msra.mxu0 %v1901
    %1989 = vmatprep.subr.mxu0 %v1898
    %1990 = vmatpush1.msra.mxu0 %v1897
    %1991 = vmatprep.subr.mxu0 %v1894
    %1992 = vmatpush1.msra.mxu0 %v1893
    %1993 = vmatprep.subr.mxu0 %v1890
    %1994 = vmatpush1.msra.mxu0 %v1889
    %1995 = vmatprep.subr.mxu0 %v1886
    %1996 = vmatpush1.msra.mxu0 %v1885
    %1997 = vmatprep.subr.mxu0 %v1882
    %1998 = vmatpush1.msra.mxu0 %v1881
    %1999 = vmatprep.subr.mxu0 0.0
    %2000 = vmatpush2.msra.mxu0 0.0
    %2001 = vmatprep.subr.mxu0 0.0
    %2002 = vmatpush2.msra.mxu0 0.0
    %2003 = vmatprep.subr.mxu0 0.0
    %2004 = vmatpush2.msra.mxu0 0.0
    %2005 = vmatprep.subr.mxu0 0.0
    %2006 = vmatpush2.msra.mxu0 0.0
    %2007 = vmatprep.subr.mxu0 0.0
    %2008 = vmatpush2.msra.mxu0 0.0
    %2009 = vmatprep.subr.mxu0 0.0
    %2010 = vmatpush2.msra.mxu0 0.0
    %2011 = vmatprep.subr.mxu0 0.0
    %2012 = vmatpush2.msra.mxu0 0.0
    %2013 = vmatprep.subr.mxu0 0.0
    %2014 = vmatpush2.msra.mxu0 0.0
    %2015 = vmatprep.subr.mxu0 0.0
    %2016 = vmatpush2.msra.mxu0 0.0
    %2017 = vmatprep.subr.mxu0 0.0
    %2018 = vmatpush2.msra.mxu0 0.0
    %2019 = vmatprep.subr.mxu0 0.0
    %2020 = vmatpush2.msra.mxu0 0.0
    %2021 = vmatprep.subr.mxu0 0.0
    %2022 = vmatpush2.msra.mxu0 0.0
    %2023 = vmatprep.subr.mxu0 0.0
    %2024 = vmatpush2.msra.mxu0 0.0
    %2025 = vmatprep.subr.mxu0 0.0
    %2026 = vmatpush2.msra.mxu0 0.0
    %2027 = vmatprep.subr.mxu0 0.0
    %2028 = vmatpush2.msra.mxu0 0.0
    %2029 = vmatprep.subr.mxu0 0.0
    %2030 = vmatpush2.msra.mxu0 0.0
    %2031 = vmatprep.mubr.f32.mxu0 0.0
    %2032 = vmatmul.mubr.f32.gmra.mxu0 %v1873
    %v2033 = vpop.f32.mrf.mxu0
    %v2034 = vadd.f32 %v1950, %v2033
    %v2035 = vpop.f32.mrf.mxu0
    %v2036 = vadd.f32 %v1954, %v2035
    %2037 = vmatprep.mubr.f32.mxu0 0.0
    %2038 = vmatmul.mubr.f32.gmra.mxu0 %v1874
    %v2039 = vpop.f32.mrf.mxu0
    %v2040 = vadd.f32 %v1950, %v2039
    %v2041 = vpop.f32.mrf.mxu0
    %v2042 = vadd.f32 %v1954, %v2041
    %2043 = vmatprep.mubr.f32.mxu0 0.0
    %2044 = vmatmul.mubr.f32.gmra.mxu0 %v1875
    %v2045 = vpop.f32.mrf.mxu0
    %v2046 = vadd.f32 %v1950, %v2045
    %v2047 = vpop.f32.mrf.mxu0
    %v2048 = vadd.f32 %v1954, %v2047
    %2049 = vmatprep.mubr.f32.mxu0 0.0
    %2050 = vmatmul.mubr.f32.gmra.mxu0 %v1876
    %v2051 = vpop.f32.mrf.mxu0
    %v2052 = vadd.f32 %v1950, %v2051
    %v2053 = vpop.f32.mrf.mxu0
    %v2054 = vadd.f32 %v1954, %v2053
    %2055 = vmatprep.mubr.f32.mxu0 0.0
    %2056 = vmatmul.mubr.f32.gmra.mxu0 %v1877
    %v2057 = vpop.f32.mrf.mxu0
    %v2058 = vadd.f32 %v1950, %v2057
    %v2059 = vpop.f32.mrf.mxu0
    %v2060 = vadd.f32 %v1954, %v2059
    %2061 = vmatprep.mubr.f32.mxu0 0.0
    %2062 = vmatmul.mubr.f32.gmra.mxu0 %v1878
    %v2063 = vpop.f32.mrf.mxu0
    %v2064 = vadd.f32 %v1950, %v2063
    %v2065 = vpop.f32.mrf.mxu0
    %v2066 = vadd.f32 %v1954, %v2065
    %2067 = vmatprep.mubr.f32.mxu0 0.0
    %2068 = vmatmul.mubr.f32.gmra.mxu0 %v1879
    %v2069 = vpop.f32.mrf.mxu0
    %v2070 = vadd.f32 %v1950, %v2069
    %v2071 = vpop.f32.mrf.mxu0
    %v2072 = vadd.f32 %v1954, %v2071
    %2073 = vmatprep.mubr.f32.mxu0 0.0
    %2074 = vmatmul.mubr.f32.gmra.mxu0 %v1880
    %v2075 = vpop.f32.mrf.mxu0
    %v2076 = vadd.f32 %v1950, %v2075
    %v2077 = vpop.f32.mrf.mxu0
    %v2078 = vadd.f32 %v1954, %v2077
    %2079 = vdwg.mxu0
    %2080 = vmatprep.subr.mxu0 %v1944
    %2081 = vmatpush1.msra.mxu0 %v1943
    %2082 = vmatprep.subr.mxu0 %v1940
    %2083 = vmatpush1.msra.mxu0 %v1939
    %2084 = vmatprep.subr.mxu0 %v1936
    %2085 = vmatpush1.msra.mxu0 %v1935
    %2086 = vmatprep.subr.mxu0 %v1932
    %2087 = vmatpush1.msra.mxu0 %v1931
    %2088 = vmatprep.subr.mxu0 %v1928
    %2089 = vmatpush1.msra.mxu0 %v1927
    %2090 = vmatprep.subr.mxu0 %v1924
    %2091 = vmatpush1.msra.mxu0 %v1923
    %2092 = vmatprep.subr.mxu0 %v1920
    %2093 = vmatpush1.msra.mxu0 %v1919
    %2094 = vmatprep.subr.mxu0 %v1916
    %2095 = vmatpush1.msra.mxu0 %v1915
    %2096 = vmatprep.subr.mxu0 %v1912
    %2097 = vmatpush1.msra.mxu0 %v1911
    %2098 = vmatprep.subr.mxu0 %v1908
    %2099 = vmatpush1.msra.mxu0 %v1907
    %2100 = vmatprep.subr.mxu0 %v1904
    %2101 = vmatpush1.msra.mxu0 %v1903
    %2102 = vmatprep.subr.mxu0 %v1900
    %2103 = vmatpush1.msra.mxu0 %v1899
    %2104 = vmatprep.subr.mxu0 %v1896
    %2105 = vmatpush1.msra.mxu0 %v1895
    %2106 = vmatprep.subr.mxu0 %v1892
    %2107 = vmatpush1.msra.mxu0 %v1891
    %2108 = vmatprep.subr.mxu0 %v1888
    %2109 = vmatpush1.msra.mxu0 %v1887
    %2110 = vmatprep.subr.mxu0 %v1884
    %2111 = vmatpush1.msra.mxu0 %v1883
    %2112 = vmatprep.subr.mxu0 0.0
    %2113 = vmatpush2.msra.mxu0 0.0
    %2114 = vmatprep.subr.mxu0 0.0
    %2115 = vmatpush2.msra.mxu0 0.0
    %2116 = vmatprep.subr.mxu0 0.0
    %2117 = vmatpush2.msra.mxu0 0.0
    %2118 = vmatprep.subr.mxu0 0.0
    %2119 = vmatpush2.msra.mxu0 0.0
    %2120 = vmatprep.subr.mxu0 0.0
    %2121 = vmatpush2.msra.mxu0 0.0
    %2122 = vmatprep.subr.mxu0 0.0
    %2123 = vmatpush2.msra.mxu0 0.0
    %2124 = vmatprep.subr.mxu0 0.0
    %2125 = vmatpush2.msra.mxu0 0.0
    %2126 = vmatprep.subr.mxu0 0.0
    %2127 = vmatpush2.msra.mxu0 0.0
    %2128 = vmatprep.subr.mxu0 0.0
    %2129 = vmatpush2.msra.mxu0 0.0
    %2130 = vmatprep.subr.mxu0 0.0
    %2131 = vmatpush2.msra.mxu0 0.0
    %2132 = vmatprep.subr.mxu0 0.0
    %2133 = vmatpush2.msra.mxu0 0.0
    %2134 = vmatprep.subr.mxu0 0.0
    %2135 = vmatpush2.msra.mxu0 0.0
    %2136 = vmatprep.subr.mxu0 0.0
    %2137 = vmatpush2.msra.mxu0 0.0
    %2138 = vmatprep.subr.mxu0 0.0
    %2139 = vmatpush2.msra.mxu0 0.0
    %2140 = vmatprep.subr.mxu0 0.0
    %2141 = vmatpush2.msra.mxu0 0.0
    %2142 = vmatprep.subr.mxu0 0.0
    %2143 = vmatpush2.msra.mxu0 0.0
    %2144 = vmatprep.mubr.f32.mxu0 0.0
    %2145 = vmatmul.mubr.f32.gmra.mxu0 %v1873
    %v2146 = vpop.f32.mrf.mxu0
    %v2147 = vadd.f32 %v1958, %v2146
    %v2148 = vpop.f32.mrf.mxu0
    %v2149 = vadd.f32 %v1962, %v2148
    %2150 = vmatprep.mubr.f32.mxu0 0.0
    %2151 = vmatmul.mubr.f32.gmra.mxu0 %v1874
    %v2152 = vpop.f32.mrf.mxu0
    %v2153 = vadd.f32 %v1958, %v2152
    %v2154 = vpop.f32.mrf.mxu0
    %v2155 = vadd.f32 %v1962, %v2154
    %2156 = vmatprep.mubr.f32.mxu0 0.0
    %2157 = vmatmul.mubr.f32.gmra.mxu0 %v1875
    %v2158 = vpop.f32.mrf.mxu0
    %v2159 = vadd.f32 %v1958, %v2158
    %v2160 = vpop.f32.mrf.mxu0
    %v2161 = vadd.f32 %v1962, %v2160
    %2162 = vmatprep.mubr.f32.mxu0 0.0
    %2163 = vmatmul.mubr.f32.gmra.mxu0 %v1876
    %v2164 = vpop.f32.mrf.mxu0
    %v2165 = vadd.f32 %v1958, %v2164
    %v2166 = vpop.f32.mrf.mxu0
    %v2167 = vadd.f32 %v1962, %v2166
    %2168 = vmatprep.mubr.f32.mxu0 0.0
    %2169 = vmatmul.mubr.f32.gmra.mxu0 %v1877
    %v2170 = vpop.f32.mrf.mxu0
    %v2171 = vadd.f32 %v1958, %v2170
    %v2172 = vpop.f32.mrf.mxu0
    %v2173 = vadd.f32 %v1962, %v2172
    %2174 = vmatprep.mubr.f32.mxu0 0.0
    %2175 = vmatmul.mubr.f32.gmra.mxu0 %v1878
    %v2176 = vpop.f32.mrf.mxu0
    %v2177 = vadd.f32 %v1958, %v2176
    %v2178 = vpop.f32.mrf.mxu0
    %v2179 = vadd.f32 %v1962, %v2178
    %2180 = vmatprep.mubr.f32.mxu0 0.0
    %2181 = vmatmul.mubr.f32.gmra.mxu0 %v1879
    %v2182 = vpop.f32.mrf.mxu0
    %v2183 = vadd.f32 %v1958, %v2182
    %v2184 = vpop.f32.mrf.mxu0
    %v2185 = vadd.f32 %v1962, %v2184
    %2186 = vmatprep.mubr.f32.mxu0 0.0
    %2187 = vmatmul.mubr.f32.gmra.mxu0 %v1880
    %v2188 = vpop.f32.mrf.mxu0
    %v2189 = vadd.f32 %v1958, %v2188
    %v2190 = vpop.f32.mrf.mxu0
    %v2191 = vadd.f32 %v1962, %v2190
    %2192 = vdwg.mxu0
    %2193 = vst [vmem:[#allocation4] sm:$0xff] %v2034
    %2194 = vst [vmem:[#allocation4 + $0x8] sm:$0xff] %v2036
    %2195 = vst [vmem:[#allocation4 + $0x10] sm:$0xff] %v2147
    %2196 = vst [vmem:[#allocation4 + $0x18] sm:$0xff] %v2149
    %2197 = vst [vmem:[#allocation4 + $0x20] sm:$0xff] %v2040
    %2198 = vst [vmem:[#allocation4 + $0x28] sm:$0xff] %v2042
    %2199 = vst [vmem:[#allocation4 + $0x30] sm:$0xff] %v2153
    %2200 = vst [vmem:[#allocation4 + $0x38] sm:$0xff] %v2155
    %2201 = vst [vmem:[#allocation4 + $0x40] sm:$0xff] %v2046
    %2202 = vst [vmem:[#allocation4 + $0x48] sm:$0xff] %v2048
    %2203 = vst [vmem:[#allocation4 + $0x50] sm:$0xff] %v2159
    %2204 = vst [vmem:[#allocation4 + $0x58] sm:$0xff] %v2161
    %2205 = vst [vmem:[#allocation4 + $0x60] sm:$0xff] %v2052
    %2206 = vst [vmem:[#allocation4 + $0x68] sm:$0xff] %v2054
    %2207 = vst [vmem:[#allocation4 + $0x70] sm:$0xff] %v2165
    %2208 = vst [vmem:[#allocation4 + $0x78] sm:$0xff] %v2167
    %2209 = vst [vmem:[#allocation4 + $0x80] sm:$0xff] %v2058
    %2210 = vst [vmem:[#allocation4 + $0x88] sm:$0xff] %v2060
    %2211 = vst [vmem:[#allocation4 + $0x90] sm:$0xff] %v2171
    %2212 = vst [vmem:[#allocation4 + $0x98] sm:$0xff] %v2173
    %2213 = vst [vmem:[#allocation4 + $0xa0] sm:$0xff] %v2064
    %2214 = vst [vmem:[#allocation4 + $0xa8] sm:$0xff] %v2066
    %2215 = vst [vmem:[#allocation4 + $0xb0] sm:$0xff] %v2177
    %2216 = vst [vmem:[#allocation4 + $0xb8] sm:$0xff] %v2179
    %2217 = vst [vmem:[#allocation4 + $0xc0] sm:$0xff] %v2070
    %2218 = vst [vmem:[#allocation4 + $0xc8] sm:$0xff] %v2072
    %2219 = vst [vmem:[#allocation4 + $0xd0] sm:$0xff] %v2183
    %2220 = vst [vmem:[#allocation4 + $0xd8] sm:$0xff] %v2185
    %2221 = vst [vmem:[#allocation4 + $0xe0] sm:$0xff] %v2076
    %2222 = vst [vmem:[#allocation4 + $0xe8] sm:$0xff] %v2078
    %2223 = vst [vmem:[#allocation4 + $0xf0] sm:$0xff] %v2189
    %2224 = vst [vmem:[#allocation4 + $0xf8] sm:$0xff] %v2191
    %v2225 = vld [vmem:[#allocation10] sm:$0xff]
    %v2226 = vld [vmem:[#allocation10 + $0x8] sm:$0xff]
    %v2227 = vld [vmem:[#allocation10 + $0x10] sm:$0xff]
    %v2228 = vld [vmem:[#allocation10 + $0x18] sm:$0xff]
    %v2229 = vld [vmem:[#allocation10 + $0x20] sm:$0xff]
    %v2230 = vld [vmem:[#allocation10 + $0x28] sm:$0xff]
    %v2231 = vld [vmem:[#allocation10 + $0x30] sm:$0xff]
    %v2232 = vld [vmem:[#allocation10 + $0x38] sm:$0xff]
    %v2233 = vld [vmem:[#allocation10 + $0x40] sm:$0xff]
    %v2234 = vld [vmem:[#allocation10 + $0x48] sm:$0xff]
    %v2235 = vld [vmem:[#allocation10 + $0x50] sm:$0xff]
    %v2236 = vld [vmem:[#allocation10 + $0x58] sm:$0xff]
    %v2237 = vld [vmem:[#allocation10 + $0x60] sm:$0xff]
    %v2238 = vld [vmem:[#allocation10 + $0x68] sm:$0xff]
    %v2239 = vld [vmem:[#allocation10 + $0x70] sm:$0xff]
    %v2240 = vld [vmem:[#allocation10 + $0x78] sm:$0xff]
    %v2241 = vld [vmem:[#allocation10 + $0x80] sm:$0xff]
    %v2242 = vld [vmem:[#allocation10 + $0x88] sm:$0xff]
    %v2243 = vld [vmem:[#allocation10 + $0x90] sm:$0xff]
    %v2244 = vld [vmem:[#allocation10 + $0x98] sm:$0xff]
    %v2245 = vld [vmem:[#allocation10 + $0xa0] sm:$0xff]
    %v2246 = vld [vmem:[#allocation10 + $0xa8] sm:$0xff]
    %v2247 = vld [vmem:[#allocation10 + $0xb0] sm:$0xff]
    %v2248 = vld [vmem:[#allocation10 + $0xb8] sm:$0xff]
    %v2249 = vld [vmem:[#allocation10 + $0xc0] sm:$0xff]
    %v2250 = vld [vmem:[#allocation10 + $0xc8] sm:$0xff]
    %v2251 = vld [vmem:[#allocation10 + $0xd0] sm:$0xff]
    %v2252 = vld [vmem:[#allocation10 + $0xd8] sm:$0xff]
    %v2253 = vld [vmem:[#allocation10 + $0xe0] sm:$0xff]
    %v2254 = vld [vmem:[#allocation10 + $0xe8] sm:$0xff]
    %v2255 = vld [vmem:[#allocation10 + $0xf0] sm:$0xff]
    %v2256 = vld [vmem:[#allocation10 + $0xf8] sm:$0xff]
    %v2257 = vld [vmem:[#allocation10 + $0x100] sm:$0xff]
    %v2258 = vld [vmem:[#allocation10 + $0x108] sm:$0xff]
    %v2259 = vld [vmem:[#allocation10 + $0x110] sm:$0xff]
    %v2260 = vld [vmem:[#allocation10 + $0x118] sm:$0xff]
    %v2261 = vld [vmem:[#allocation10 + $0x120] sm:$0xff]
    %v2262 = vld [vmem:[#allocation10 + $0x128] sm:$0xff]
    %v2263 = vld [vmem:[#allocation10 + $0x130] sm:$0xff]
    %v2264 = vld [vmem:[#allocation10 + $0x138] sm:$0xff]
    %v2265 = vld [vmem:[#allocation10 + $0x140] sm:$0xff]
    %v2266 = vld [vmem:[#allocation10 + $0x148] sm:$0xff]
    %v2267 = vld [vmem:[#allocation10 + $0x150] sm:$0xff]
    %v2268 = vld [vmem:[#allocation10 + $0x158] sm:$0xff]
    %v2269 = vld [vmem:[#allocation10 + $0x160] sm:$0xff]
    %v2270 = vld [vmem:[#allocation10 + $0x168] sm:$0xff]
    %v2271 = vld [vmem:[#allocation10 + $0x170] sm:$0xff]
    %v2272 = vld [vmem:[#allocation10 + $0x178] sm:$0xff]
    %v2273 = vld [vmem:[#allocation10 + $0x180] sm:$0xff]
    %v2274 = vld [vmem:[#allocation10 + $0x188] sm:$0xff]
    %v2275 = vld [vmem:[#allocation10 + $0x190] sm:$0xff]
    %v2276 = vld [vmem:[#allocation10 + $0x198] sm:$0xff]
    %v2277 = vld [vmem:[#allocation10 + $0x1a0] sm:$0xff]
    %v2278 = vld [vmem:[#allocation10 + $0x1a8] sm:$0xff]
    %v2279 = vld [vmem:[#allocation10 + $0x1b0] sm:$0xff]
    %v2280 = vld [vmem:[#allocation10 + $0x1b8] sm:$0xff]
    %v2281 = vld [vmem:[#allocation10 + $0x1c0] sm:$0xff]
    %v2282 = vld [vmem:[#allocation10 + $0x1c8] sm:$0xff]
    %v2283 = vld [vmem:[#allocation10 + $0x1d0] sm:$0xff]
    %v2284 = vld [vmem:[#allocation10 + $0x1d8] sm:$0xff]
    %v2285 = vld [vmem:[#allocation10 + $0x1e0] sm:$0xff]
    %v2286 = vld [vmem:[#allocation10 + $0x1e8] sm:$0xff]
    %v2287 = vld [vmem:[#allocation10 + $0x1f0] sm:$0xff]
    %v2288 = vld [vmem:[#allocation10 + $0x1f8] sm:$0xff]
    %v2289 = vld [vmem:[#allocation4] sm:$0xff]
    %v2290 = vld [vmem:[#allocation4 + $0x8] sm:$0xff]
    %v2291 = vld [vmem:[#allocation4 + $0x10] sm:$0xff]
    %v2292 = vld [vmem:[#allocation4 + $0x18] sm:$0xff]
    %2293 = vmatprep.subr.mxu0 %v2286
    %2294 = vmatpush1.msra.mxu0 %v2285
    %2295 = vmatprep.subr.mxu0 %v2282
    %2296 = vmatpush1.msra.mxu0 %v2281
    %2297 = vmatprep.subr.mxu0 %v2278
    %2298 = vmatpush1.msra.mxu0 %v2277
    %2299 = vmatprep.subr.mxu0 %v2274
    %2300 = vmatpush1.msra.mxu0 %v2273
    %2301 = vmatprep.subr.mxu0 %v2270
    %2302 = vmatpush1.msra.mxu0 %v2269
    %2303 = vmatprep.subr.mxu0 %v2266
    %2304 = vmatpush1.msra.mxu0 %v2265
    %2305 = vmatprep.subr.mxu0 %v2262
    %2306 = vmatpush1.msra.mxu0 %v2261
    %2307 = vmatprep.subr.mxu0 %v2258
    %2308 = vmatpush1.msra.mxu0 %v2257
    %2309 = vmatprep.subr.mxu0 %v2254
    %2310 = vmatpush1.msra.mxu0 %v2253
    %2311 = vmatprep.subr.mxu0 %v2250
    %2312 = vmatpush1.msra.mxu0 %v2249
    %2313 = vmatprep.subr.mxu0 %v2246
    %2314 = vmatpush1.msra.mxu0 %v2245
    %2315 = vmatprep.subr.mxu0 %v2242
    %2316 = vmatpush1.msra.mxu0 %v2241
    %2317 = vmatprep.subr.mxu0 %v2238
    %2318 = vmatpush1.msra.mxu0 %v2237
    %2319 = vmatprep.subr.mxu0 %v2234
    %2320 = vmatpush1.msra.mxu0 %v2233
    %2321 = vmatprep.subr.mxu0 %v2230
    %2322 = vmatpush1.msra.mxu0 %v2229
    %2323 = vmatprep.subr.mxu0 %v2226
    %2324 = vmatpush1.msra.mxu0 %v2225
    %2325 = vmatprep.subr.mxu0 0.0
    %2326 = vmatpush2.msra.mxu0 0.0
    %2327 = vmatprep.subr.mxu0 0.0
    %2328 = vmatpush2.msra.mxu0 0.0
    %2329 = vmatprep.subr.mxu0 0.0
    %2330 = vmatpush2.msra.mxu0 0.0
    %2331 = vmatprep.subr.mxu0 0.0
    %2332 = vmatpush2.msra.mxu0 0.0
    %2333 = vmatprep.subr.mxu0 0.0
    %2334 = vmatpush2.msra.mxu0 0.0
    %2335 = vmatprep.subr.mxu0 0.0
    %2336 = vmatpush2.msra.mxu0 0.0
    %2337 = vmatprep.subr.mxu0 0.0
    %2338 = vmatpush2.msra.mxu0 0.0
    %2339 = vmatprep.subr.mxu0 0.0
    %2340 = vmatpush2.msra.mxu0 0.0
    %2341 = vmatprep.subr.mxu0 0.0
    %2342 = vmatpush2.msra.mxu0 0.0
    %2343 = vmatprep.subr.mxu0 0.0
    %2344 = vmatpush2.msra.mxu0 0.0
    %2345 = vmatprep.subr.mxu0 0.0
    %2346 = vmatpush2.msra.mxu0 0.0
    %2347 = vmatprep.subr.mxu0 0.0
    %2348 = vmatpush2.msra.mxu0 0.0
    %2349 = vmatprep.subr.mxu0 0.0
    %2350 = vmatpush2.msra.mxu0 0.0
    %2351 = vmatprep.subr.mxu0 0.0
    %2352 = vmatpush2.msra.mxu0 0.0
    %2353 = vmatprep.subr.mxu0 0.0
    %2354 = vmatpush2.msra.mxu0 0.0
    %2355 = vmatprep.subr.mxu0 0.0
    %2356 = vmatpush2.msra.mxu0 0.0
    %2357 = vmatprep.mubr.f32.mxu0 0.0
    %2358 = vmatmul.mubr.f32.gmra.mxu0 0.0
    %v2359 = vpop.f32.mrf.mxu0
    %v2360 = vadd.f32 0.0, %v2359
    %v2361 = vpop.f32.mrf.mxu0
    %v2362 = vadd.f32 0.0, %v2361
    %2363 = vdwg.mxu0
    %2364 = vmatprep.subr.mxu0 %v2288
    %2365 = vmatpush1.msra.mxu0 %v2287
    %2366 = vmatprep.subr.mxu0 %v2284
    %2367 = vmatpush1.msra.mxu0 %v2283
    %2368 = vmatprep.subr.mxu0 %v2280
    %2369 = vmatpush1.msra.mxu0 %v2279
    %2370 = vmatprep.subr.mxu0 %v2276
    %2371 = vmatpush1.msra.mxu0 %v2275
    %2372 = vmatprep.subr.mxu0 %v2272
    %2373 = vmatpush1.msra.mxu0 %v2271
    %2374 = vmatprep.subr.mxu0 %v2268
    %2375 = vmatpush1.msra.mxu0 %v2267
    %2376 = vmatprep.subr.mxu0 %v2264
    %2377 = vmatpush1.msra.mxu0 %v2263
    %2378 = vmatprep.subr.mxu0 %v2260
    %2379 = vmatpush1.msra.mxu0 %v2259
    %2380 = vmatprep.subr.mxu0 %v2256
    %2381 = vmatpush1.msra.mxu0 %v2255
    %2382 = vmatprep.subr.mxu0 %v2252
    %2383 = vmatpush1.msra.mxu0 %v2251
    %2384 = vmatprep.subr.mxu0 %v2248
    %2385 = vmatpush1.msra.mxu0 %v2247
    %2386 = vmatprep.subr.mxu0 %v2244
    %2387 = vmatpush1.msra.mxu0 %v2243
    %2388 = vmatprep.subr.mxu0 %v2240
    %2389 = vmatpush1.msra.mxu0 %v2239
    %2390 = vmatprep.subr.mxu0 %v2236
    %2391 = vmatpush1.msra.mxu0 %v2235
    %2392 = vmatprep.subr.mxu0 %v2232
    %2393 = vmatpush1.msra.mxu0 %v2231
    %2394 = vmatprep.subr.mxu0 %v2228
    %2395 = vmatpush1.msra.mxu0 %v2227
    %2396 = vmatprep.subr.mxu0 0.0
    %2397 = vmatpush2.msra.mxu0 0.0
    %2398 = vmatprep.subr.mxu0 0.0
    %2399 = vmatpush2.msra.mxu0 0.0
    %2400 = vmatprep.subr.mxu0 0.0
    %2401 = vmatpush2.msra.mxu0 0.0
    %2402 = vmatprep.subr.mxu0 0.0
    %2403 = vmatpush2.msra.mxu0 0.0
    %2404 = vmatprep.subr.mxu0 0.0
    %2405 = vmatpush2.msra.mxu0 0.0
    %2406 = vmatprep.subr.mxu0 0.0
    %2407 = vmatpush2.msra.mxu0 0.0
    %2408 = vmatprep.subr.mxu0 0.0
    %2409 = vmatpush2.msra.mxu0 0.0
    %2410 = vmatprep.subr.mxu0 0.0
    %2411 = vmatpush2.msra.mxu0 0.0
    %2412 = vmatprep.subr.mxu0 0.0
    %2413 = vmatpush2.msra.mxu0 0.0
    %2414 = vmatprep.subr.mxu0 0.0
    %2415 = vmatpush2.msra.mxu0 0.0
    %2416 = vmatprep.subr.mxu0 0.0
    %2417 = vmatpush2.msra.mxu0 0.0
    %2418 = vmatprep.subr.mxu0 0.0
    %2419 = vmatpush2.msra.mxu0 0.0
    %2420 = vmatprep.subr.mxu0 0.0
    %2421 = vmatpush2.msra.mxu0 0.0
    %2422 = vmatprep.subr.mxu0 0.0
    %2423 = vmatpush2.msra.mxu0 0.0
    %2424 = vmatprep.subr.mxu0 0.0
    %2425 = vmatpush2.msra.mxu0 0.0
    %2426 = vmatprep.subr.mxu0 0.0
    %2427 = vmatpush2.msra.mxu0 0.0
    %2428 = vmatprep.mubr.f32.mxu0 0.0
    %2429 = vmatmul.mubr.f32.gmra.mxu0 0.0
    %v2430 = vpop.f32.mrf.mxu0
    %v2431 = vadd.f32 0.0, %v2430
    %v2432 = vpop.f32.mrf.mxu0
    %v2433 = vadd.f32 0.0, %v2432
    %2434 = vdwg.mxu0
    %v2435 = vadd.f32 %v2289, %v2360
    %v2436 = vadd.f32 %v2290, %v2362
    %v2437 = vadd.f32 %v2291, %v2431
    %v2438 = vadd.f32 %v2292, %v2433
    %v2439 = vxor.u32 %v2435, 2147483648
    %v2440 = vmul.f32 %v2439, 1.442695
    %v2441 = vpow.pop %v2440
    %v2442 = vadd.f32 %v2441, 1.0
    %v2443 = vrcp.pop %v2442
    %v2444 = vmul.f32 1.0, %v2443
    %v2445 = vxor.u32 %v2436, 2147483648
    %v2446 = vmul.f32 %v2445, 1.442695
    %v2447 = vpow.pop %v2446
    %v2448 = vadd.f32 %v2447, 1.0
    %v2449 = vrcp.pop %v2448
    %v2450 = vmul.f32 1.0, %v2449
    %v2451 = vtanh.pop %v2437
    %v2452 = vxor.u32 %v2438, 2147483648
    %v2453 = vmul.f32 %v2452, 1.442695
    %v2454 = vpow.pop %v2453
    %v2455 = vadd.f32 %v2454, 1.0
    %v2456 = vrcp.pop %v2455
    %v2457 = vmul.f32 1.0, %v2456
    %v2458 = vmul.f32 %v2450, 0.0
    %v2459 = vmul.f32 %v2444, %v2451
    %v2460 = vadd.f32 %v2458, %v2459
    %v2461 = vtanh.pop %v2460
    %v2462 = vmul.f32 %v2457, %v2461
    %v2463 = vld [vmem:[#allocation4 + $0x20] sm:$0xff]
    %v2464 = vld [vmem:[#allocation4 + $0x28] sm:$0xff]
    %v2465 = vld [vmem:[#allocation4 + $0x30] sm:$0xff]
    %v2466 = vld [vmem:[#allocation4 + $0x38] sm:$0xff]
    %2467 = vmatprep.subr.mxu0 %v2286
    %2468 = vmatpush1.msra.mxu0 %v2285
    %2469 = vmatprep.subr.mxu0 %v2282
    %2470 = vmatpush1.msra.mxu0 %v2281
    %2471 = vmatprep.subr.mxu0 %v2278
    %2472 = vmatpush1.msra.mxu0 %v2277
    %2473 = vmatprep.subr.mxu0 %v2274
    %2474 = vmatpush1.msra.mxu0 %v2273
    %2475 = vmatprep.subr.mxu0 %v2270
    %2476 = vmatpush1.msra.mxu0 %v2269
    %2477 = vmatprep.subr.mxu0 %v2266
    %2478 = vmatpush1.msra.mxu0 %v2265
    %2479 = vmatprep.subr.mxu0 %v2262
    %2480 = vmatpush1.msra.mxu0 %v2261
    %2481 = vmatprep.subr.mxu0 %v2258
    %2482 = vmatpush1.msra.mxu0 %v2257
    %2483 = vmatprep.subr.mxu0 %v2254
    %2484 = vmatpush1.msra.mxu0 %v2253
    %2485 = vmatprep.subr.mxu0 %v2250
    %2486 = vmatpush1.msra.mxu0 %v2249
    %2487 = vmatprep.subr.mxu0 %v2246
    %2488 = vmatpush1.msra.mxu0 %v2245
    %2489 = vmatprep.subr.mxu0 %v2242
    %2490 = vmatpush1.msra.mxu0 %v2241
    %2491 = vmatprep.subr.mxu0 %v2238
    %2492 = vmatpush1.msra.mxu0 %v2237
    %2493 = vmatprep.subr.mxu0 %v2234
    %2494 = vmatpush1.msra.mxu0 %v2233
    %2495 = vmatprep.subr.mxu0 %v2230
    %2496 = vmatpush1.msra.mxu0 %v2229
    %2497 = vmatprep.subr.mxu0 %v2226
    %2498 = vmatpush1.msra.mxu0 %v2225
    %2499 = vmatprep.subr.mxu0 0.0
    %2500 = vmatpush2.msra.mxu0 0.0
    %2501 = vmatprep.subr.mxu0 0.0
    %2502 = vmatpush2.msra.mxu0 0.0
    %2503 = vmatprep.subr.mxu0 0.0
    %2504 = vmatpush2.msra.mxu0 0.0
    %2505 = vmatprep.subr.mxu0 0.0
    %2506 = vmatpush2.msra.mxu0 0.0
    %2507 = vmatprep.subr.mxu0 0.0
    %2508 = vmatpush2.msra.mxu0 0.0
    %2509 = vmatprep.subr.mxu0 0.0
    %2510 = vmatpush2.msra.mxu0 0.0
    %2511 = vmatprep.subr.mxu0 0.0
    %2512 = vmatpush2.msra.mxu0 0.0
    %2513 = vmatprep.subr.mxu0 0.0
    %2514 = vmatpush2.msra.mxu0 0.0
    %2515 = vmatprep.subr.mxu0 0.0
    %2516 = vmatpush2.msra.mxu0 0.0
    %2517 = vmatprep.subr.mxu0 0.0
    %2518 = vmatpush2.msra.mxu0 0.0
    %2519 = vmatprep.subr.mxu0 0.0
    %2520 = vmatpush2.msra.mxu0 0.0
    %2521 = vmatprep.subr.mxu0 0.0
    %2522 = vmatpush2.msra.mxu0 0.0
    %2523 = vmatprep.subr.mxu0 0.0
    %2524 = vmatpush2.msra.mxu0 0.0
    %2525 = vmatprep.subr.mxu0 0.0
    %2526 = vmatpush2.msra.mxu0 0.0
    %2527 = vmatprep.subr.mxu0 0.0
    %2528 = vmatpush2.msra.mxu0 0.0
    %2529 = vmatprep.subr.mxu0 0.0
    %2530 = vmatpush2.msra.mxu0 0.0
    %2531 = vmatprep.mubr.f32.mxu0 0.0
    %2532 = vmatmul.mubr.f32.gmra.mxu0 %v2462
    %v2533 = vpop.f32.mrf.mxu0
    %v2534 = vadd.f32 0.0, %v2533
    %v2535 = vpop.f32.mrf.mxu0
    %v2536 = vadd.f32 0.0, %v2535
    %2537 = vdwg.mxu0
    %2538 = vmatprep.subr.mxu0 %v2288
    %2539 = vmatpush1.msra.mxu0 %v2287
    %2540 = vmatprep.subr.mxu0 %v2284
    %2541 = vmatpush1.msra.mxu0 %v2283
    %2542 = vmatprep.subr.mxu0 %v2280
    %2543 = vmatpush1.msra.mxu0 %v2279
    %2544 = vmatprep.subr.mxu0 %v2276
    %2545 = vmatpush1.msra.mxu0 %v2275
    %2546 = vmatprep.subr.mxu0 %v2272
    %2547 = vmatpush1.msra.mxu0 %v2271
    %2548 = vmatprep.subr.mxu0 %v2268
    %2549 = vmatpush1.msra.mxu0 %v2267
    %2550 = vmatprep.subr.mxu0 %v2264
    %2551 = vmatpush1.msra.mxu0 %v2263
    %2552 = vmatprep.subr.mxu0 %v2260
    %2553 = vmatpush1.msra.mxu0 %v2259
    %2554 = vmatprep.subr.mxu0 %v2256
    %2555 = vmatpush1.msra.mxu0 %v2255
    %2556 = vmatprep.subr.mxu0 %v2252
    %2557 = vmatpush1.msra.mxu0 %v2251
    %2558 = vmatprep.subr.mxu0 %v2248
    %2559 = vmatpush1.msra.mxu0 %v2247
    %2560 = vmatprep.subr.mxu0 %v2244
    %2561 = vmatpush1.msra.mxu0 %v2243
    %2562 = vmatprep.subr.mxu0 %v2240
    %2563 = vmatpush1.msra.mxu0 %v2239
    %2564 = vmatprep.subr.mxu0 %v2236
    %2565 = vmatpush1.msra.mxu0 %v2235
    %2566 = vmatprep.subr.mxu0 %v2232
    %2567 = vmatpush1.msra.mxu0 %v2231
    %2568 = vmatprep.subr.mxu0 %v2228
    %2569 = vmatpush1.msra.mxu0 %v2227
    %2570 = vmatprep.subr.mxu0 0.0
    %2571 = vmatpush2.msra.mxu0 0.0
    %2572 = vmatprep.subr.mxu0 0.0
    %2573 = vmatpush2.msra.mxu0 0.0
    %2574 = vmatprep.subr.mxu0 0.0
    %2575 = vmatpush2.msra.mxu0 0.0
    %2576 = vmatprep.subr.mxu0 0.0
    %2577 = vmatpush2.msra.mxu0 0.0
    %2578 = vmatprep.subr.mxu0 0.0
    %2579 = vmatpush2.msra.mxu0 0.0
    %2580 = vmatprep.subr.mxu0 0.0
    %2581 = vmatpush2.msra.mxu0 0.0
    %2582 = vmatprep.subr.mxu0 0.0
    %2583 = vmatpush2.msra.mxu0 0.0
    %2584 = vmatprep.subr.mxu0 0.0
    %2585 = vmatpush2.msra.mxu0 0.0
    %2586 = vmatprep.subr.mxu0 0.0
    %2587 = vmatpush2.msra.mxu0 0.0
    %2588 = vmatprep.subr.mxu0 0.0
    %2589 = vmatpush2.msra.mxu0 0.0
    %2590 = vmatprep.subr.mxu0 0.0
    %2591 = vmatpush2.msra.mxu0 0.0
    %2592 = vmatprep.subr.mxu0 0.0
    %2593 = vmatpush2.msra.mxu0 0.0
    %2594 = vmatprep.subr.mxu0 0.0
    %2595 = vmatpush2.msra.mxu0 0.0
    %2596 = vmatprep.subr.mxu0 0.0
    %2597 = vmatpush2.msra.mxu0 0.0
    %2598 = vmatprep.subr.mxu0 0.0
    %2599 = vmatpush2.msra.mxu0 0.0
    %2600 = vmatprep.subr.mxu0 0.0
    %2601 = vmatpush2.msra.mxu0 0.0
    %2602 = vmatprep.mubr.f32.mxu0 0.0
    %2603 = vmatmul.mubr.f32.gmra.mxu0 %v2462
    %v2604 = vpop.f32.mrf.mxu0
    %v2605 = vadd.f32 0.0, %v2604
    %v2606 = vpop.f32.mrf.mxu0
    %v2607 = vadd.f32 0.0, %v2606
    %2608 = vdwg.mxu0
    %v2609 = vadd.f32 %v2463, %v2534
    %v2610 = vadd.f32 %v2464, %v2536
    %v2611 = vadd.f32 %v2465, %v2605
    %v2612 = vadd.f32 %v2466, %v2607
    %v2613 = vxor.u32 %v2609, 2147483648
    %v2614 = vmul.f32 %v2613, 1.442695
    %v2615 = vpow.pop %v2614
    %v2616 = vadd.f32 %v2615, 1.0
    %v2617 = vrcp.pop %v2616
    %v2618 = vmul.f32 1.0, %v2617
    %v2619 = vxor.u32 %v2610, 2147483648
    %v2620 = vmul.f32 %v2619, 1.442695
    %v2621 = vpow.pop %v2620
    %v2622 = vadd.f32 %v2621, 1.0
    %v2623 = vrcp.pop %v2622
    %v2624 = vmul.f32 1.0, %v2623
    %v2625 = vtanh.pop %v2611
    %v2626 = vxor.u32 %v2612, 2147483648
    %v2627 = vmul.f32 %v2626, 1.442695
    %v2628 = vpow.pop %v2627
    %v2629 = vadd.f32 %v2628, 1.0
    %v2630 = vrcp.pop %v2629
    %v2631 = vmul.f32 1.0, %v2630
    %v2632 = vmul.f32 %v2624, %v2460
    %v2633 = vmul.f32 %v2618, %v2625
    %v2634 = vadd.f32 %v2632, %v2633
    %v2635 = vtanh.pop %v2634
    %v2636 = vmul.f32 %v2631, %v2635
    %v2637 = vld [vmem:[#allocation4 + $0x40] sm:$0xff]
    %v2638 = vld [vmem:[#allocation4 + $0x48] sm:$0xff]
    %v2639 = vld [vmem:[#allocation4 + $0x50] sm:$0xff]
    %v2640 = vld [vmem:[#allocation4 + $0x58] sm:$0xff]
    %2641 = vmatprep.subr.mxu0 %v2286
    %2642 = vmatpush1.msra.mxu0 %v2285
    %2643 = vmatprep.subr.mxu0 %v2282
    %2644 = vmatpush1.msra.mxu0 %v2281
    %2645 = vmatprep.subr.mxu0 %v2278
    %2646 = vmatpush1.msra.mxu0 %v2277
    %2647 = vmatprep.subr.mxu0 %v2274
    %2648 = vmatpush1.msra.mxu0 %v2273
    %2649 = vmatprep.subr.mxu0 %v2270
    %2650 = vmatpush1.msra.mxu0 %v2269
    %2651 = vmatprep.subr.mxu0 %v2266
    %2652 = vmatpush1.msra.mxu0 %v2265
    %2653 = vmatprep.subr.mxu0 %v2262
    %2654 = vmatpush1.msra.mxu0 %v2261
    %2655 = vmatprep.subr.mxu0 %v2258
    %2656 = vmatpush1.msra.mxu0 %v2257
    %2657 = vmatprep.subr.mxu0 %v2254
    %2658 = vmatpush1.msra.mxu0 %v2253
    %2659 = vmatprep.subr.mxu0 %v2250
    %2660 = vmatpush1.msra.mxu0 %v2249
    %2661 = vmatprep.subr.mxu0 %v2246
    %2662 = vmatpush1.msra.mxu0 %v2245
    %2663 = vmatprep.subr.mxu0 %v2242
    %2664 = vmatpush1.msra.mxu0 %v2241
    %2665 = vmatprep.subr.mxu0 %v2238
    %2666 = vmatpush1.msra.mxu0 %v2237
    %2667 = vmatprep.subr.mxu0 %v2234
    %2668 = vmatpush1.msra.mxu0 %v2233
    %2669 = vmatprep.subr.mxu0 %v2230
    %2670 = vmatpush1.msra.mxu0 %v2229
    %2671 = vmatprep.subr.mxu0 %v2226
    %2672 = vmatpush1.msra.mxu0 %v2225
    %2673 = vmatprep.subr.mxu0 0.0
    %2674 = vmatpush2.msra.mxu0 0.0
    %2675 = vmatprep.subr.mxu0 0.0
    %2676 = vmatpush2.msra.mxu0 0.0
    %2677 = vmatprep.subr.mxu0 0.0
    %2678 = vmatpush2.msra.mxu0 0.0
    %2679 = vmatprep.subr.mxu0 0.0
    %2680 = vmatpush2.msra.mxu0 0.0
    %2681 = vmatprep.subr.mxu0 0.0
    %2682 = vmatpush2.msra.mxu0 0.0
    %2683 = vmatprep.subr.mxu0 0.0
    %2684 = vmatpush2.msra.mxu0 0.0
    %2685 = vmatprep.subr.mxu0 0.0
    %2686 = vmatpush2.msra.mxu0 0.0
    %2687 = vmatprep.subr.mxu0 0.0
    %2688 = vmatpush2.msra.mxu0 0.0
    %2689 = vmatprep.subr.mxu0 0.0
    %2690 = vmatpush2.msra.mxu0 0.0
    %2691 = vmatprep.subr.mxu0 0.0
    %2692 = vmatpush2.msra.mxu0 0.0
    %2693 = vmatprep.subr.mxu0 0.0
    %2694 = vmatpush2.msra.mxu0 0.0
    %2695 = vmatprep.subr.mxu0 0.0
    %2696 = vmatpush2.msra.mxu0 0.0
    %2697 = vmatprep.subr.mxu0 0.0
    %2698 = vmatpush2.msra.mxu0 0.0
    %2699 = vmatprep.subr.mxu0 0.0
    %2700 = vmatpush2.msra.mxu0 0.0
    %2701 = vmatprep.subr.mxu0 0.0
    %2702 = vmatpush2.msra.mxu0 0.0
    %2703 = vmatprep.subr.mxu0 0.0
    %2704 = vmatpush2.msra.mxu0 0.0
    %2705 = vmatprep.mubr.f32.mxu0 0.0
    %2706 = vmatmul.mubr.f32.gmra.mxu0 %v2636
    %v2707 = vpop.f32.mrf.mxu0
    %v2708 = vadd.f32 0.0, %v2707
    %v2709 = vpop.f32.mrf.mxu0
    %v2710 = vadd.f32 0.0, %v2709
    %2711 = vdwg.mxu0
    %2712 = vmatprep.subr.mxu0 %v2288
    %2713 = vmatpush1.msra.mxu0 %v2287
    %2714 = vmatprep.subr.mxu0 %v2284
    %2715 = vmatpush1.msra.mxu0 %v2283
    %2716 = vmatprep.subr.mxu0 %v2280
    %2717 = vmatpush1.msra.mxu0 %v2279
    %2718 = vmatprep.subr.mxu0 %v2276
    %2719 = vmatpush1.msra.mxu0 %v2275
    %2720 = vmatprep.subr.mxu0 %v2272
    %2721 = vmatpush1.msra.mxu0 %v2271
    %2722 = vmatprep.subr.mxu0 %v2268
    %2723 = vmatpush1.msra.mxu0 %v2267
    %2724 = vmatprep.subr.mxu0 %v2264
    %2725 = vmatpush1.msra.mxu0 %v2263
    %2726 = vmatprep.subr.mxu0 %v2260
    %2727 = vmatpush1.msra.mxu0 %v2259
    %2728 = vmatprep.subr.mxu0 %v2256
    %2729 = vmatpush1.msra.mxu0 %v2255
    %2730 = vmatprep.subr.mxu0 %v2252
    %2731 = vmatpush1.msra.mxu0 %v2251
    %2732 = vmatprep.subr.mxu0 %v2248
    %2733 = vmatpush1.msra.mxu0 %v2247
    %2734 = vmatprep.subr.mxu0 %v2244
    %2735 = vmatpush1.msra.mxu0 %v2243
    %2736 = vmatprep.subr.mxu0 %v2240
    %2737 = vmatpush1.msra.mxu0 %v2239
    %2738 = vmatprep.subr.mxu0 %v2236
    %2739 = vmatpush1.msra.mxu0 %v2235
    %2740 = vmatprep.subr.mxu0 %v2232
    %2741 = vmatpush1.msra.mxu0 %v2231
    %2742 = vmatprep.subr.mxu0 %v2228
    %2743 = vmatpush1.msra.mxu0 %v2227
    %2744 = vmatprep.subr.mxu0 0.0
    %2745 = vmatpush2.msra.mxu0 0.0
    %2746 = vmatprep.subr.mxu0 0.0
    %2747 = vmatpush2.msra.mxu0 0.0
    %2748 = vmatprep.subr.mxu0 0.0
    %2749 = vmatpush2.msra.mxu0 0.0
    %2750 = vmatprep.subr.mxu0 0.0
    %2751 = vmatpush2.msra.mxu0 0.0
    %2752 = vmatprep.subr.mxu0 0.0
    %2753 = vmatpush2.msra.mxu0 0.0
    %2754 = vmatprep.subr.mxu0 0.0
    %2755 = vmatpush2.msra.mxu0 0.0
    %2756 = vmatprep.subr.mxu0 0.0
    %2757 = vmatpush2.msra.mxu0 0.0
    %2758 = vmatprep.subr.mxu0 0.0
    %2759 = vmatpush2.msra.mxu0 0.0
    %2760 = vmatprep.subr.mxu0 0.0
    %2761 = vmatpush2.msra.mxu0 0.0
    %2762 = vmatprep.subr.mxu0 0.0
    %2763 = vmatpush2.msra.mxu0 0.0
    %2764 = vmatprep.subr.mxu0 0.0
    %2765 = vmatpush2.msra.mxu0 0.0
    %2766 = vmatprep.subr.mxu0 0.0
    %2767 = vmatpush2.msra.mxu0 0.0
    %2768 = vmatprep.subr.mxu0 0.0
    %2769 = vmatpush2.msra.mxu0 0.0
    %2770 = vmatprep.subr.mxu0 0.0
    %2771 = vmatpush2.msra.mxu0 0.0
    %2772 = vmatprep.subr.mxu0 0.0
    %2773 = vmatpush2.msra.mxu0 0.0
    %2774 = vmatprep.subr.mxu0 0.0
    %2775 = vmatpush2.msra.mxu0 0.0
    %2776 = vmatprep.mubr.f32.mxu0 0.0
    %2777 = vmatmul.mubr.f32.gmra.mxu0 %v2636
    %v2778 = vpop.f32.mrf.mxu0
    %v2779 = vadd.f32 0.0, %v2778
    %v2780 = vpop.f32.mrf.mxu0
    %v2781 = vadd.f32 0.0, %v2780
    %2782 = vdwg.mxu0
    %v2783 = vadd.f32 %v2637, %v2708
    %v2784 = vadd.f32 %v2638, %v2710
    %v2785 = vadd.f32 %v2639, %v2779
    %v2786 = vadd.f32 %v2640, %v2781
    %v2787 = vxor.u32 %v2783, 2147483648
    %v2788 = vmul.f32 %v2787, 1.442695
    %v2789 = vpow.pop %v2788
    %v2790 = vadd.f32 %v2789, 1.0
    %v2791 = vrcp.pop %v2790
    %v2792 = vmul.f32 1.0, %v2791
    %v2793 = vxor.u32 %v2784, 2147483648
    %v2794 = vmul.f32 %v2793, 1.442695
    %v2795 = vpow.pop %v2794
    %v2796 = vadd.f32 %v2795, 1.0
    %v2797 = vrcp.pop %v2796
    %v2798 = vmul.f32 1.0, %v2797
    %v2799 = vtanh.pop %v2785
    %v2800 = vxor.u32 %v2786, 2147483648
    %v2801 = vmul.f32 %v2800, 1.442695
    %v2802 = vpow.pop %v2801
    %v2803 = vadd.f32 %v2802, 1.0
    %v2804 = vrcp.pop %v2803
    %v2805 = vmul.f32 1.0, %v2804
    %v2806 = vmul.f32 %v2798, %v2634
    %v2807 = vmul.f32 %v2792, %v2799
    %v2808 = vadd.f32 %v2806, %v2807
    %v2809 = vtanh.pop %v2808
    %v2810 = vmul.f32 %v2805, %v2809
    %v2811 = vld [vmem:[#allocation4 + $0x60] sm:$0xff]
    %v2812 = vld [vmem:[#allocation4 + $0x68] sm:$0xff]
    %v2813 = vld [vmem:[#allocation4 + $0x70] sm:$0xff]
    %v2814 = vld [vmem:[#allocation4 + $0x78] sm:$0xff]
    %2815 = vmatprep.subr.mxu0 %v2286
    %2816 = vmatpush1.msra.mxu0 %v2285
    %2817 = vmatprep.subr.mxu0 %v2282
    %2818 = vmatpush1.msra.mxu0 %v2281
    %2819 = vmatprep.subr.mxu0 %v2278
    %2820 = vmatpush1.msra.mxu0 %v2277
    %2821 = vmatprep.subr.mxu0 %v2274
    %2822 = vmatpush1.msra.mxu0 %v2273
    %2823 = vmatprep.subr.mxu0 %v2270
    %2824 = vmatpush1.msra.mxu0 %v2269
    %2825 = vmatprep.subr.mxu0 %v2266
    %2826 = vmatpush1.msra.mxu0 %v2265
    %2827 = vmatprep.subr.mxu0 %v2262
    %2828 = vmatpush1.msra.mxu0 %v2261
    %2829 = vmatprep.subr.mxu0 %v2258
    %2830 = vmatpush1.msra.mxu0 %v2257
    %2831 = vmatprep.subr.mxu0 %v2254
    %2832 = vmatpush1.msra.mxu0 %v2253
    %2833 = vmatprep.subr.mxu0 %v2250
    %2834 = vmatpush1.msra.mxu0 %v2249
    %2835 = vmatprep.subr.mxu0 %v2246
    %2836 = vmatpush1.msra.mxu0 %v2245
    %2837 = vmatprep.subr.mxu0 %v2242
    %2838 = vmatpush1.msra.mxu0 %v2241
    %2839 = vmatprep.subr.mxu0 %v2238
    %2840 = vmatpush1.msra.mxu0 %v2237
    %2841 = vmatprep.subr.mxu0 %v2234
    %2842 = vmatpush1.msra.mxu0 %v2233
    %2843 = vmatprep.subr.mxu0 %v2230
    %2844 = vmatpush1.msra.mxu0 %v2229
    %2845 = vmatprep.subr.mxu0 %v2226
    %2846 = vmatpush1.msra.mxu0 %v2225
    %2847 = vmatprep.subr.mxu0 0.0
    %2848 = vmatpush2.msra.mxu0 0.0
    %2849 = vmatprep.subr.mxu0 0.0
    %2850 = vmatpush2.msra.mxu0 0.0
    %2851 = vmatprep.subr.mxu0 0.0
    %2852 = vmatpush2.msra.mxu0 0.0
    %2853 = vmatprep.subr.mxu0 0.0
    %2854 = vmatpush2.msra.mxu0 0.0
    %2855 = vmatprep.subr.mxu0 0.0
    %2856 = vmatpush2.msra.mxu0 0.0
    %2857 = vmatprep.subr.mxu0 0.0
    %2858 = vmatpush2.msra.mxu0 0.0
    %2859 = vmatprep.subr.mxu0 0.0
    %2860 = vmatpush2.msra.mxu0 0.0
    %2861 = vmatprep.subr.mxu0 0.0
    %2862 = vmatpush2.msra.mxu0 0.0
    %2863 = vmatprep.subr.mxu0 0.0
    %2864 = vmatpush2.msra.mxu0 0.0
    %2865 = vmatprep.subr.mxu0 0.0
    %2866 = vmatpush2.msra.mxu0 0.0
    %2867 = vmatprep.subr.mxu0 0.0
    %2868 = vmatpush2.msra.mxu0 0.0
    %2869 = vmatprep.subr.mxu0 0.0
    %2870 = vmatpush2.msra.mxu0 0.0
    %2871 = vmatprep.subr.mxu0 0.0
    %2872 = vmatpush2.msra.mxu0 0.0
    %2873 = vmatprep.subr.mxu0 0.0
    %2874 = vmatpush2.msra.mxu0 0.0
    %2875 = vmatprep.subr.mxu0 0.0
    %2876 = vmatpush2.msra.mxu0 0.0
    %2877 = vmatprep.subr.mxu0 0.0
    %2878 = vmatpush2.msra.mxu0 0.0
    %2879 = vmatprep.mubr.f32.mxu0 0.0
    %2880 = vmatmul.mubr.f32.gmra.mxu0 %v2810
    %v2881 = vpop.f32.mrf.mxu0
    %v2882 = vadd.f32 0.0, %v2881
    %v2883 = vpop.f32.mrf.mxu0
    %v2884 = vadd.f32 0.0, %v2883
    %2885 = vdwg.mxu0
    %2886 = vmatprep.subr.mxu0 %v2288
    %2887 = vmatpush1.msra.mxu0 %v2287
    %2888 = vmatprep.subr.mxu0 %v2284
    %2889 = vmatpush1.msra.mxu0 %v2283
    %2890 = vmatprep.subr.mxu0 %v2280
    %2891 = vmatpush1.msra.mxu0 %v2279
    %2892 = vmatprep.subr.mxu0 %v2276
    %2893 = vmatpush1.msra.mxu0 %v2275
    %2894 = vmatprep.subr.mxu0 %v2272
    %2895 = vmatpush1.msra.mxu0 %v2271
    %2896 = vmatprep.subr.mxu0 %v2268
    %2897 = vmatpush1.msra.mxu0 %v2267
    %2898 = vmatprep.subr.mxu0 %v2264
    %2899 = vmatpush1.msra.mxu0 %v2263
    %2900 = vmatprep.subr.mxu0 %v2260
    %2901 = vmatpush1.msra.mxu0 %v2259
    %2902 = vmatprep.subr.mxu0 %v2256
    %2903 = vmatpush1.msra.mxu0 %v2255
    %2904 = vmatprep.subr.mxu0 %v2252
    %2905 = vmatpush1.msra.mxu0 %v2251
    %2906 = vmatprep.subr.mxu0 %v2248
    %2907 = vmatpush1.msra.mxu0 %v2247
    %2908 = vmatprep.subr.mxu0 %v2244
    %2909 = vmatpush1.msra.mxu0 %v2243
    %2910 = vmatprep.subr.mxu0 %v2240
    %2911 = vmatpush1.msra.mxu0 %v2239
    %2912 = vmatprep.subr.mxu0 %v2236
    %2913 = vmatpush1.msra.mxu0 %v2235
    %2914 = vmatprep.subr.mxu0 %v2232
    %2915 = vmatpush1.msra.mxu0 %v2231
    %2916 = vmatprep.subr.mxu0 %v2228
    %2917 = vmatpush1.msra.mxu0 %v2227
    %2918 = vmatprep.subr.mxu0 0.0
    %2919 = vmatpush2.msra.mxu0 0.0
    %2920 = vmatprep.subr.mxu0 0.0
    %2921 = vmatpush2.msra.mxu0 0.0
    %2922 = vmatprep.subr.mxu0 0.0
    %2923 = vmatpush2.msra.mxu0 0.0
    %2924 = vmatprep.subr.mxu0 0.0
    %2925 = vmatpush2.msra.mxu0 0.0
    %2926 = vmatprep.subr.mxu0 0.0
    %2927 = vmatpush2.msra.mxu0 0.0
    %2928 = vmatprep.subr.mxu0 0.0
    %2929 = vmatpush2.msra.mxu0 0.0
    %2930 = vmatprep.subr.mxu0 0.0
    %2931 = vmatpush2.msra.mxu0 0.0
    %2932 = vmatprep.subr.mxu0 0.0
    %2933 = vmatpush2.msra.mxu0 0.0
    %2934 = vmatprep.subr.mxu0 0.0
    %2935 = vmatpush2.msra.mxu0 0.0
    %2936 = vmatprep.subr.mxu0 0.0
    %2937 = vmatpush2.msra.mxu0 0.0
    %2938 = vmatprep.subr.mxu0 0.0
    %2939 = vmatpush2.msra.mxu0 0.0
    %2940 = vmatprep.subr.mxu0 0.0
    %2941 = vmatpush2.msra.mxu0 0.0
    %2942 = vmatprep.subr.mxu0 0.0
    %2943 = vmatpush2.msra.mxu0 0.0
    %2944 = vmatprep.subr.mxu0 0.0
    %2945 = vmatpush2.msra.mxu0 0.0
    %2946 = vmatprep.subr.mxu0 0.0
    %2947 = vmatpush2.msra.mxu0 0.0
    %2948 = vmatprep.subr.mxu0 0.0
    %2949 = vmatpush2.msra.mxu0 0.0
    %2950 = vmatprep.mubr.f32.mxu0 0.0
    %2951 = vmatmul.mubr.f32.gmra.mxu0 %v2810
    %v2952 = vpop.f32.mrf.mxu0
    %v2953 = vadd.f32 0.0, %v2952
    %v2954 = vpop.f32.mrf.mxu0
    %v2955 = vadd.f32 0.0, %v2954
    %2956 = vdwg.mxu0
    %v2957 = vadd.f32 %v2811, %v2882
    %v2958 = vadd.f32 %v2812, %v2884
    %v2959 = vadd.f32 %v2813, %v2953
    %v2960 = vadd.f32 %v2814, %v2955
    %v2961 = vxor.u32 %v2957, 2147483648
    %v2962 = vmul.f32 %v2961, 1.442695
    %v2963 = vpow.pop %v2962
    %v2964 = vadd.f32 %v2963, 1.0
    %v2965 = vrcp.pop %v2964
    %v2966 = vmul.f32 1.0, %v2965
    %v2967 = vxor.u32 %v2958, 2147483648
    %v2968 = vmul.f32 %v2967, 1.442695
    %v2969 = vpow.pop %v2968
    %v2970 = vadd.f32 %v2969, 1.0
    %v2971 = vrcp.pop %v2970
    %v2972 = vmul.f32 1.0, %v2971
    %v2973 = vtanh.pop %v2959
    %v2974 = vxor.u32 %v2960, 2147483648
    %v2975 = vmul.f32 %v2974, 1.442695
    %v2976 = vpow.pop %v2975
    %v2977 = vadd.f32 %v2976, 1.0
    %v2978 = vrcp.pop %v2977
    %v2979 = vmul.f32 1.0, %v2978
    %v2980 = vmul.f32 %v2972, %v2808
    %v2981 = vmul.f32 %v2966, %v2973
    %v2982 = vadd.f32 %v2980, %v2981
    %v2983 = vtanh.pop %v2982
    %v2984 = vmul.f32 %v2979, %v2983
    %v2985 = vld [vmem:[#allocation4 + $0x80] sm:$0xff]
    %v2986 = vld [vmem:[#allocation4 + $0x88] sm:$0xff]
    %v2987 = vld [vmem:[#allocation4 + $0x90] sm:$0xff]
    %v2988 = vld [vmem:[#allocation4 + $0x98] sm:$0xff]
    %2989 = vmatprep.subr.mxu0 %v2286
    %2990 = vmatpush1.msra.mxu0 %v2285
    %2991 = vmatprep.subr.mxu0 %v2282
    %2992 = vmatpush1.msra.mxu0 %v2281
    %2993 = vmatprep.subr.mxu0 %v2278
    %2994 = vmatpush1.msra.mxu0 %v2277
    %2995 = vmatprep.subr.mxu0 %v2274
    %2996 = vmatpush1.msra.mxu0 %v2273
    %2997 = vmatprep.subr.mxu0 %v2270
    %2998 = vmatpush1.msra.mxu0 %v2269
    %2999 = vmatprep.subr.mxu0 %v2266
    %3000 = vmatpush1.msra.mxu0 %v2265
    %3001 = vmatprep.subr.mxu0 %v2262
    %3002 = vmatpush1.msra.mxu0 %v2261
    %3003 = vmatprep.subr.mxu0 %v2258
    %3004 = vmatpush1.msra.mxu0 %v2257
    %3005 = vmatprep.subr.mxu0 %v2254
    %3006 = vmatpush1.msra.mxu0 %v2253
    %3007 = vmatprep.subr.mxu0 %v2250
    %3008 = vmatpush1.msra.mxu0 %v2249
    %3009 = vmatprep.subr.mxu0 %v2246
    %3010 = vmatpush1.msra.mxu0 %v2245
    %3011 = vmatprep.subr.mxu0 %v2242
    %3012 = vmatpush1.msra.mxu0 %v2241
    %3013 = vmatprep.subr.mxu0 %v2238
    %3014 = vmatpush1.msra.mxu0 %v2237
    %3015 = vmatprep.subr.mxu0 %v2234
    %3016 = vmatpush1.msra.mxu0 %v2233
    %3017 = vmatprep.subr.mxu0 %v2230
    %3018 = vmatpush1.msra.mxu0 %v2229
    %3019 = vmatprep.subr.mxu0 %v2226
    %3020 = vmatpush1.msra.mxu0 %v2225
    %3021 = vmatprep.subr.mxu0 0.0
    %3022 = vmatpush2.msra.mxu0 0.0
    %3023 = vmatprep.subr.mxu0 0.0
    %3024 = vmatpush2.msra.mxu0 0.0
    %3025 = vmatprep.subr.mxu0 0.0
    %3026 = vmatpush2.msra.mxu0 0.0
    %3027 = vmatprep.subr.mxu0 0.0
    %3028 = vmatpush2.msra.mxu0 0.0
    %3029 = vmatprep.subr.mxu0 0.0
    %3030 = vmatpush2.msra.mxu0 0.0
    %3031 = vmatprep.subr.mxu0 0.0
    %3032 = vmatpush2.msra.mxu0 0.0
    %3033 = vmatprep.subr.mxu0 0.0
    %3034 = vmatpush2.msra.mxu0 0.0
    %3035 = vmatprep.subr.mxu0 0.0
    %3036 = vmatpush2.msra.mxu0 0.0
    %3037 = vmatprep.subr.mxu0 0.0
    %3038 = vmatpush2.msra.mxu0 0.0
    %3039 = vmatprep.subr.mxu0 0.0
    %3040 = vmatpush2.msra.mxu0 0.0
    %3041 = vmatprep.subr.mxu0 0.0
    %3042 = vmatpush2.msra.mxu0 0.0
    %3043 = vmatprep.subr.mxu0 0.0
    %3044 = vmatpush2.msra.mxu0 0.0
    %3045 = vmatprep.subr.mxu0 0.0
    %3046 = vmatpush2.msra.mxu0 0.0
    %3047 = vmatprep.subr.mxu0 0.0
    %3048 = vmatpush2.msra.mxu0 0.0
    %3049 = vmatprep.subr.mxu0 0.0
    %3050 = vmatpush2.msra.mxu0 0.0
    %3051 = vmatprep.subr.mxu0 0.0
    %3052 = vmatpush2.msra.mxu0 0.0
    %3053 = vmatprep.mubr.f32.mxu0 0.0
    %3054 = vmatmul.mubr.f32.gmra.mxu0 %v2984
    %v3055 = vpop.f32.mrf.mxu0
    %v3056 = vadd.f32 0.0, %v3055
    %v3057 = vpop.f32.mrf.mxu0
    %v3058 = vadd.f32 0.0, %v3057
    %3059 = vdwg.mxu0
    %3060 = vmatprep.subr.mxu0 %v2288
    %3061 = vmatpush1.msra.mxu0 %v2287
    %3062 = vmatprep.subr.mxu0 %v2284
    %3063 = vmatpush1.msra.mxu0 %v2283
    %3064 = vmatprep.subr.mxu0 %v2280
    %3065 = vmatpush1.msra.mxu0 %v2279
    %3066 = vmatprep.subr.mxu0 %v2276
    %3067 = vmatpush1.msra.mxu0 %v2275
    %3068 = vmatprep.subr.mxu0 %v2272
    %3069 = vmatpush1.msra.mxu0 %v2271
    %3070 = vmatprep.subr.mxu0 %v2268
    %3071 = vmatpush1.msra.mxu0 %v2267
    %3072 = vmatprep.subr.mxu0 %v2264
    %3073 = vmatpush1.msra.mxu0 %v2263
    %3074 = vmatprep.subr.mxu0 %v2260
    %3075 = vmatpush1.msra.mxu0 %v2259
    %3076 = vmatprep.subr.mxu0 %v2256
    %3077 = vmatpush1.msra.mxu0 %v2255
    %3078 = vmatprep.subr.mxu0 %v2252
    %3079 = vmatpush1.msra.mxu0 %v2251
    %3080 = vmatprep.subr.mxu0 %v2248
    %3081 = vmatpush1.msra.mxu0 %v2247
    %3082 = vmatprep.subr.mxu0 %v2244
    %3083 = vmatpush1.msra.mxu0 %v2243
    %3084 = vmatprep.subr.mxu0 %v2240
    %3085 = vmatpush1.msra.mxu0 %v2239
    %3086 = vmatprep.subr.mxu0 %v2236
    %3087 = vmatpush1.msra.mxu0 %v2235
    %3088 = vmatprep.subr.mxu0 %v2232
    %3089 = vmatpush1.msra.mxu0 %v2231
    %3090 = vmatprep.subr.mxu0 %v2228
    %3091 = vmatpush1.msra.mxu0 %v2227
    %3092 = vmatprep.subr.mxu0 0.0
    %3093 = vmatpush2.msra.mxu0 0.0
    %3094 = vmatprep.subr.mxu0 0.0
    %3095 = vmatpush2.msra.mxu0 0.0
    %3096 = vmatprep.subr.mxu0 0.0
    %3097 = vmatpush2.msra.mxu0 0.0
    %3098 = vmatprep.subr.mxu0 0.0
    %3099 = vmatpush2.msra.mxu0 0.0
    %3100 = vmatprep.subr.mxu0 0.0
    %3101 = vmatpush2.msra.mxu0 0.0
    %3102 = vmatprep.subr.mxu0 0.0
    %3103 = vmatpush2.msra.mxu0 0.0
    %3104 = vmatprep.subr.mxu0 0.0
    %3105 = vmatpush2.msra.mxu0 0.0
    %3106 = vmatprep.subr.mxu0 0.0
    %3107 = vmatpush2.msra.mxu0 0.0
    %3108 = vmatprep.subr.mxu0 0.0
    %3109 = vmatpush2.msra.mxu0 0.0
    %3110 = vmatprep.subr.mxu0 0.0
    %3111 = vmatpush2.msra.mxu0 0.0
    %3112 = vmatprep.subr.mxu0 0.0
    %3113 = vmatpush2.msra.mxu0 0.0
    %3114 = vmatprep.subr.mxu0 0.0
    %3115 = vmatpush2.msra.mxu0 0.0
    %3116 = vmatprep.subr.mxu0 0.0
    %3117 = vmatpush2.msra.mxu0 0.0
    %3118 = vmatprep.subr.mxu0 0.0
    %3119 = vmatpush2.msra.mxu0 0.0
    %3120 = vmatprep.subr.mxu0 0.0
    %3121 = vmatpush2.msra.mxu0 0.0
    %3122 = vmatprep.subr.mxu0 0.0
    %3123 = vmatpush2.msra.mxu0 0.0
    %3124 = vmatprep.mubr.f32.mxu0 0.0
    %3125 = vmatmul.mubr.f32.gmra.mxu0 %v2984
    %v3126 = vpop.f32.mrf.mxu0
    %v3127 = vadd.f32 0.0, %v3126
    %v3128 = vpop.f32.mrf.mxu0
    %v3129 = vadd.f32 0.0, %v3128
    %3130 = vdwg.mxu0
    %v3131 = vadd.f32 %v2985, %v3056
    %v3132 = vadd.f32 %v2986, %v3058
    %v3133 = vadd.f32 %v2987, %v3127
    %v3134 = vadd.f32 %v2988, %v3129
    %v3135 = vxor.u32 %v3131, 2147483648
    %v3136 = vmul.f32 %v3135, 1.442695
    %v3137 = vpow.pop %v3136
    %v3138 = vadd.f32 %v3137, 1.0
    %v3139 = vrcp.pop %v3138
    %v3140 = vmul.f32 1.0, %v3139
    %v3141 = vxor.u32 %v3132, 2147483648
    %v3142 = vmul.f32 %v3141, 1.442695
    %v3143 = vpow.pop %v3142
    %v3144 = vadd.f32 %v3143, 1.0
    %v3145 = vrcp.pop %v3144
    %v3146 = vmul.f32 1.0, %v3145
    %v3147 = vtanh.pop %v3133
    %v3148 = vxor.u32 %v3134, 2147483648
    %v3149 = vmul.f32 %v3148, 1.442695
    %v3150 = vpow.pop %v3149
    %v3151 = vadd.f32 %v3150, 1.0
    %v3152 = vrcp.pop %v3151
    %v3153 = vmul.f32 1.0, %v3152
    %v3154 = vmul.f32 %v3146, %v2982
    %v3155 = vmul.f32 %v3140, %v3147
    %v3156 = vadd.f32 %v3154, %v3155
    %v3157 = vtanh.pop %v3156
    %v3158 = vmul.f32 %v3153, %v3157
    %v3159 = vld [vmem:[#allocation4 + $0xa0] sm:$0xff]
    %v3160 = vld [vmem:[#allocation4 + $0xa8] sm:$0xff]
    %v3161 = vld [vmem:[#allocation4 + $0xb0] sm:$0xff]
    %v3162 = vld [vmem:[#allocation4 + $0xb8] sm:$0xff]
    %3163 = vmatprep.subr.mxu0 %v2286
    %3164 = vmatpush1.msra.mxu0 %v2285
    %3165 = vmatprep.subr.mxu0 %v2282
    %3166 = vmatpush1.msra.mxu0 %v2281
    %3167 = vmatprep.subr.mxu0 %v2278
    %3168 = vmatpush1.msra.mxu0 %v2277
    %3169 = vmatprep.subr.mxu0 %v2274
    %3170 = vmatpush1.msra.mxu0 %v2273
    %3171 = vmatprep.subr.mxu0 %v2270
    %3172 = vmatpush1.msra.mxu0 %v2269
    %3173 = vmatprep.subr.mxu0 %v2266
    %3174 = vmatpush1.msra.mxu0 %v2265
    %3175 = vmatprep.subr.mxu0 %v2262
    %3176 = vmatpush1.msra.mxu0 %v2261
    %3177 = vmatprep.subr.mxu0 %v2258
    %3178 = vmatpush1.msra.mxu0 %v2257
    %3179 = vmatprep.subr.mxu0 %v2254
    %3180 = vmatpush1.msra.mxu0 %v2253
    %3181 = vmatprep.subr.mxu0 %v2250
    %3182 = vmatpush1.msra.mxu0 %v2249
    %3183 = vmatprep.subr.mxu0 %v2246
    %3184 = vmatpush1.msra.mxu0 %v2245
    %3185 = vmatprep.subr.mxu0 %v2242
    %3186 = vmatpush1.msra.mxu0 %v2241
    %3187 = vmatprep.subr.mxu0 %v2238
    %3188 = vmatpush1.msra.mxu0 %v2237
    %3189 = vmatprep.subr.mxu0 %v2234
    %3190 = vmatpush1.msra.mxu0 %v2233
    %3191 = vmatprep.subr.mxu0 %v2230
    %3192 = vmatpush1.msra.mxu0 %v2229
    %3193 = vmatprep.subr.mxu0 %v2226
    %3194 = vmatpush1.msra.mxu0 %v2225
    %3195 = vmatprep.subr.mxu0 0.0
    %3196 = vmatpush2.msra.mxu0 0.0
    %3197 = vmatprep.subr.mxu0 0.0
    %3198 = vmatpush2.msra.mxu0 0.0
    %3199 = vmatprep.subr.mxu0 0.0
    %3200 = vmatpush2.msra.mxu0 0.0
    %3201 = vmatprep.subr.mxu0 0.0
    %3202 = vmatpush2.msra.mxu0 0.0
    %3203 = vmatprep.subr.mxu0 0.0
    %3204 = vmatpush2.msra.mxu0 0.0
    %3205 = vmatprep.subr.mxu0 0.0
    %3206 = vmatpush2.msra.mxu0 0.0
    %3207 = vmatprep.subr.mxu0 0.0
    %3208 = vmatpush2.msra.mxu0 0.0
    %3209 = vmatprep.subr.mxu0 0.0
    %3210 = vmatpush2.msra.mxu0 0.0
    %3211 = vmatprep.subr.mxu0 0.0
    %3212 = vmatpush2.msra.mxu0 0.0
    %3213 = vmatprep.subr.mxu0 0.0
    %3214 = vmatpush2.msra.mxu0 0.0
    %3215 = vmatprep.subr.mxu0 0.0
    %3216 = vmatpush2.msra.mxu0 0.0
    %3217 = vmatprep.subr.mxu0 0.0
    %3218 = vmatpush2.msra.mxu0 0.0
    %3219 = vmatprep.subr.mxu0 0.0
    %3220 = vmatpush2.msra.mxu0 0.0
    %3221 = vmatprep.subr.mxu0 0.0
    %3222 = vmatpush2.msra.mxu0 0.0
    %3223 = vmatprep.subr.mxu0 0.0
    %3224 = vmatpush2.msra.mxu0 0.0
    %3225 = vmatprep.subr.mxu0 0.0
    %3226 = vmatpush2.msra.mxu0 0.0
    %3227 = vmatprep.mubr.f32.mxu0 0.0
    %3228 = vmatmul.mubr.f32.gmra.mxu0 %v3158
    %v3229 = vpop.f32.mrf.mxu0
    %v3230 = vadd.f32 0.0, %v3229
    %v3231 = vpop.f32.mrf.mxu0
    %v3232 = vadd.f32 0.0, %v3231
    %3233 = vdwg.mxu0
    %3234 = vmatprep.subr.mxu0 %v2288
    %3235 = vmatpush1.msra.mxu0 %v2287
    %3236 = vmatprep.subr.mxu0 %v2284
    %3237 = vmatpush1.msra.mxu0 %v2283
    %3238 = vmatprep.subr.mxu0 %v2280
    %3239 = vmatpush1.msra.mxu0 %v2279
    %3240 = vmatprep.subr.mxu0 %v2276
    %3241 = vmatpush1.msra.mxu0 %v2275
    %3242 = vmatprep.subr.mxu0 %v2272
    %3243 = vmatpush1.msra.mxu0 %v2271
    %3244 = vmatprep.subr.mxu0 %v2268
    %3245 = vmatpush1.msra.mxu0 %v2267
    %3246 = vmatprep.subr.mxu0 %v2264
    %3247 = vmatpush1.msra.mxu0 %v2263
    %3248 = vmatprep.subr.mxu0 %v2260
    %3249 = vmatpush1.msra.mxu0 %v2259
    %3250 = vmatprep.subr.mxu0 %v2256
    %3251 = vmatpush1.msra.mxu0 %v2255
    %3252 = vmatprep.subr.mxu0 %v2252
    %3253 = vmatpush1.msra.mxu0 %v2251
    %3254 = vmatprep.subr.mxu0 %v2248
    %3255 = vmatpush1.msra.mxu0 %v2247
    %3256 = vmatprep.subr.mxu0 %v2244
    %3257 = vmatpush1.msra.mxu0 %v2243
    %3258 = vmatprep.subr.mxu0 %v2240
    %3259 = vmatpush1.msra.mxu0 %v2239
    %3260 = vmatprep.subr.mxu0 %v2236
    %3261 = vmatpush1.msra.mxu0 %v2235
    %3262 = vmatprep.subr.mxu0 %v2232
    %3263 = vmatpush1.msra.mxu0 %v2231
    %3264 = vmatprep.subr.mxu0 %v2228
    %3265 = vmatpush1.msra.mxu0 %v2227
    %3266 = vmatprep.subr.mxu0 0.0
    %3267 = vmatpush2.msra.mxu0 0.0
    %3268 = vmatprep.subr.mxu0 0.0
    %3269 = vmatpush2.msra.mxu0 0.0
    %3270 = vmatprep.subr.mxu0 0.0
    %3271 = vmatpush2.msra.mxu0 0.0
    %3272 = vmatprep.subr.mxu0 0.0
    %3273 = vmatpush2.msra.mxu0 0.0
    %3274 = vmatprep.subr.mxu0 0.0
    %3275 = vmatpush2.msra.mxu0 0.0
    %3276 = vmatprep.subr.mxu0 0.0
    %3277 = vmatpush2.msra.mxu0 0.0
    %3278 = vmatprep.subr.mxu0 0.0
    %3279 = vmatpush2.msra.mxu0 0.0
    %3280 = vmatprep.subr.mxu0 0.0
    %3281 = vmatpush2.msra.mxu0 0.0
    %3282 = vmatprep.subr.mxu0 0.0
    %3283 = vmatpush2.msra.mxu0 0.0
    %3284 = vmatprep.subr.mxu0 0.0
    %3285 = vmatpush2.msra.mxu0 0.0
    %3286 = vmatprep.subr.mxu0 0.0
    %3287 = vmatpush2.msra.mxu0 0.0
    %3288 = vmatprep.subr.mxu0 0.0
    %3289 = vmatpush2.msra.mxu0 0.0
    %3290 = vmatprep.subr.mxu0 0.0
    %3291 = vmatpush2.msra.mxu0 0.0
    %3292 = vmatprep.subr.mxu0 0.0
    %3293 = vmatpush2.msra.mxu0 0.0
    %3294 = vmatprep.subr.mxu0 0.0
    %3295 = vmatpush2.msra.mxu0 0.0
    %3296 = vmatprep.subr.mxu0 0.0
    %3297 = vmatpush2.msra.mxu0 0.0
    %3298 = vmatprep.mubr.f32.mxu0 0.0
    %3299 = vmatmul.mubr.f32.gmra.mxu0 %v3158
    %v3300 = vpop.f32.mrf.mxu0
    %v3301 = vadd.f32 0.0, %v3300
    %v3302 = vpop.f32.mrf.mxu0
    %v3303 = vadd.f32 0.0, %v3302
    %3304 = vdwg.mxu0
    %v3305 = vadd.f32 %v3159, %v3230
    %v3306 = vadd.f32 %v3160, %v3232
    %v3307 = vadd.f32 %v3161, %v3301
    %v3308 = vadd.f32 %v3162, %v3303
    %v3309 = vxor.u32 %v3305, 2147483648
    %v3310 = vmul.f32 %v3309, 1.442695
    %v3311 = vpow.pop %v3310
    %v3312 = vadd.f32 %v3311, 1.0
    %v3313 = vrcp.pop %v3312
    %v3314 = vmul.f32 1.0, %v3313
    %v3315 = vxor.u32 %v3306, 2147483648
    %v3316 = vmul.f32 %v3315, 1.442695
    %v3317 = vpow.pop %v3316
    %v3318 = vadd.f32 %v3317, 1.0
    %v3319 = vrcp.pop %v3318
    %v3320 = vmul.f32 1.0, %v3319
    %v3321 = vtanh.pop %v3307
    %v3322 = vxor.u32 %v3308, 2147483648
    %v3323 = vmul.f32 %v3322, 1.442695
    %v3324 = vpow.pop %v3323
    %v3325 = vadd.f32 %v3324, 1.0
    %v3326 = vrcp.pop %v3325
    %v3327 = vmul.f32 1.0, %v3326
    %v3328 = vmul.f32 %v3320, %v3156
    %v3329 = vmul.f32 %v3314, %v3321
    %v3330 = vadd.f32 %v3328, %v3329
    %v3331 = vtanh.pop %v3330
    %v3332 = vmul.f32 %v3327, %v3331
    %v3333 = vld [vmem:[#allocation4 + $0xc0] sm:$0xff]
    %v3334 = vld [vmem:[#allocation4 + $0xc8] sm:$0xff]
    %v3335 = vld [vmem:[#allocation4 + $0xd0] sm:$0xff]
    %v3336 = vld [vmem:[#allocation4 + $0xd8] sm:$0xff]
    %3337 = vmatprep.subr.mxu0 %v2286
    %3338 = vmatpush1.msra.mxu0 %v2285
    %3339 = vmatprep.subr.mxu0 %v2282
    %3340 = vmatpush1.msra.mxu0 %v2281
    %3341 = vmatprep.subr.mxu0 %v2278
    %3342 = vmatpush1.msra.mxu0 %v2277
    %3343 = vmatprep.subr.mxu0 %v2274
    %3344 = vmatpush1.msra.mxu0 %v2273
    %3345 = vmatprep.subr.mxu0 %v2270
    %3346 = vmatpush1.msra.mxu0 %v2269
    %3347 = vmatprep.subr.mxu0 %v2266
    %3348 = vmatpush1.msra.mxu0 %v2265
    %3349 = vmatprep.subr.mxu0 %v2262
    %3350 = vmatpush1.msra.mxu0 %v2261
    %3351 = vmatprep.subr.mxu0 %v2258
    %3352 = vmatpush1.msra.mxu0 %v2257
    %3353 = vmatprep.subr.mxu0 %v2254
    %3354 = vmatpush1.msra.mxu0 %v2253
    %3355 = vmatprep.subr.mxu0 %v2250
    %3356 = vmatpush1.msra.mxu0 %v2249
    %3357 = vmatprep.subr.mxu0 %v2246
    %3358 = vmatpush1.msra.mxu0 %v2245
    %3359 = vmatprep.subr.mxu0 %v2242
    %3360 = vmatpush1.msra.mxu0 %v2241
    %3361 = vmatprep.subr.mxu0 %v2238
    %3362 = vmatpush1.msra.mxu0 %v2237
    %3363 = vmatprep.subr.mxu0 %v2234
    %3364 = vmatpush1.msra.mxu0 %v2233
    %3365 = vmatprep.subr.mxu0 %v2230
    %3366 = vmatpush1.msra.mxu0 %v2229
    %3367 = vmatprep.subr.mxu0 %v2226
    %3368 = vmatpush1.msra.mxu0 %v2225
    %3369 = vmatprep.subr.mxu0 0.0
    %3370 = vmatpush2.msra.mxu0 0.0
    %3371 = vmatprep.subr.mxu0 0.0
    %3372 = vmatpush2.msra.mxu0 0.0
    %3373 = vmatprep.subr.mxu0 0.0
    %3374 = vmatpush2.msra.mxu0 0.0
    %3375 = vmatprep.subr.mxu0 0.0
    %3376 = vmatpush2.msra.mxu0 0.0
    %3377 = vmatprep.subr.mxu0 0.0
    %3378 = vmatpush2.msra.mxu0 0.0
    %3379 = vmatprep.subr.mxu0 0.0
    %3380 = vmatpush2.msra.mxu0 0.0
    %3381 = vmatprep.subr.mxu0 0.0
    %3382 = vmatpush2.msra.mxu0 0.0
    %3383 = vmatprep.subr.mxu0 0.0
    %3384 = vmatpush2.msra.mxu0 0.0
    %3385 = vmatprep.subr.mxu0 0.0
    %3386 = vmatpush2.msra.mxu0 0.0
    %3387 = vmatprep.subr.mxu0 0.0
    %3388 = vmatpush2.msra.mxu0 0.0
    %3389 = vmatprep.subr.mxu0 0.0
    %3390 = vmatpush2.msra.mxu0 0.0
    %3391 = vmatprep.subr.mxu0 0.0
    %3392 = vmatpush2.msra.mxu0 0.0
    %3393 = vmatprep.subr.mxu0 0.0
    %3394 = vmatpush2.msra.mxu0 0.0
    %3395 = vmatprep.subr.mxu0 0.0
    %3396 = vmatpush2.msra.mxu0 0.0
    %3397 = vmatprep.subr.mxu0 0.0
    %3398 = vmatpush2.msra.mxu0 0.0
    %3399 = vmatprep.subr.mxu0 0.0
    %3400 = vmatpush2.msra.mxu0 0.0
    %3401 = vmatprep.mubr.f32.mxu0 0.0
    %3402 = vmatmul.mubr.f32.gmra.mxu0 %v3332
    %v3403 = vpop.f32.mrf.mxu0
    %v3404 = vadd.f32 0.0, %v3403
    %v3405 = vpop.f32.mrf.mxu0
    %v3406 = vadd.f32 0.0, %v3405
    %3407 = vdwg.mxu0
    %3408 = vmatprep.subr.mxu0 %v2288
    %3409 = vmatpush1.msra.mxu0 %v2287
    %3410 = vmatprep.subr.mxu0 %v2284
    %3411 = vmatpush1.msra.mxu0 %v2283
    %3412 = vmatprep.subr.mxu0 %v2280
    %3413 = vmatpush1.msra.mxu0 %v2279
    %3414 = vmatprep.subr.mxu0 %v2276
    %3415 = vmatpush1.msra.mxu0 %v2275
    %3416 = vmatprep.subr.mxu0 %v2272
    %3417 = vmatpush1.msra.mxu0 %v2271
    %3418 = vmatprep.subr.mxu0 %v2268
    %3419 = vmatpush1.msra.mxu0 %v2267
    %3420 = vmatprep.subr.mxu0 %v2264
    %3421 = vmatpush1.msra.mxu0 %v2263
    %3422 = vmatprep.subr.mxu0 %v2260
    %3423 = vmatpush1.msra.mxu0 %v2259
    %3424 = vmatprep.subr.mxu0 %v2256
    %3425 = vmatpush1.msra.mxu0 %v2255
    %3426 = vmatprep.subr.mxu0 %v2252
    %3427 = vmatpush1.msra.mxu0 %v2251
    %3428 = vmatprep.subr.mxu0 %v2248
    %3429 = vmatpush1.msra.mxu0 %v2247
    %3430 = vmatprep.subr.mxu0 %v2244
    %3431 = vmatpush1.msra.mxu0 %v2243
    %3432 = vmatprep.subr.mxu0 %v2240
    %3433 = vmatpush1.msra.mxu0 %v2239
    %3434 = vmatprep.subr.mxu0 %v2236
    %3435 = vmatpush1.msra.mxu0 %v2235
    %3436 = vmatprep.subr.mxu0 %v2232
    %3437 = vmatpush1.msra.mxu0 %v2231
    %3438 = vmatprep.subr.mxu0 %v2228
    %3439 = vmatpush1.msra.mxu0 %v2227
    %3440 = vmatprep.subr.mxu0 0.0
    %3441 = vmatpush2.msra.mxu0 0.0
    %3442 = vmatprep.subr.mxu0 0.0
    %3443 = vmatpush2.msra.mxu0 0.0
    %3444 = vmatprep.subr.mxu0 0.0
    %3445 = vmatpush2.msra.mxu0 0.0
    %3446 = vmatprep.subr.mxu0 0.0
    %3447 = vmatpush2.msra.mxu0 0.0
    %3448 = vmatprep.subr.mxu0 0.0
    %3449 = vmatpush2.msra.mxu0 0.0
    %3450 = vmatprep.subr.mxu0 0.0
    %3451 = vmatpush2.msra.mxu0 0.0
    %3452 = vmatprep.subr.mxu0 0.0
    %3453 = vmatpush2.msra.mxu0 0.0
    %3454 = vmatprep.subr.mxu0 0.0
    %3455 = vmatpush2.msra.mxu0 0.0
    %3456 = vmatprep.subr.mxu0 0.0
    %3457 = vmatpush2.msra.mxu0 0.0
    %3458 = vmatprep.subr.mxu0 0.0
    %3459 = vmatpush2.msra.mxu0 0.0
    %3460 = vmatprep.subr.mxu0 0.0
    %3461 = vmatpush2.msra.mxu0 0.0
    %3462 = vmatprep.subr.mxu0 0.0
    %3463 = vmatpush2.msra.mxu0 0.0
    %3464 = vmatprep.subr.mxu0 0.0
    %3465 = vmatpush2.msra.mxu0 0.0
    %3466 = vmatprep.subr.mxu0 0.0
    %3467 = vmatpush2.msra.mxu0 0.0
    %3468 = vmatprep.subr.mxu0 0.0
    %3469 = vmatpush2.msra.mxu0 0.0
    %3470 = vmatprep.subr.mxu0 0.0
    %3471 = vmatpush2.msra.mxu0 0.0
    %3472 = vmatprep.mubr.f32.mxu0 0.0
    %3473 = vmatmul.mubr.f32.gmra.mxu0 %v3332
    %v3474 = vpop.f32.mrf.mxu0
    %v3475 = vadd.f32 0.0, %v3474
    %v3476 = vpop.f32.mrf.mxu0
    %v3477 = vadd.f32 0.0, %v3476
    %3478 = vdwg.mxu0
    %v3479 = vadd.f32 %v3333, %v3404
    %v3480 = vadd.f32 %v3334, %v3406
    %v3481 = vadd.f32 %v3335, %v3475
    %v3482 = vadd.f32 %v3336, %v3477
    %v3483 = vxor.u32 %v3479, 2147483648
    %v3484 = vmul.f32 %v3483, 1.442695
    %v3485 = vpow.pop %v3484
    %v3486 = vadd.f32 %v3485, 1.0
    %v3487 = vrcp.pop %v3486
    %v3488 = vmul.f32 1.0, %v3487
    %v3489 = vxor.u32 %v3480, 2147483648
    %v3490 = vmul.f32 %v3489, 1.442695
    %v3491 = vpow.pop %v3490
    %v3492 = vadd.f32 %v3491, 1.0
    %v3493 = vrcp.pop %v3492
    %v3494 = vmul.f32 1.0, %v3493
    %v3495 = vtanh.pop %v3481
    %v3496 = vxor.u32 %v3482, 2147483648
    %v3497 = vmul.f32 %v3496, 1.442695
    %v3498 = vpow.pop %v3497
    %v3499 = vadd.f32 %v3498, 1.0
    %v3500 = vrcp.pop %v3499
    %v3501 = vmul.f32 1.0, %v3500
    %v3502 = vmul.f32 %v3494, %v3330
    %v3503 = vmul.f32 %v3488, %v3495
    %v3504 = vadd.f32 %v3502, %v3503
    %v3505 = vtanh.pop %v3504
    %v3506 = vmul.f32 %v3501, %v3505
    %v3507 = vld [vmem:[#allocation4 + $0xe0] sm:$0xff]
    %v3508 = vld [vmem:[#allocation4 + $0xe8] sm:$0xff]
    %v3509 = vld [vmem:[#allocation4 + $0xf0] sm:$0xff]
    %v3510 = vld [vmem:[#allocation4 + $0xf8] sm:$0xff]
    %3511 = vmatprep.subr.mxu0 %v2286
    %3512 = vmatpush1.msra.mxu0 %v2285
    %3513 = vmatprep.subr.mxu0 %v2282
    %3514 = vmatpush1.msra.mxu0 %v2281
    %3515 = vmatprep.subr.mxu0 %v2278
    %3516 = vmatpush1.msra.mxu0 %v2277
    %3517 = vmatprep.subr.mxu0 %v2274
    %3518 = vmatpush1.msra.mxu0 %v2273
    %3519 = vmatprep.subr.mxu0 %v2270
    %3520 = vmatpush1.msra.mxu0 %v2269
    %3521 = vmatprep.subr.mxu0 %v2266
    %3522 = vmatpush1.msra.mxu0 %v2265
    %3523 = vmatprep.subr.mxu0 %v2262
    %3524 = vmatpush1.msra.mxu0 %v2261
    %3525 = vmatprep.subr.mxu0 %v2258
    %3526 = vmatpush1.msra.mxu0 %v2257
    %3527 = vmatprep.subr.mxu0 %v2254
    %3528 = vmatpush1.msra.mxu0 %v2253
    %3529 = vmatprep.subr.mxu0 %v2250
    %3530 = vmatpush1.msra.mxu0 %v2249
    %3531 = vmatprep.subr.mxu0 %v2246
    %3532 = vmatpush1.msra.mxu0 %v2245
    %3533 = vmatprep.subr.mxu0 %v2242
    %3534 = vmatpush1.msra.mxu0 %v2241
    %3535 = vmatprep.subr.mxu0 %v2238
    %3536 = vmatpush1.msra.mxu0 %v2237
    %3537 = vmatprep.subr.mxu0 %v2234
    %3538 = vmatpush1.msra.mxu0 %v2233
    %3539 = vmatprep.subr.mxu0 %v2230
    %3540 = vmatpush1.msra.mxu0 %v2229
    %3541 = vmatprep.subr.mxu0 %v2226
    %3542 = vmatpush1.msra.mxu0 %v2225
    %3543 = vmatprep.subr.mxu0 0.0
    %3544 = vmatpush2.msra.mxu0 0.0
    %3545 = vmatprep.subr.mxu0 0.0
    %3546 = vmatpush2.msra.mxu0 0.0
    %3547 = vmatprep.subr.mxu0 0.0
    %3548 = vmatpush2.msra.mxu0 0.0
    %3549 = vmatprep.subr.mxu0 0.0
    %3550 = vmatpush2.msra.mxu0 0.0
    %3551 = vmatprep.subr.mxu0 0.0
    %3552 = vmatpush2.msra.mxu0 0.0
    %3553 = vmatprep.subr.mxu0 0.0
    %3554 = vmatpush2.msra.mxu0 0.0
    %3555 = vmatprep.subr.mxu0 0.0
    %3556 = vmatpush2.msra.mxu0 0.0
    %3557 = vmatprep.subr.mxu0 0.0
    %3558 = vmatpush2.msra.mxu0 0.0
    %3559 = vmatprep.subr.mxu0 0.0
    %3560 = vmatpush2.msra.mxu0 0.0
    %3561 = vmatprep.subr.mxu0 0.0
    %3562 = vmatpush2.msra.mxu0 0.0
    %3563 = vmatprep.subr.mxu0 0.0
    %3564 = vmatpush2.msra.mxu0 0.0
    %3565 = vmatprep.subr.mxu0 0.0
    %3566 = vmatpush2.msra.mxu0 0.0
    %3567 = vmatprep.subr.mxu0 0.0
    %3568 = vmatpush2.msra.mxu0 0.0
    %3569 = vmatprep.subr.mxu0 0.0
    %3570 = vmatpush2.msra.mxu0 0.0
    %3571 = vmatprep.subr.mxu0 0.0
    %3572 = vmatpush2.msra.mxu0 0.0
    %3573 = vmatprep.subr.mxu0 0.0
    %3574 = vmatpush2.msra.mxu0 0.0
    %3575 = vmatprep.mubr.f32.mxu0 0.0
    %3576 = vmatmul.mubr.f32.gmra.mxu0 %v3506
    %v3577 = vpop.f32.mrf.mxu0
    %v3578 = vadd.f32 0.0, %v3577
    %v3579 = vpop.f32.mrf.mxu0
    %v3580 = vadd.f32 0.0, %v3579
    %3581 = vdwg.mxu0
    %3582 = vmatprep.subr.mxu0 %v2288
    %3583 = vmatpush1.msra.mxu0 %v2287
    %3584 = vmatprep.subr.mxu0 %v2284
    %3585 = vmatpush1.msra.mxu0 %v2283
    %3586 = vmatprep.subr.mxu0 %v2280
    %3587 = vmatpush1.msra.mxu0 %v2279
    %3588 = vmatprep.subr.mxu0 %v2276
    %3589 = vmatpush1.msra.mxu0 %v2275
    %3590 = vmatprep.subr.mxu0 %v2272
    %3591 = vmatpush1.msra.mxu0 %v2271
    %3592 = vmatprep.subr.mxu0 %v2268
    %3593 = vmatpush1.msra.mxu0 %v2267
    %3594 = vmatprep.subr.mxu0 %v2264
    %3595 = vmatpush1.msra.mxu0 %v2263
    %3596 = vmatprep.subr.mxu0 %v2260
    %3597 = vmatpush1.msra.mxu0 %v2259
    %3598 = vmatprep.subr.mxu0 %v2256
    %3599 = vmatpush1.msra.mxu0 %v2255
    %3600 = vmatprep.subr.mxu0 %v2252
    %3601 = vmatpush1.msra.mxu0 %v2251
    %3602 = vmatprep.subr.mxu0 %v2248
    %3603 = vmatpush1.msra.mxu0 %v2247
    %3604 = vmatprep.subr.mxu0 %v2244
    %3605 = vmatpush1.msra.mxu0 %v2243
    %3606 = vmatprep.subr.mxu0 %v2240
    %3607 = vmatpush1.msra.mxu0 %v2239
    %3608 = vmatprep.subr.mxu0 %v2236
    %3609 = vmatpush1.msra.mxu0 %v2235
    %3610 = vmatprep.subr.mxu0 %v2232
    %3611 = vmatpush1.msra.mxu0 %v2231
    %3612 = vmatprep.subr.mxu0 %v2228
    %3613 = vmatpush1.msra.mxu0 %v2227
    %3614 = vmatprep.subr.mxu0 0.0
    %3615 = vmatpush2.msra.mxu0 0.0
    %3616 = vmatprep.subr.mxu0 0.0
    %3617 = vmatpush2.msra.mxu0 0.0
    %3618 = vmatprep.subr.mxu0 0.0
    %3619 = vmatpush2.msra.mxu0 0.0
    %3620 = vmatprep.subr.mxu0 0.0
    %3621 = vmatpush2.msra.mxu0 0.0
    %3622 = vmatprep.subr.mxu0 0.0
    %3623 = vmatpush2.msra.mxu0 0.0
    %3624 = vmatprep.subr.mxu0 0.0
    %3625 = vmatpush2.msra.mxu0 0.0
    %3626 = vmatprep.subr.mxu0 0.0
    %3627 = vmatpush2.msra.mxu0 0.0
    %3628 = vmatprep.subr.mxu0 0.0
    %3629 = vmatpush2.msra.mxu0 0.0
    %3630 = vmatprep.subr.mxu0 0.0
    %3631 = vmatpush2.msra.mxu0 0.0
    %3632 = vmatprep.subr.mxu0 0.0
    %3633 = vmatpush2.msra.mxu0 0.0
    %3634 = vmatprep.subr.mxu0 0.0
    %3635 = vmatpush2.msra.mxu0 0.0
    %3636 = vmatprep.subr.mxu0 0.0
    %3637 = vmatpush2.msra.mxu0 0.0
    %3638 = vmatprep.subr.mxu0 0.0
    %3639 = vmatpush2.msra.mxu0 0.0
    %3640 = vmatprep.subr.mxu0 0.0
    %3641 = vmatpush2.msra.mxu0 0.0
    %3642 = vmatprep.subr.mxu0 0.0
    %3643 = vmatpush2.msra.mxu0 0.0
    %3644 = vmatprep.subr.mxu0 0.0
    %3645 = vmatpush2.msra.mxu0 0.0
    %3646 = vmatprep.mubr.f32.mxu0 0.0
    %3647 = vmatmul.mubr.f32.gmra.mxu0 %v3506
    %v3648 = vpop.f32.mrf.mxu0
    %v3649 = vadd.f32 0.0, %v3648
    %v3650 = vpop.f32.mrf.mxu0
    %v3651 = vadd.f32 0.0, %v3650
    %3652 = vdwg.mxu0
    %v3653 = vadd.f32 %v3507, %v3578
    %v3654 = vadd.f32 %v3508, %v3580
    %v3655 = vadd.f32 %v3509, %v3649
    %v3656 = vadd.f32 %v3510, %v3651
    %v3657 = vxor.u32 %v3653, 2147483648
    %v3658 = vmul.f32 %v3657, 1.442695
    %v3659 = vpow.pop %v3658
    %v3660 = vadd.f32 %v3659, 1.0
    %v3661 = vrcp.pop %v3660
    %v3662 = vmul.f32 1.0, %v3661
    %v3663 = vxor.u32 %v3654, 2147483648
    %v3664 = vmul.f32 %v3663, 1.442695
    %v3665 = vpow.pop %v3664
    %v3666 = vadd.f32 %v3665, 1.0
    %v3667 = vrcp.pop %v3666
    %v3668 = vmul.f32 1.0, %v3667
    %v3669 = vtanh.pop %v3655
    %v3670 = vxor.u32 %v3656, 2147483648
    %v3671 = vmul.f32 %v3670, 1.442695
    %v3672 = vpow.pop %v3671
    %v3673 = vadd.f32 %v3672, 1.0
    %v3674 = vrcp.pop %v3673
    %v3675 = vmul.f32 1.0, %v3674
    %v3676 = vmul.f32 %v3668, %v3504
    %v3677 = vmul.f32 %v3662, %v3669
    %v3678 = vadd.f32 %v3676, %v3677
    %v3679 = vtanh.pop %v3678
    %v3680 = vmul.f32 %v3675, %v3679
    %v3681 = vld [vmem:[#allocation11] sm:$0xff]
    %v3682 = vld [vmem:[#allocation11 + $0x8] sm:$0xff]
    %v3683 = vld [vmem:[#allocation11 + $0x10] sm:$0xff]
    %v3684 = vld [vmem:[#allocation11 + $0x18] sm:$0xff]
    %v3685 = vld [vmem:[#allocation11 + $0x20] sm:$0xff]
    %v3686 = vld [vmem:[#allocation11 + $0x28] sm:$0xff]
    %v3687 = vld [vmem:[#allocation11 + $0x30] sm:$0xff]
    %v3688 = vld [vmem:[#allocation11 + $0x38] sm:$0xff]
    %v3689 = vld [vmem:[#allocation11 + $0x40] sm:$0xff]
    %v3690 = vld [vmem:[#allocation11 + $0x48] sm:$0xff]
    %v3691 = vld [vmem:[#allocation11 + $0x50] sm:$0xff]
    %v3692 = vld [vmem:[#allocation11 + $0x58] sm:$0xff]
    %v3693 = vld [vmem:[#allocation11 + $0x60] sm:$0xff]
    %v3694 = vld [vmem:[#allocation11 + $0x68] sm:$0xff]
    %v3695 = vld [vmem:[#allocation11 + $0x70] sm:$0xff]
    %v3696 = vld [vmem:[#allocation11 + $0x78] sm:$0xff]
    %v3697 = vld [vmem:[%s8] sm:$0x1]
    %v3699 = vlaneseq
    %v3700 = vshrl.u32 %v3699, 7
    %v3701 = vsub.s32 0, %v3700
    %v3702 = vrot.slane %v3697, %v3701
    %3704 = vmatprep.subr.mxu0 0.0
    %3705 = vmatpush1.msra.mxu0 %v3696
    %3706 = vmatprep.subr.mxu0 0.0
    %3707 = vmatpush1.msra.mxu0 %v3695
    %3708 = vmatprep.subr.mxu0 0.0
    %3709 = vmatpush1.msra.mxu0 %v3694
    %3710 = vmatprep.subr.mxu0 0.0
    %3711 = vmatpush1.msra.mxu0 %v3693
    %3712 = vmatprep.subr.mxu0 0.0
    %3713 = vmatpush1.msra.mxu0 %v3692
    %3714 = vmatprep.subr.mxu0 0.0
    %3715 = vmatpush1.msra.mxu0 %v3691
    %3716 = vmatprep.subr.mxu0 0.0
    %3717 = vmatpush1.msra.mxu0 %v3690
    %3718 = vmatprep.subr.mxu0 0.0
    %3719 = vmatpush1.msra.mxu0 %v3689
    %3720 = vmatprep.subr.mxu0 0.0
    %3721 = vmatpush1.msra.mxu0 %v3688
    %3722 = vmatprep.subr.mxu0 0.0
    %3723 = vmatpush1.msra.mxu0 %v3687
    %3724 = vmatprep.subr.mxu0 0.0
    %3725 = vmatpush1.msra.mxu0 %v3686
    %3726 = vmatprep.subr.mxu0 0.0
    %3727 = vmatpush1.msra.mxu0 %v3685
    %3728 = vmatprep.subr.mxu0 0.0
    %3729 = vmatpush1.msra.mxu0 %v3684
    %3730 = vmatprep.subr.mxu0 0.0
    %3731 = vmatpush1.msra.mxu0 %v3683
    %3732 = vmatprep.subr.mxu0 0.0
    %3733 = vmatpush1.msra.mxu0 %v3682
    %3734 = vmatprep.subr.mxu0 0.0
    %3735 = vmatpush1.msra.mxu0 %v3681
    %3736 = vmatprep.subr.mxu0 0.0
    %3737 = vmatpush2.msra.mxu0 0.0
    %3738 = vmatprep.subr.mxu0 0.0
    %3739 = vmatpush2.msra.mxu0 0.0
    %3740 = vmatprep.subr.mxu0 0.0
    %3741 = vmatpush2.msra.mxu0 0.0
    %3742 = vmatprep.subr.mxu0 0.0
    %3743 = vmatpush2.msra.mxu0 0.0
    %3744 = vmatprep.subr.mxu0 0.0
    %3745 = vmatpush2.msra.mxu0 0.0
    %3746 = vmatprep.subr.mxu0 0.0
    %3747 = vmatpush2.msra.mxu0 0.0
    %3748 = vmatprep.subr.mxu0 0.0
    %3749 = vmatpush2.msra.mxu0 0.0
    %3750 = vmatprep.subr.mxu0 0.0
    %3751 = vmatpush2.msra.mxu0 0.0
    %3752 = vmatprep.subr.mxu0 0.0
    %3753 = vmatpush2.msra.mxu0 0.0
    %3754 = vmatprep.subr.mxu0 0.0
    %3755 = vmatpush2.msra.mxu0 0.0
    %3756 = vmatprep.subr.mxu0 0.0
    %3757 = vmatpush2.msra.mxu0 0.0
    %3758 = vmatprep.subr.mxu0 0.0
    %3759 = vmatpush2.msra.mxu0 0.0
    %3760 = vmatprep.subr.mxu0 0.0
    %3761 = vmatpush2.msra.mxu0 0.0
    %3762 = vmatprep.subr.mxu0 0.0
    %3763 = vmatpush2.msra.mxu0 0.0
    %3764 = vmatprep.subr.mxu0 0.0
    %3765 = vmatpush2.msra.mxu0 0.0
    %3766 = vmatprep.subr.mxu0 0.0
    %3767 = vmatpush2.msra.mxu0 0.0
    %3768 = vmatprep.mubr.f32.mxu0 0.0
    %3769 = vmatmul.mubr.f32.gmra.mxu0 %v3680
    %v3770 = vpop.f32.mrf.mxu0
    %v3771 = vadd.f32 %v3702, %v3770
    %v3772 = vpop.f32.mrf.mxu0
    %3773 = vdwg.mxu0
    %3774 = vst [vmem:[#allocation13] sm:$0xff] %v3771
    // Predicated region
    $region54: #{tpu_custom_call.1} parent=1 // pred_check
      _
    $region55: #{tpu_custom_call.1} parent=1 // pred_check_branch
      %3776 = sbr.rel (0) target = $region57
    $region56: #{tpu_custom_call.1} parent=1 // pred_region
      %s3778 = ssub.s32 128, 128
      %3779 = vsyncadd [#allocation7], %s3778
      %s3781 = sshll.u32 [#allocation13], 4
      %s3782 = int_to_ptr.vmem [resolvable:$true] %s3781
      %3784 = dma.vmem_to_hbm [thread:$0]  %s3782, 128, %s9, [#allocation7]
    $region57: #{tpu_custom_call.1} parent=1 // pred_fallthru
      _
    // Predicated region
    $region58: #{tpu_custom_call.1} parent=1 // pred_check
      _
    $region59: #{tpu_custom_call.1} parent=1 // pred_check_branch
      %3786 = sbr.rel (0) target = $region61
    $region60: #{tpu_custom_call.1} parent=1 // pred_region
      %3787 = dma.done [#allocation7], 128
    $region61: #{tpu_custom_call.1} parent=1 // pred_fallthru
      _
    %3788 = vsyncpa [#allocation6], 1
    %3789 = vsyncpa [#allocation9], 1
    %3790 = vsyncpa [#allocation12], 1
    %3791 = vsyncpa [#allocation7], 1

</llo_original>
